<compile_context>
chip_gen: v5e
topology: v5e:2x2
jax: 0.10.0
libtpu: 0.0.40
codegen_flags: <defaults>
</compile_context>

<pallas_src>
import functools

import numpy as np
import jax
import jax.numpy as jnp
from jax.experimental import pallas as pl
from jax.experimental.pallas import tpu as pltpu


def _round_up(x, m):
    return ((x + m - 1) // m) * m


def _sigmoid(x):
    # numerically stable sigmoid via tanh (EUP path, no overflow in exp)
    return 0.5 * (jnp.tanh(0.5 * x) + 1.0)


# ----------------------------------------------------------------------------
# Pallas kernel: one decode timestep (for one batch tile) per grid iteration.
# ----------------------------------------------------------------------------
def decoder_step_kernel(
    bt_ref,        # SMEM (T_dec,) int32 : number of active rows at step t
    enc_ref,       # (TB, P_pad, Denc)  bf16  sorted encoder output (pixel-padded)
    att1_ref,      # (TB, P_pad, A)     bf16  hoisted enc @ W_enc2att
    emb_ref,       # (1, TB, E)         bf16  embedding slice for step t
    w_att_ref,     # (1, A)             f32
    w_h_ref,       # (Hd, A+Denc+4Hd)   bf16  [W_h2att | W_fbeta | W_hh]
    b_h_ref,       # (1,  A+Denc+4Hd)   f32   [0 | b_fbeta | b_ih + b_hh]
    w_xe_ref,      # (E, 4Hd)           bf16  W_ih rows for the embedding
    w_xc_ref,      # (Denc, 4Hd)        bf16  W_ih rows for the gated context
    w_fc_ref,      # (Hd, V)            bf16
    b_fc_ref,      # (1, V)             f32
    w_init_ref,    # (Denc, 2Hd)        bf16  [W_init_h | W_init_c]
    b_init_ref,    # (1, 2Hd)           f32
    pred_ref,      # out (1, TB, V)     f32
    alpha_ref,     # out (1, TB, P_pad) f32
    h_scr,         # scratch (TB, Hd)   f32
    c_scr,         # scratch (TB, Hd)   f32
    *,
    true_num_pixels: int,
):
    t = pl.program_id(1)
    tb = h_scr.shape[0]
    hd = h_scr.shape[1]
    a_dim = w_att_ref.shape[1]
    denc = enc_ref.shape[2]
    p_pad = enc_ref.shape[1]

    # init_hidden(): means of the encoded image -> linear layers (t == 0 only).
    @pl.when(t == 0)
    def _init_state():
        # mean over the TRUE pixel count (padded pixels are zero).
        mean_enc = (jnp.sum(enc_ref[...].astype(jnp.float32), axis=1)
                    * (1.0 / float(true_num_pixels)))
        hc = (jnp.dot(mean_enc.astype(jnp.bfloat16), w_init_ref[...],
                      preferred_element_type=jnp.float32) + b_init_ref[...])
        h_scr[...] = hc[:, :hd]
        c_scr[...] = hc[:, hd:]

    h = h_scr[...]                      # (TB, Hd) f32
    c = c_scr[...]

    # ---- one wide matmul for everything that consumes h ----
    hproj = (jnp.dot(h.astype(jnp.bfloat16), w_h_ref[...],
                     preferred_element_type=jnp.float32) + b_h_ref[...])
    att2 = hproj[:, :a_dim]                      # hidden2att (no bias)
    fbeta = hproj[:, a_dim:a_dim + denc]         # f_beta(h) pre-activation
    hgate = hproj[:, a_dim + denc:]              # h @ W_hh + (b_ih + b_hh)

    # ---- SoftAttention (att1 precomputed outside the time loop) ----
    act = jnp.maximum(att1_ref[...].astype(jnp.float32) + att2[:, None, :], 0.0)
    # att-layer bias is softmax-invariant -> dropped from the kernel.
    e = jnp.sum(act * w_att_ref[...][None, :, :], axis=-1)       # (TB, P_pad)
    if p_pad != true_num_pixels:                                  # mask padding
        pix = jax.lax.broadcasted_iota(jnp.int32, (tb, p_pad), 1)
        e = jnp.where(pix < true_num_pixels, e, -1e30)
    e = e - jnp.max(e, axis=-1, keepdims=True)
    ee = jnp.exp(e)
    alpha = ee * pl.reciprocal(jnp.sum(ee, axis=-1, keepdims=True), approx=True)
    context = jnp.sum(enc_ref[...] * alpha[:, :, None], axis=1)   # (TB, Denc) f32

    # ---- gate = sigmoid(f_beta(h)) ----
    gate = _sigmoid(fbeta)
    ctx_g = gate * context

    # ---- LSTMCell([embed_t, gated_context], (h, c)) : no concat, 2 matmuls ----
    gates = (hgate
             + jnp.dot(emb_ref[0], w_xe_ref[...],
                       preferred_element_type=jnp.float32)
             + jnp.dot(ctx_g.astype(jnp.bfloat16), w_xc_ref[...],
                       preferred_element_type=jnp.float32))       # (TB, 4Hd)
    # NOTE: at real sizes Hd is a multiple of 128 so these slices are lane-aligned.
    i_g = _sigmoid(gates[:, 0 * hd:1 * hd])
    f_g = _sigmoid(gates[:, 1 * hd:2 * hd])
    g_g = jnp.tanh(gates[:, 2 * hd:3 * hd])
    o_g = _sigmoid(gates[:, 3 * hd:4 * hd])
    c_new = f_g * c + i_g * g_g
    h_new = o_g * jnp.tanh(c_new)

    # ---- fc_head (dropout p=0.0 is identity) ----
    logits = (jnp.dot(h_new.astype(jnp.bfloat16), w_fc_ref[...],
                      preferred_element_type=jnp.float32) + b_fc_ref[...])

    # ---- shrinking-batch emulation: freeze / zero rows past the active count ----
    bt = bt_ref[t]                                               # scalar from SMEM
    row = (jax.lax.broadcasted_iota(jnp.int32, (tb, 1), 0)
           + pl.program_id(0) * tb)
    active = row < bt                                            # (TB, 1) bool
    h_scr[...] = jnp.where(active, h_new, h)
    c_scr[...] = jnp.where(active, c_new, c)
    pred_ref[0] = jnp.where(active, logits, 0.0)
    alpha_ref[0] = jnp.where(active, alpha, 0.0)


# ----------------------------------------------------------------------------
# Wrapper: host glue (sort by caption length, embedding gather, weight fusion,
# hoisted encoder projection) + pallas_call.
# ----------------------------------------------------------------------------
def attention_decoder_forward(params, encoder_output, y_encodings,
                              pad_tok_idx=0, batch_tile=None):
    B = encoder_output.shape[0]
    Denc = encoder_output.shape[-1]
    enc = jnp.reshape(encoder_output, (B, -1, Denc)).astype(jnp.float32)
    P = enc.shape[1]

    # host-side: caption lengths, sort (descending), decode lengths
    y_np = np.asarray(y_encodings)
    lengths = (y_np != pad_tok_idx).sum(axis=1)
    sort_idx = np.argsort(-lengths, kind="stable")
    decode_lengths = (lengths[sort_idx] - 1).astype(np.int32)
    T_dec = int(decode_lengths.max())

    A = params["w_e2a"].shape[1]
    Hd = params["w_hh"].shape[0]
    V = params["w_fc"].shape[1]
    E = params["embed_table"].shape[1]
    HF = A + Denc + 4 * Hd

    if T_dec == 0:   # every caption has length 1: nothing to decode
        return (jnp.zeros((B, 0, V), jnp.float32),
                jnp.zeros((B, 0, P), jnp.float32),
                decode_lengths.tolist(), sort_idx)

    # lane-pad the pixel axis to a multiple of 128 (dense stores on alpha path)
    P_pad = max(128, _round_up(P, 128))
    enc_sorted = enc[jnp.asarray(sort_idx)]
    enc_p = jnp.pad(enc_sorted,
                    ((0, 0), (0, P_pad - P), (0, 0))).astype(jnp.bfloat16)

    # hoisted, loop-invariant encoder attention projection: enc @ W_enc2att
    att1_p = jnp.einsum("bpd,da->bpa", enc_p,
                        params["w_e2a"].astype(jnp.bfloat16),
                        preferred_element_type=jnp.float32).astype(jnp.bfloat16)

    caps_sorted = jnp.asarray(y_np[sort_idx].astype(np.int32))
    embed = jnp.take(params["embed_table"], caps_sorted, axis=0)   # (B, Tcap, E)
    embed_steps = jnp.transpose(embed, (1, 0, 2))[:T_dec].astype(jnp.bfloat16)

    # fused weights (built once, outside the time loop), bf16 for the MXU
    bf16 = lambda x: x.astype(jnp.bfloat16)
    w_h_fused = bf16(jnp.concatenate(
        [params["w_h2a"], params["w_fb"], params["w_hh"]], axis=1))      # (Hd, HF)
    b_h_fused = jnp.concatenate(
        [jnp.zeros((1, A), jnp.float32), params["b_fb"],
         params["b_ih"] + params["b_hh"]], axis=1)                       # (1, HF)
    w_xe = bf16(params["w_ih"][:E, :])
    w_xc = bf16(params["w_ih"][E:, :])
    w_fc = bf16(params["w_fc"])
    b_fc = params["b_fc"].astype(jnp.float32)
    w_att = params["w_att"].astype(jnp.float32)
    w_init = bf16(jnp.concatenate(
        [params["w_init_h"], params["w_init_c"]], axis=1))               # (Denc, 2Hd)
    b_init = jnp.concatenate([params["b_init_h"], params["b_init_c"]], axis=1)

    # per-step active-row counts (sorted descending -> only shrinks), SMEM prefetch
    bt_steps = jnp.asarray(
        np.array([(decode_lengths > t).sum() for t in range(T_dec)],
                 dtype=np.int32))

    TB = B if batch_tile is None else batch_tile
    assert B % TB == 0 and (TB == B or TB % 8 == 0)
    nb = B // TB

    # TODO(synk): at real model sizes (P=196, Denc=2048, V~10k) stream enc and
    # w_fc from HBM (memory_space=pl.ANY + emit_pipeline P/V tiling) and
    # single-buffer the constant weights; unnecessary at these toy shapes.
    const2 = lambda shape: pl.BlockSpec(shape, lambda b, t, bt: (0, 0))
    in_specs = [
        pl.BlockSpec((TB, P_pad, Denc), lambda b, t, bt: (b, 0, 0)),  # enc
        pl.BlockSpec((TB, P_pad, A), lambda b, t, bt: (b, 0, 0)),     # att1
        pl.BlockSpec((1, TB, E), lambda b, t, bt: (t, b, 0)),         # emb step t
        const2((1, A)),           # w_att
        const2((Hd, HF)),         # fused h-side weights
        const2((1, HF)),          # fused h-side bias
        const2((E, 4 * Hd)),      # w_xe
        const2((Denc, 4 * Hd)),   # w_xc
        const2((Hd, V)),          # w_fc
        const2((1, V)),           # b_fc
        const2((Denc, 2 * Hd)),   # w_init
        const2((1, 2 * Hd)),      # b_init
    ]
    out_specs = [
        pl.BlockSpec((1, TB, V), lambda b, t, bt: (t, b, 0)),
        pl.BlockSpec((1, TB, P_pad), lambda b, t, bt: (t, b, 0)),
    ]

    kernel = functools.partial(decoder_step_kernel, true_num_pixels=P)
    preds_t, alphas_t = pl.pallas_call(
        kernel,
        out_shape=(jax.ShapeDtypeStruct((T_dec, B, V), jnp.float32),
                   jax.ShapeDtypeStruct((T_dec, B, P_pad), jnp.float32)),
        grid_spec=pltpu.PrefetchScalarGridSpec(
            num_scalar_prefetch=1,
            grid=(nb, T_dec),
            in_specs=in_specs,
            out_specs=out_specs,
            scratch_shapes=[pltpu.VMEM((TB, Hd), jnp.float32),
                            pltpu.VMEM((TB, Hd), jnp.float32)],
        ),
        compiler_params=pltpu.CompilerParams(
            dimension_semantics=("parallel", "arbitrary"),
            vmem_limit_bytes=64 * 1024 * 1024),
    )(
        bt_steps,
        enc_p, att1_p, embed_steps,
        w_att, w_h_fused, b_h_fused, w_xe, w_xc, w_fc, b_fc, w_init, b_init,
    )

    predictions = jnp.transpose(preds_t, (1, 0, 2))           # (B, T_dec, V)
    alphas = jnp.transpose(alphas_t, (1, 0, 2))[:, :, :P]     # (B, T_dec, P)
    return predictions, alphas, decode_lengths.tolist(), sort_idx


# ----------------------------------------------------------------------------
# Deterministic parameter init (shapes follow AttentionDecoder.__init__).
# Weights stored pre-transposed (in, out) so the kernel does x @ W.
# ----------------------------------------------------------------------------
def init_params(key, V, E, Denc, Hd, A):
    ks = jax.random.split(key, 20)

    def xavier_t(k, fan_out, fan_in):
        std = (2.0 / (fan_in + fan_out)) ** 0.5
        return (std * jax.random.normal(k, (fan_out, fan_in),
                                        dtype=jnp.float32)).T

    def unif(k, shape, bound):
        return jax.random.uniform(k, shape, jnp.float32, -bound, bound)

    emb_b = (3.0 / E) ** 0.5
    lstm_b = 1.0 / (Hd ** 0.5)
    att_b = 1.0 / (A ** 0.5)
    hd_b = 1.0 / (Hd ** 0.5)
    enc_b = 1.0 / (Denc ** 0.5)

    return dict(
        embed_table=unif(ks[0], (V, E), emb_b),
        # SoftAttention
        w_e2a=xavier_t(ks[1], A, Denc),                 # (Denc, A)
        w_h2a=xavier_t(ks[2], A, Hd),                   # (Hd, A)
        w_att=(2.0 / (A + 1)) ** 0.5 * jax.random.normal(ks[3], (1, A),
                                                         dtype=jnp.float32),
        b_att=unif(ks[4], (1, 1), att_b),
        # f_beta
        w_fb=xavier_t(ks[5], Denc, Hd),                 # (Hd, Denc)
        b_fb=unif(ks[6], (1, Denc), hd_b),
        # LSTMCell
        w_ih=unif(ks[7], (E + Denc, 4 * Hd), lstm_b),
        b_ih=unif(ks[8], (1, 4 * Hd), lstm_b),
        w_hh=unif(ks[9], (Hd, 4 * Hd), lstm_b),
        b_hh=unif(ks[10], (1, 4 * Hd), lstm_b),
        # fc_head (special init)
        w_fc=unif(ks[11], (Hd, V), 1.0 / V),
        b_fc=jnp.zeros((1, V), jnp.float32),
        # init_h / init_c
        w_init_h=xavier_t(ks[12], Hd, Denc),            # (Denc, Hd)
        b_init_h=unif(ks[13], (1, Hd), enc_b),
        w_init_c=xavier_t(ks[14], Hd, Denc),
        b_init_c=unif(ks[15], (1, Hd), enc_b),
    )


# ----------------------------------------------------------------------------
# Numpy reference replicating the PyTorch loop (shrinking batch) exactly.
# ----------------------------------------------------------------------------
def reference_forward(p, enc, emb, decode_lengths):
    def sig(x):
        return 1.0 / (1.0 + np.exp(-x))

    B, P, Denc = enc.shape
    Hd = p["w_hh"].shape[0]
    V = p["w_fc"].shape[1]
    T = max(decode_lengths)
    preds = np.zeros((B, T, V), np.float32)
    alphas = np.zeros((B, T, P), np.float32)

    mean_enc = enc.mean(axis=1)
    h = mean_enc @ p["w_init_h"] + p["b_init_h"]
    c = mean_enc @ p["w_init_c"] + p["b_init_c"]
    for t in range(T):
        bt = int(sum(dl > t for dl in decode_lengths))
        e_enc = enc[:bt]
        att1 = e_enc @ p["w_e2a"]
        att2 = h[:bt] @ p["w_h2a"]
        act = np.maximum(att1 + att2[:, None, :], 0.0)
        e = np.sum(act * p["w_att"][None, :, :], axis=-1) + p["b_att"][0, 0]
        e = e - e.max(axis=1, keepdims=True)
        a = np.exp(e)
        alpha = a / a.sum(axis=1, keepdims=True)
        ctx = (e_enc * alpha[:, :, None]).sum(axis=1)
        gate = sig(h[:bt] @ p["w_fb"] + p["b_fb"])
        ctx = gate * ctx
        x = np.concatenate([emb[:bt, t, :], ctx], axis=1)
        gates = x @ p["w_ih"] + p["b_ih"] + h[:bt] @ p["w_hh"] + p["b_hh"]
        i = sig(gates[:, :Hd])
        f = sig(gates[:, Hd:2 * Hd])
        g = np.tanh(gates[:, 2 * Hd:3 * Hd])
        o = sig(gates[:, 3 * Hd:])
        c = f * c[:bt] + i * g
        h = o * np.tanh(c)
        preds[:bt, t] = h @ p["w_fc"] + p["b_fc"]
        alphas[:bt, t] = alpha
    return preds, alphas


# ----------------------------------------------------------------------------
if __name__ == "__main__":
    B, Hs, Ws = 4, 4, 4
    Denc, Hd, A, E, V, T_cap = 32, 32, 32, 16, 32, 8
    PAD, START, STOP = 0, 1, 2

    key = jax.random.PRNGKey(0)
    k_enc, k_tok, k_par = jax.random.split(key, 3)

    params = init_params(k_par, V, E, Denc, Hd, A)
    encoder_output = jax.random.normal(k_enc, (B, Hs, Ws, Denc), dtype=jnp.float32)

    # deterministic captions with varying lengths (start ... stop pad pad ...)
    cap_lens = [8, 6, 7, 5]
    rand_tokens = np.asarray(jax.random.randint(k_tok, (B, T_cap), 3, V))
    toks = np.zeros((B, T_cap), dtype=np.int32)
    for b, L in enumerate(cap_lens):
        toks[b, 0] = START
        toks[b, 1:L - 1] = rand_tokens[b, 1:L - 1]
        toks[b, L - 1] = STOP
    y_encodings = jnp.asarray(toks)

    predictions, alphas, decode_lengths, sort_idx = attention_decoder_forward(
        params, encoder_output, y_encodings, pad_tok_idx=PAD)
    predictions = jax.block_until_ready(predictions)
    alphas = jax.block_until_ready(alphas)

    # ---- check against a numpy reference of the PyTorch loop.  The kernel feeds
    #      the MXU in bf16 (f32 accumulation), so the reference uses the same
    #      bf16-rounded weights / activations, computed in f32 numpy. ----
    def bf16r(x):
        return np.asarray(jnp.asarray(x).astype(jnp.bfloat16).astype(jnp.float32))

    p_np = {k: np.asarray(v) for k, v in params.items()}
    for name in ("w_e2a", "w_h2a", "w_fb", "w_hh", "w_ih", "w_fc",
                 "w_init_h", "w_init_c"):
        p_np[name] = bf16r(p_np[name])
    enc_np = bf16r(np.asarray(encoder_output).reshape(B, -1, Denc)[sort_idx])
    emb_np = bf16r(np.asarray(params["embed_table"])[toks[sort_idx]])
    ref_preds, ref_alphas = reference_forward(p_np, enc_np, emb_np, decode_lengths)

    np.testing.assert_allclose(np.asarray(predictions), ref_preds,
                               rtol=2e-2, atol=2e-2)
    np.testing.assert_allclose(np.asarray(alphas), ref_alphas,
                               rtol=2e-2, atol=2e-2)

    print("KERNEL_OK")
</pallas_src>

<mosaic_0001>
module attributes {stable_mosaic.version = 11 : i64} {
  func.func @decoder_step_kernel(%arg0: i32, %arg1: i32, %arg2: memref<7xi32, #tpu.memory_space<smem>>, %arg3: memref<4x128x32xbf16, #tpu.memory_space<vmem>>, %arg4: memref<4x128x32xbf16, #tpu.memory_space<vmem>>, %arg5: memref<1x4x16xbf16, #tpu.memory_space<vmem>>, %arg6: memref<1x32xf32, #tpu.memory_space<vmem>>, %arg7: memref<32x192xbf16, #tpu.memory_space<vmem>>, %arg8: memref<1x192xf32, #tpu.memory_space<vmem>>, %arg9: memref<16x128xbf16, #tpu.memory_space<vmem>>, %arg10: memref<32x128xbf16, #tpu.memory_space<vmem>>, %arg11: memref<32x32xbf16, #tpu.memory_space<vmem>>, %arg12: memref<1x32xf32, #tpu.memory_space<vmem>>, %arg13: memref<32x64xbf16, #tpu.memory_space<vmem>>, %arg14: memref<1x64xf32, #tpu.memory_space<vmem>>, %arg15: memref<1x4x32xf32, #tpu.memory_space<vmem>>, %arg16: memref<1x4x128xf32, #tpu.memory_space<vmem>>, %arg17: memref<4x32xf32, #tpu.memory_space<vmem>>, %arg18: memref<4x32xf32, #tpu.memory_space<vmem>>) attributes {dimension_semantics = [#tpu.dimension_semantics<parallel>, #tpu.dimension_semantics<arbitrary>], iteration_bounds = array<i64: 1, 7>, scalar_prefetch = 1 : i64, scratch_operands = 2 : i64, tpu.core_type = #tpu.core_type<tc>, window_params = [{transform_indices = @transform_0, window_bounds = array<i64: 4, 128, 32>}, {transform_indices = @transform_1, window_bounds = array<i64: 4, 128, 32>}, {transform_indices = @transform_2, window_bounds = array<i64: 1, 4, 16>}, {pipeline_mode = #tpu.pipeline_mode<synchronous>, transform_indices = @transform_3, window_bounds = array<i64: 1, 32>}, {pipeline_mode = #tpu.pipeline_mode<synchronous>, transform_indices = @transform_4, window_bounds = array<i64: 32, 192>}, {pipeline_mode = #tpu.pipeline_mode<synchronous>, transform_indices = @transform_5, window_bounds = array<i64: 1, 192>}, {pipeline_mode = #tpu.pipeline_mode<synchronous>, transform_indices = @transform_6, window_bounds = array<i64: 16, 128>}, {pipeline_mode = #tpu.pipeline_mode<synchronous>, transform_indices = @transform_7, window_bounds = array<i64: 32, 128>}, {pipeline_mode = #tpu.pipeline_mode<synchronous>, transform_indices = @transform_8, window_bounds = array<i64: 32, 32>}, {pipeline_mode = #tpu.pipeline_mode<synchronous>, transform_indices = @transform_9, window_bounds = array<i64: 1, 32>}, {pipeline_mode = #tpu.pipeline_mode<synchronous>, transform_indices = @transform_10, window_bounds = array<i64: 32, 64>}, {pipeline_mode = #tpu.pipeline_mode<synchronous>, transform_indices = @transform_11, window_bounds = array<i64: 1, 64>}, {transform_indices = @transform_12, window_bounds = array<i64: 1, 4, 32>}, {transform_indices = @transform_13, window_bounds = array<i64: 1, 4, 128>}]} {
    %c0_i32 = arith.constant 0 : i32
    %0 = arith.cmpi eq, %arg1, %c0_i32 : i32
    %1 = arith.extui %0 : i1 to i32
    %c0_i32_0 = arith.constant 0 : i32
    %2 = arith.cmpi ne, %1, %c0_i32_0 : i32
    scf.if %2 {
      %c0_60 = arith.constant 0 : index
      %c0_61 = arith.constant 0 : index
      %c0_62 = arith.constant 0 : index
      %131 = vector.load %arg3[%c0_60, %c0_61, %c0_62] : memref<4x128x32xbf16, #tpu.memory_space<vmem>>, vector<4x128x32xbf16>
      %132 = arith.extf %131 : vector<4x128x32xbf16> to vector<4x128x32xf32>
      %cst_63 = arith.constant dense<0.000000e+00> : vector<4x32xf32>
      %133 = vector.multi_reduction <add>, %132, %cst_63 [1] : vector<4x128x32xf32> to vector<4x32xf32>
      %cst_64 = arith.constant 6.250000e-02 : f32
      %134 = vector.broadcast %cst_64 : f32 to vector<4x32xf32>
      %135 = arith.mulf %133, %134 : vector<4x32xf32>
      %136 = arith.truncf %135 : vector<4x32xf32> to vector<4x32xbf16>
      %c0_65 = arith.constant 0 : index
      %c0_66 = arith.constant 0 : index
      %137 = vector.load %arg13[%c0_65, %c0_66] : memref<32x64xbf16, #tpu.memory_space<vmem>>, vector<32x64xbf16>
      %cst_67 = arith.constant dense<0.000000e+00> : vector<4x64xf32>
      %138 = tpu.matmul %136, %137, %cst_67 {dimension_numbers = #tpu.dot_dimension_numbers<[1], [0], [0], [1], [0, 0, 1, 1], [], []>} : vector<4x32xbf16>, vector<32x64xbf16>, vector<4x64xf32> -> vector<4x64xf32>
      %c0_68 = arith.constant 0 : index
      %c0_69 = arith.constant 0 : index
      %139 = vector.load %arg14[%c0_68, %c0_69] : memref<1x64xf32, #tpu.memory_space<vmem>>, vector<1x64xf32>
      %140 = vector.broadcast %139 : vector<1x64xf32> to vector<4x64xf32>
      %141 = arith.addf %138, %140 : vector<4x64xf32>
      %142 = vector.extract_strided_slice %141 {offsets = [0, 0], sizes = [4, 32], strides = [1, 1]} : vector<4x64xf32> to vector<4x32xf32>
      %c0_70 = arith.constant 0 : index
      %c0_71 = arith.constant 0 : index
      %143 = vector.load %arg17[%c0_70, %c0_71] : memref<4x32xf32, #tpu.memory_space<vmem>>, vector<4x32xf32>
      tpu.vector_store %arg17[%c0_70, %c0_71], %142 {strides = array<i32>} : memref<4x32xf32, #tpu.memory_space<vmem>>, vector<4x32xf32>,
      %144 = vector.extract_strided_slice %141 {offsets = [0, 32], sizes = [4, 32], strides = [1, 1]} : vector<4x64xf32> to vector<4x32xf32>
      %c0_72 = arith.constant 0 : index
      %c0_73 = arith.constant 0 : index
      %145 = vector.load %arg18[%c0_72, %c0_73] : memref<4x32xf32, #tpu.memory_space<vmem>>, vector<4x32xf32>
      tpu.vector_store %arg18[%c0_72, %c0_73], %144 {strides = array<i32>} : memref<4x32xf32, #tpu.memory_space<vmem>>, vector<4x32xf32>,
    } else {
    }
    %c0 = arith.constant 0 : index
    %c0_1 = arith.constant 0 : index
    %3 = vector.load %arg17[%c0, %c0_1] : memref<4x32xf32, #tpu.memory_space<vmem>>, vector<4x32xf32>
    %c0_2 = arith.constant 0 : index
    %c0_3 = arith.constant 0 : index
    %4 = vector.load %arg18[%c0_2, %c0_3] : memref<4x32xf32, #tpu.memory_space<vmem>>, vector<4x32xf32>
    %5 = arith.truncf %3 : vector<4x32xf32> to vector<4x32xbf16>
    %c0_4 = arith.constant 0 : index
    %c0_5 = arith.constant 0 : index
    %6 = vector.load %arg7[%c0_4, %c0_5] : memref<32x192xbf16, #tpu.memory_space<vmem>>, vector<32x192xbf16>
    %cst = arith.constant dense<0.000000e+00> : vector<4x192xf32>
    %7 = tpu.matmul %5, %6, %cst {dimension_numbers = #tpu.dot_dimension_numbers<[1], [0], [0], [1], [0, 0, 1, 1], [], []>} : vector<4x32xbf16>, vector<32x192xbf16>, vector<4x192xf32> -> vector<4x192xf32>
    %c0_6 = arith.constant 0 : index
    %c0_7 = arith.constant 0 : index
    %8 = vector.load %arg8[%c0_6, %c0_7] : memref<1x192xf32, #tpu.memory_space<vmem>>, vector<1x192xf32>
    %9 = vector.broadcast %8 : vector<1x192xf32> to vector<4x192xf32>
    %10 = arith.addf %7, %9 : vector<4x192xf32>
    %11 = vector.extract_strided_slice %10 {offsets = [0, 0], sizes = [4, 32], strides = [1, 1]} : vector<4x192xf32> to vector<4x32xf32>
    %12 = vector.extract_strided_slice %10 {offsets = [0, 32], sizes = [4, 32], strides = [1, 1]} : vector<4x192xf32> to vector<4x32xf32>
    %13 = vector.extract_strided_slice %10 {offsets = [0, 64], sizes = [4, 128], strides = [1, 1]} : vector<4x192xf32> to vector<4x128xf32>
    %c0_8 = arith.constant 0 : index
    %c0_9 = arith.constant 0 : index
    %c0_10 = arith.constant 0 : index
    %14 = vector.load %arg4[%c0_8, %c0_9, %c0_10] : memref<4x128x32xbf16, #tpu.memory_space<vmem>>, vector<4x128x32xbf16>
    %15 = arith.extf %14 : vector<4x128x32xbf16> to vector<4x128x32xf32>
    %16 = vector.shape_cast %11 : vector<4x32xf32> to vector<4x1x32xf32>
    %17 = vector.broadcast %16 : vector<4x1x32xf32> to vector<4x128x32xf32>
    %18 = arith.addf %15, %17 : vector<4x128x32xf32>
    %cst_11 = arith.constant 0.000000e+00 : f32
    %19 = vector.broadcast %cst_11 : f32 to vector<4x128x32xf32>
    %20 = arith.maximumf %18, %19 : vector<4x128x32xf32>
    %c0_12 = arith.constant 0 : index
    %c0_13 = arith.constant 0 : index
    %21 = vector.load %arg6[%c0_12, %c0_13] : memref<1x32xf32, #tpu.memory_space<vmem>>, vector<1x32xf32>
    %22 = vector.shape_cast %21 : vector<1x32xf32> to vector<1x1x32xf32>
    %23 = vector.broadcast %22 : vector<1x1x32xf32> to vector<4x128x32xf32>
    %24 = arith.mulf %20, %23 : vector<4x128x32xf32>
    %cst_14 = arith.constant dense<0.000000e+00> : vector<4x128xf32>
    %25 = vector.multi_reduction <add>, %24, %cst_14 [2] : vector<4x128x32xf32> to vector<4x128xf32>
    %26 = tpu.iota {dimensions = array<i32: 1>} : vector<4x128xi32>
    %c16_i32 = arith.constant 16 : i32
    %27 = vector.broadcast %c16_i32 : i32 to vector<4x128xi32>
    %28 = arith.cmpi slt, %26, %27 : vector<4x128xi32>
    %cst_15 = arith.constant -1.000000e+30 : f32
    %29 = vector.broadcast %cst_15 : f32 to vector<4x128xf32>
    %30 = arith.select %28, %25, %29 : vector<4x128xi1>, vector<4x128xf32>
    %cst_16 = arith.constant dense<0xFF800000> : vector<4xf32>
    %31 = vector.multi_reduction <maximumf>, %30, %cst_16 [1] : vector<4x128xf32> to vector<4xf32>
    %32 = vector.shape_cast %31 : vector<4xf32> to vector<4x1xf32>
    %33 = vector.broadcast %32 : vector<4x1xf32> to vector<4x128xf32>
    %34 = arith.subf %30, %33 : vector<4x128xf32>
    %35 = math.exp %34 : vector<4x128xf32>
    %cst_17 = arith.constant dense<0.000000e+00> : vector<4xf32>
    %36 = vector.multi_reduction <add>, %35, %cst_17 [1] : vector<4x128xf32> to vector<4xf32>
    %37 = vector.shape_cast %36 : vector<4xf32> to vector<4x1xf32>
    %38 = tpu.reciprocal %37 {approx = true} : vector<4x1xf32> -> vector<4x1xf32>
    %39 = vector.broadcast %38 : vector<4x1xf32> to vector<4x128xf32>
    %40 = arith.mulf %35, %39 : vector<4x128xf32>
    %c0_18 = arith.constant 0 : index
    %c0_19 = arith.constant 0 : index
    %c0_20 = arith.constant 0 : index
    %41 = vector.load %arg3[%c0_18, %c0_19, %c0_20] : memref<4x128x32xbf16, #tpu.memory_space<vmem>>, vector<4x128x32xbf16>
    %42 = vector.shape_cast %40 : vector<4x128xf32> to vector<4x128x1xf32>
    %43 = arith.extf %41 : vector<4x128x32xbf16> to vector<4x128x32xf32>
    %44 = vector.broadcast %42 : vector<4x128x1xf32> to vector<4x128x32xf32>
    %45 = arith.mulf %43, %44 : vector<4x128x32xf32>
    %cst_21 = arith.constant dense<0.000000e+00> : vector<4x32xf32>
    %46 = vector.multi_reduction <add>, %45, %cst_21 [1] : vector<4x128x32xf32> to vector<4x32xf32>
    %cst_22 = arith.constant 5.000000e-01 : f32
    %47 = vector.broadcast %cst_22 : f32 to vector<4x32xf32>
    %48 = arith.mulf %47, %12 : vector<4x32xf32>
    %49 = math.tanh %48 : vector<4x32xf32>
    %cst_23 = arith.constant 1.000000e+00 : f32
    %50 = vector.broadcast %cst_23 : f32 to vector<4x32xf32>
    %51 = arith.addf %49, %50 : vector<4x32xf32>
    %cst_24 = arith.constant 5.000000e-01 : f32
    %52 = vector.broadcast %cst_24 : f32 to vector<4x32xf32>
    %53 = arith.mulf %52, %51 : vector<4x32xf32>
    %54 = arith.mulf %53, %46 : vector<4x32xf32>
    %c0_25 = arith.constant 0 : index
    %c0_26 = arith.constant 0 : index
    %c0_27 = arith.constant 0 : index
    %55 = vector.load %arg5[%c0_25, %c0_26, %c0_27] : memref<1x4x16xbf16, #tpu.memory_space<vmem>>, vector<1x4x16xbf16>
    %56 = vector.shape_cast %55 : vector<1x4x16xbf16> to vector<4x16xbf16>
    %c0_28 = arith.constant 0 : index
    %c0_29 = arith.constant 0 : index
    %57 = vector.load %arg9[%c0_28, %c0_29] : memref<16x128xbf16, #tpu.memory_space<vmem>>, vector<16x128xbf16>
    %cst_30 = arith.constant dense<0.000000e+00> : vector<4x128xf32>
    %58 = tpu.matmul %56, %57, %cst_30 {dimension_numbers = #tpu.dot_dimension_numbers<[1], [0], [0], [1], [0, 0, 1, 1], [], []>} : vector<4x16xbf16>, vector<16x128xbf16>, vector<4x128xf32> -> vector<4x128xf32>
    %59 = arith.addf %13, %58 : vector<4x128xf32>
    %60 = arith.truncf %54 : vector<4x32xf32> to vector<4x32xbf16>
    %c0_31 = arith.constant 0 : index
    %c0_32 = arith.constant 0 : index
    %61 = vector.load %arg10[%c0_31, %c0_32] : memref<32x128xbf16, #tpu.memory_space<vmem>>, vector<32x128xbf16>
    %cst_33 = arith.constant dense<0.000000e+00> : vector<4x128xf32>
    %62 = tpu.matmul %60, %61, %cst_33 {dimension_numbers = #tpu.dot_dimension_numbers<[1], [0], [0], [1], [0, 0, 1, 1], [], []>} : vector<4x32xbf16>, vector<32x128xbf16>, vector<4x128xf32> -> vector<4x128xf32>
    %63 = arith.addf %59, %62 : vector<4x128xf32>
    %64 = vector.extract_strided_slice %63 {offsets = [0, 0], sizes = [4, 32], strides = [1, 1]} : vector<4x128xf32> to vector<4x32xf32>
    %cst_34 = arith.constant 5.000000e-01 : f32
    %65 = vector.broadcast %cst_34 : f32 to vector<4x32xf32>
    %66 = arith.mulf %65, %64 : vector<4x32xf32>
    %67 = math.tanh %66 : vector<4x32xf32>
    %cst_35 = arith.constant 1.000000e+00 : f32
    %68 = vector.broadcast %cst_35 : f32 to vector<4x32xf32>
    %69 = arith.addf %67, %68 : vector<4x32xf32>
    %cst_36 = arith.constant 5.000000e-01 : f32
    %70 = vector.broadcast %cst_36 : f32 to vector<4x32xf32>
    %71 = arith.mulf %70, %69 : vector<4x32xf32>
    %72 = vector.extract_strided_slice %63 {offsets = [0, 32], sizes = [4, 32], strides = [1, 1]} : vector<4x128xf32> to vector<4x32xf32>
    %cst_37 = arith.constant 5.000000e-01 : f32
    %73 = vector.broadcast %cst_37 : f32 to vector<4x32xf32>
    %74 = arith.mulf %73, %72 : vector<4x32xf32>
    %75 = math.tanh %74 : vector<4x32xf32>
    %cst_38 = arith.constant 1.000000e+00 : f32
    %76 = vector.broadcast %cst_38 : f32 to vector<4x32xf32>
    %77 = arith.addf %75, %76 : vector<4x32xf32>
    %cst_39 = arith.constant 5.000000e-01 : f32
    %78 = vector.broadcast %cst_39 : f32 to vector<4x32xf32>
    %79 = arith.mulf %78, %77 : vector<4x32xf32>
    %80 = vector.extract_strided_slice %63 {offsets = [0, 64], sizes = [4, 32], strides = [1, 1]} : vector<4x128xf32> to vector<4x32xf32>
    %81 = math.tanh %80 : vector<4x32xf32>
    %82 = vector.extract_strided_slice %63 {offsets = [0, 96], sizes = [4, 32], strides = [1, 1]} : vector<4x128xf32> to vector<4x32xf32>
    %cst_40 = arith.constant 5.000000e-01 : f32
    %83 = vector.broadcast %cst_40 : f32 to vector<4x32xf32>
    %84 = arith.mulf %83, %82 : vector<4x32xf32>
    %85 = math.tanh %84 : vector<4x32xf32>
    %cst_41 = arith.constant 1.000000e+00 : f32
    %86 = vector.broadcast %cst_41 : f32 to vector<4x32xf32>
    %87 = arith.addf %85, %86 : vector<4x32xf32>
    %cst_42 = arith.constant 5.000000e-01 : f32
    %88 = vector.broadcast %cst_42 : f32 to vector<4x32xf32>
    %89 = arith.mulf %88, %87 : vector<4x32xf32>
    %90 = arith.mulf %79, %4 : vector<4x32xf32>
    %91 = arith.mulf %71, %81 : vector<4x32xf32>
    %92 = arith.addf %90, %91 : vector<4x32xf32>
    %93 = math.tanh %92 : vector<4x32xf32>
    %94 = arith.mulf %89, %93 : vector<4x32xf32>
    %95 = arith.truncf %94 : vector<4x32xf32> to vector<4x32xbf16>
    %c0_43 = arith.constant 0 : index
    %c0_44 = arith.constant 0 : index
    %96 = vector.load %arg11[%c0_43, %c0_44] : memref<32x32xbf16, #tpu.memory_space<vmem>>, vector<32x32xbf16>
    %cst_45 = arith.constant dense<0.000000e+00> : vector<4x32xf32>
    %97 = tpu.matmul %95, %96, %cst_45 {dimension_numbers = #tpu.dot_dimension_numbers<[1], [0], [0], [1], [0, 0, 1, 1], [], []>} : vector<4x32xbf16>, vector<32x32xbf16>, vector<4x32xf32> -> vector<4x32xf32>
    %c0_46 = arith.constant 0 : index
    %c0_47 = arith.constant 0 : index
    %98 = vector.load %arg12[%c0_46, %c0_47] : memref<1x32xf32, #tpu.memory_space<vmem>>, vector<1x32xf32>
    %99 = vector.broadcast %98 : vector<1x32xf32> to vector<4x32xf32>
    %100 = arith.addf %97, %99 : vector<4x32xf32>
    %101 = arith.index_cast %arg1 : i32 to index
    %102 = memref.load %arg2[%101] : memref<7xi32, #tpu.memory_space<smem>>
    %103 = tpu.iota {dimensions = array<i32: 0>} : vector<4x1xi32>
    %c4_i32 = arith.constant 4 : i32
    %104 = arith.muli %arg0, %c4_i32 : i32
    %105 = vector.broadcast %104 : i32 to vector<4x1xi32>
    %106 = arith.addi %103, %105 : vector<4x1xi32>
    %107 = vector.broadcast %102 : i32 to vector<4x1xi32>
    %108 = arith.cmpi slt, %106, %107 : vector<4x1xi32>
    %109 = vector.shape_cast %108 : vector<4x1xi1> to vector<4x1xi1>
    %110 = vector.broadcast %109 : vector<4x1xi1> to vector<4x32xi1>
    %111 = arith.select %110, %94, %3 : vector<4x32xi1>, vector<4x32xf32>
    %c0_48 = arith.constant 0 : index
    %c0_49 = arith.constant 0 : index
    %112 = vector.load %arg17[%c0_48, %c0_49] : memref<4x32xf32, #tpu.memory_space<vmem>>, vector<4x32xf32>
    tpu.vector_store %arg17[%c0_48, %c0_49], %111 {strides = array<i32>} : memref<4x32xf32, #tpu.memory_space<vmem>>, vector<4x32xf32>,
    %113 = vector.shape_cast %108 : vector<4x1xi1> to vector<4x1xi1>
    %114 = vector.broadcast %113 : vector<4x1xi1> to vector<4x32xi1>
    %115 = arith.select %114, %92, %4 : vector<4x32xi1>, vector<4x32xf32>
    %c0_50 = arith.constant 0 : index
    %c0_51 = arith.constant 0 : index
    %116 = vector.load %arg18[%c0_50, %c0_51] : memref<4x32xf32, #tpu.memory_space<vmem>>, vector<4x32xf32>
    tpu.vector_store %arg18[%c0_50, %c0_51], %115 {strides = array<i32>} : memref<4x32xf32, #tpu.memory_space<vmem>>, vector<4x32xf32>,
    %cst_52 = arith.constant 0.000000e+00 : f32
    %117 = vector.shape_cast %108 : vector<4x1xi1> to vector<4x1xi1>
    %118 = vector.broadcast %117 : vector<4x1xi1> to vector<4x32xi1>
    %119 = vector.broadcast %cst_52 : f32 to vector<4x32xf32>
    %120 = arith.select %118, %100, %119 : vector<4x32xi1>, vector<4x32xf32>
    %c0_53 = arith.constant 0 : index
    %c0_54 = arith.constant 0 : index
    %c0_55 = arith.constant 0 : index
    %121 = vector.load %arg15[%c0_53, %c0_54, %c0_55] : memref<1x4x32xf32, #tpu.memory_space<vmem>>, vector<1x4x32xf32>
    %122 = vector.shape_cast %121 : vector<1x4x32xf32> to vector<4x32xf32>
    %123 = vector.shape_cast %120 : vector<4x32xf32> to vector<1x4x32xf32>
    tpu.vector_store %arg15[%c0_53, %c0_54, %c0_55], %123 {strides = array<i32>} : memref<1x4x32xf32, #tpu.memory_space<vmem>>, vector<1x4x32xf32>,
    %cst_56 = arith.constant 0.000000e+00 : f32
    %124 = vector.shape_cast %108 : vector<4x1xi1> to vector<4x1xi1>
    %125 = vector.broadcast %124 : vector<4x1xi1> to vector<4x128xi1>
    %126 = vector.broadcast %cst_56 : f32 to vector<4x128xf32>
    %127 = arith.select %125, %40, %126 : vector<4x128xi1>, vector<4x128xf32>
    %c0_57 = arith.constant 0 : index
    %c0_58 = arith.constant 0 : index
    %c0_59 = arith.constant 0 : index
    %128 = vector.load %arg16[%c0_57, %c0_58, %c0_59] : memref<1x4x128xf32, #tpu.memory_space<vmem>>, vector<1x4x128xf32>
    %129 = vector.shape_cast %128 : vector<1x4x128xf32> to vector<4x128xf32>
    %130 = vector.shape_cast %127 : vector<4x128xf32> to vector<1x4x128xf32>
    tpu.vector_store %arg16[%c0_57, %c0_58, %c0_59], %130 {strides = array<i32>} : memref<1x4x128xf32, #tpu.memory_space<vmem>>, vector<1x4x128xf32>,
    return
  }
  func.func @transform_0(%arg0: i32, %arg1: i32, %arg2: memref<7xi32, #tpu.memory_space<smem>>) -> (i32, i32, i32) {
    %c0_i32 = arith.constant 0 : i32
    %c0_i32_0 = arith.constant 0 : i32
    %c0_i32_1 = arith.constant 0 : i32
    return %arg0, %c0_i32, %c0_i32_0 : i32, i32, i32
  }
  func.func @transform_1(%arg0: i32, %arg1: i32, %arg2: memref<7xi32, #tpu.memory_space<smem>>) -> (i32, i32, i32) {
    %c0_i32 = arith.constant 0 : i32
    %c0_i32_0 = arith.constant 0 : i32
    %c0_i32_1 = arith.constant 0 : i32
    return %arg0, %c0_i32, %c0_i32_0 : i32, i32, i32
  }
  func.func @transform_2(%arg0: i32, %arg1: i32, %arg2: memref<7xi32, #tpu.memory_space<smem>>) -> (i32, i32, i32) {
    %c0_i32 = arith.constant 0 : i32
    %c0_i32_0 = arith.constant 0 : i32
    return %arg1, %arg0, %c0_i32 : i32, i32, i32
  }
  func.func @transform_3(%arg0: i32, %arg1: i32, %arg2: memref<7xi32, #tpu.memory_space<smem>>) -> (i32, i32) {
    %c0_i32 = arith.constant 0 : i32
    %c0_i32_0 = arith.constant 0 : i32
    %c0_i32_1 = arith.constant 0 : i32
    return %c0_i32, %c0_i32_0 : i32, i32
  }
  func.func @transform_4(%arg0: i32, %arg1: i32, %arg2: memref<7xi32, #tpu.memory_space<smem>>) -> (i32, i32) {
    %c0_i32 = arith.constant 0 : i32
    %c0_i32_0 = arith.constant 0 : i32
    %c0_i32_1 = arith.constant 0 : i32
    return %c0_i32, %c0_i32_0 : i32, i32
  }
  func.func @transform_5(%arg0: i32, %arg1: i32, %arg2: memref<7xi32, #tpu.memory_space<smem>>) -> (i32, i32) {
    %c0_i32 = arith.constant 0 : i32
    %c0_i32_0 = arith.constant 0 : i32
    %c0_i32_1 = arith.constant 0 : i32
    return %c0_i32, %c0_i32_0 : i32, i32
  }
  func.func @transform_6(%arg0: i32, %arg1: i32, %arg2: memref<7xi32, #tpu.memory_space<smem>>) -> (i32, i32) {
    %c0_i32 = arith.constant 0 : i32
    %c0_i32_0 = arith.constant 0 : i32
    %c0_i32_1 = arith.constant 0 : i32
    return %c0_i32, %c0_i32_0 : i32, i32
  }
  func.func @transform_7(%arg0: i32, %arg1: i32, %arg2: memref<7xi32, #tpu.memory_space<smem>>) -> (i32, i32) {
    %c0_i32 = arith.constant 0 : i32
    %c0_i32_0 = arith.constant 0 : i32
    %c0_i32_1 = arith.constant 0 : i32
    return %c0_i32, %c0_i32_0 : i32, i32
  }
  func.func @transform_8(%arg0: i32, %arg1: i32, %arg2: memref<7xi32, #tpu.memory_space<smem>>) -> (i32, i32) {
    %c0_i32 = arith.constant 0 : i32
    %c0_i32_0 = arith.constant 0 : i32
    %c0_i32_1 = arith.constant 0 : i32
    return %c0_i32, %c0_i32_0 : i32, i32
  }
  func.func @transform_9(%arg0: i32, %arg1: i32, %arg2: memref<7xi32, #tpu.memory_space<smem>>) -> (i32, i32) {
    %c0_i32 = arith.constant 0 : i32
    %c0_i32_0 = arith.constant 0 : i32
    %c0_i32_1 = arith.constant 0 : i32
    return %c0_i32, %c0_i32_0 : i32, i32
  }
  func.func @transform_10(%arg0: i32, %arg1: i32, %arg2: memref<7xi32, #tpu.memory_space<smem>>) -> (i32, i32) {
    %c0_i32 = arith.constant 0 : i32
    %c0_i32_0 = arith.constant 0 : i32
    %c0_i32_1 = arith.constant 0 : i32
    return %c0_i32, %c0_i32_0 : i32, i32
  }
  func.func @transform_11(%arg0: i32, %arg1: i32, %arg2: memref<7xi32, #tpu.memory_space<smem>>) -> (i32, i32) {
    %c0_i32 = arith.constant 0 : i32
    %c0_i32_0 = arith.constant 0 : i32
    %c0_i32_1 = arith.constant 0 : i32
    return %c0_i32, %c0_i32_0 : i32, i32
  }
  func.func @transform_12(%arg0: i32, %arg1: i32, %arg2: memref<7xi32, #tpu.memory_space<smem>>) -> (i32, i32, i32) {
    %c0_i32 = arith.constant 0 : i32
    %c0_i32_0 = arith.constant 0 : i32
    return %arg1, %arg0, %c0_i32 : i32, i32, i32
  }
  func.func @transform_13(%arg0: i32, %arg1: i32, %arg2: memref<7xi32, #tpu.memory_space<smem>>) -> (i32, i32, i32) {
    %c0_i32 = arith.constant 0 : i32
    %c0_i32_0 = arith.constant 0 : i32
    return %arg1, %arg0, %c0_i32 : i32, i32, i32
  }
}

</mosaic_0001>

<llo_original>
// kernel: tpu_custom_call.1
$region0: #{tpu_custom_call.1}
  #allocation0 [shape = 'u32[]', space=smem, size = 0x4, offset = 0x4, fixed_abs, tag = 'smem constant byte address 0x4 - core index']
  #allocation1 [shape = 'u32[72,128]{1,0:T(1,128)}', space=vmem, size = 0x9000, scoped, tag = 'internal scratch']
  #allocation2 [shape = 'f32[4,32]{1,0:T(4,128)}', space=vmem, size = 0x800, scoped, tag = 'scratch operand']
  #allocation3 [shape = 'f32[4,32]{1,0:T(4,128)}', space=vmem, size = 0x800, scoped, tag = 'scratch operand']
  #allocation4 [shape = 's32[1]{0}', space=sflag, size = 0x4, scoped, tag = 'scoped memory for tpu_custom_call.1']
  #allocation5 [shape = 'u8[512]{0}', space=smem, size = 0x200, scoped, tag = 'prefetched SMEM operand 0']
  %s0 = inlined_call_operand.vmem [shape: s32[7], index: 0, kind: input, shape index: {}]
  %s1 = inlined_call_operand.vmem [shape: bf16[4,128,32], index: 1, kind: input, shape index: {}]
  %s2 = inlined_call_operand.vmem [shape: bf16[4,128,32], index: 2, kind: input, shape index: {}]
  %s3 = inlined_call_operand.vmem [shape: bf16[7,4,16], index: 3, kind: input, shape index: {}]
  %s4 = inlined_call_operand.vmem [shape: f32[1,32], index: 4, kind: input, shape index: {}]
  %s5 = inlined_call_operand.vmem [shape: bf16[32,192], index: 5, kind: input, shape index: {}]
  %s6 = inlined_call_operand.vmem [shape: f32[1,192], index: 6, kind: input, shape index: {}]
  %s7 = inlined_call_operand.vmem [shape: bf16[16,128], index: 7, kind: input, shape index: {}]
  %s8 = inlined_call_operand.vmem [shape: bf16[32,128], index: 8, kind: input, shape index: {}]
  %s9 = inlined_call_operand.vmem [shape: bf16[32,32], index: 9, kind: input, shape index: {}]
  %s10 = inlined_call_operand.vmem [shape: f32[1,32], index: 10, kind: input, shape index: {}]
  %s11 = inlined_call_operand.vmem [shape: bf16[32,64], index: 11, kind: input, shape index: {}]
  %s12 = inlined_call_operand.vmem [shape: f32[1,64], index: 12, kind: input, shape index: {}]
  %s13 = inlined_call_operand.hbm [shape: f32[7,4,32], index: 13, kind: output, shape index: {0}]
  %s14 = inlined_call_operand.hbm [shape: f32[7,4,128], index: 14, kind: output, shape index: {1}]
  %15 = xla_tuple %s13, %s14
  %s16 = sld [smem:[#allocation0]]
  $region93: #{tpu_custom_call.1} parent=0
    _
  %s18 = ssub.s32 1, %s16
  %s19 = scalar_select 0, %s18, %s16
  %s21 = sshll.u32 %s0, 4
  %s22 = int_to_ptr.vmem [resolvable:$true] %s21
  %24 = dma.vmem_to_smem %s22, 16, [#allocation5], [#allocation4]
  %26 = dma.done [#allocation4], 16
  %27 = sfence
  $region1: #{tpu_custom_call.1} parent=0
    #allocation6 [shape = 'u8[4096]{0}', space=vmem, size = 0x1000, scoped, tag = 'output window, operand 0']
    #allocation7 [shape = 's32[2]{0}', space=sflag, size = 0x8, scoped, tag = 'scoped memory for tpu_custom_call.1']
    #allocation8 [shape = 'u8[4096]{0}', space=vmem, size = 0x1000, scoped, tag = 'output window, operand 1']
    #allocation9 [shape = 's32[2]{0}', space=sflag, size = 0x8, scoped, tag = 'scoped memory for tpu_custom_call.1']
    %28 = vsyncpa [#allocation7], 0
    %s29 = scalar_lea.sflag [#allocation7], 1
    %30 = vsyncpa %s29, 0
    %31 = vsyncpa [#allocation9], 0
    %s32 = scalar_lea.sflag [#allocation9], 1
    %33 = vsyncpa %s32, 0
    loop: start=0, step=1, limit=9
    $region2: #{tpu_custom_call.1} parent=1 // loop_pre_header
      _
    $region3: #{tpu_custom_call.1} parent=1 // loop_header
      %s35 = sphi 0, %s39
      %p36 = scmp.ge.s32.totalorder %s35, 9
      %s42 = sphi 0, %s54
      %s43 = sphi 0, %s50
      %s44 = sphi 0, %s42
      %s45 = sphi 0, %s43
      %s46 = sphi 0, %s44
      %s47 = sphi 0, %s45
      %s57 = sphi 0, %s59
      %s60 = sphi 0, %s57
      %s61 = sphi 0, %s60
      %s77 = sphi 0, %s61
      %s83 = sphi 0, %s85
      %s86 = sphi 0, %s83
      %s87 = sphi 0, %s86
      %s103 = sphi 0, %s87
      %s111 = sphi 0, %s113
      %s114 = sphi 0, %s111
      %s115 = sphi 0, %s114
      %s131 = sphi 0, %s115
      %s135 = sphi 0, %s135
      %s137 = sphi 0, %s135
      %s138 = sphi 0, %s137
      %s152 = sphi 0, %s138
      %s156 = sphi 0, %s156
      %s158 = sphi 0, %s156
      %s159 = sphi 0, %s158
      %s173 = sphi 0, %s159
      %s177 = sphi 0, %s177
      %s179 = sphi 0, %s177
      %s180 = sphi 0, %s179
      %s194 = sphi 0, %s180
      %s198 = sphi 0, %s198
      %s200 = sphi 0, %s198
      %s201 = sphi 0, %s200
      %s215 = sphi 0, %s201
      %s219 = sphi 0, %s219
      %s221 = sphi 0, %s219
      %s222 = sphi 0, %s221
      %s236 = sphi 0, %s222
      %s240 = sphi 0, %s240
      %s242 = sphi 0, %s240
      %s243 = sphi 0, %s242
      %s257 = sphi 0, %s243
      %s261 = sphi 0, %s261
      %s263 = sphi 0, %s261
      %s264 = sphi 0, %s263
      %s278 = sphi 0, %s264
      %s282 = sphi 0, %s282
      %s284 = sphi 0, %s282
      %s285 = sphi 0, %s284
      %s299 = sphi 0, %s285
      %s303 = sphi 0, %s303
      %s305 = sphi 0, %s303
      %s306 = sphi 0, %s305
      %s320 = sphi 0, %s306
      %s328 = sphi 0, %s330
      %s331 = sphi 0, %s328
      %s332 = sphi 0, %s331
      %s348 = sphi 0, %s332
      %s356 = sphi 0, %s358
      %s359 = sphi 0, %s356
      %s360 = sphi 0, %s359
      %s376 = sphi 0, %s360
    $region4: #{tpu_custom_call.1} parent=1 // loop_header_branch
      %38 = sbr.rel (%p36) target = $region8
    $region5: #{tpu_custom_call.1} parent=1 // loop_body
      %s40 = ssub.s32 %s35, 1
      %s41 = ssub.s32 %s35, 2
      %s48 = sadd.s32 1, %s43
      %p49 = scmp.ge.s32.totalorder %s48, 7
      %s50 = scalar_select %p49, 0, %s48
      %s51 = sadd.s32 1, %s42
      %s52 = scalar_select %p49, %s51, %s42
      %p53 = scmp.ge.s32.totalorder %s52, 1
      %s54 = scalar_select %p53, 0, %s52
      %s55 = ssub.s32 %s42, %s54
      %p56 = scmp.eq.s32.totalorder %s55, 0
      %s58 = sadd.s32 %s57, 1
      %s59 = scalar_select %p56, %s57, %s58
      %p62 = pneg %p56
      %p63 = scmp.eq.s32.totalorder %s35, 6
      %p64 = por %p62, %p63
      %p65 = scmp.ne.s32.totalorder %s57, %s60
      %p66 = scmp.eq.s32.totalorder %s35, 0
      %p67 = por %p65, %p66
      %p68 = scmp.ne.s32.totalorder %s57, %s60
      %p69 = scmp.eq.s32.totalorder %s40, 6
      %p70 = por %p68, %p69
      %p71 = scmp.ne.s32.totalorder %s60, %s61
      %p72 = scmp.eq.s32.totalorder %s40, 0
      %p73 = por %p71, %p72
      %p74 = scmp.ne.s32.totalorder %s60, %s61
      %p75 = scmp.eq.s32.totalorder %s41, 6
      %p76 = por %p74, %p75
      %p78 = scmp.ne.s32.totalorder %s61, %s77
      %p79 = scmp.eq.s32.totalorder %s41, 0
      %p80 = por %p78, %p79
      %s81 = ssub.s32 %s42, %s54
      %p82 = scmp.eq.s32.totalorder %s81, 0
      %s84 = sadd.s32 %s83, 1
      %s85 = scalar_select %p82, %s83, %s84
      %p88 = pneg %p82
      %p89 = scmp.eq.s32.totalorder %s35, 6
      %p90 = por %p88, %p89
      %p91 = scmp.ne.s32.totalorder %s83, %s86
      %p92 = scmp.eq.s32.totalorder %s35, 0
      %p93 = por %p91, %p92
      %p94 = scmp.ne.s32.totalorder %s83, %s86
      %p95 = scmp.eq.s32.totalorder %s40, 6
      %p96 = por %p94, %p95
      %p97 = scmp.ne.s32.totalorder %s86, %s87
      %p98 = scmp.eq.s32.totalorder %s40, 0
      %p99 = por %p97, %p98
      %p100 = scmp.ne.s32.totalorder %s86, %s87
      %p101 = scmp.eq.s32.totalorder %s41, 6
      %p102 = por %p100, %p101
      %p104 = scmp.ne.s32.totalorder %s87, %s103
      %p105 = scmp.eq.s32.totalorder %s41, 0
      %p106 = por %p104, %p105
      %s107 = ssub.s32 %s43, %s50
      %s108 = ssub.s32 %s42, %s54
      %s109 = sor.u32 %s107, %s108
      %p110 = scmp.eq.s32.totalorder %s109, 0
      %s112 = sadd.s32 %s111, 1
      %s113 = scalar_select %p110, %s111, %s112
      %p116 = pneg %p110
      %p117 = scmp.eq.s32.totalorder %s35, 6
      %p118 = por %p116, %p117
      %p119 = scmp.ne.s32.totalorder %s111, %s114
      %p120 = scmp.eq.s32.totalorder %s35, 0
      %p121 = por %p119, %p120
      %p122 = scmp.ne.s32.totalorder %s111, %s114
      %p123 = scmp.eq.s32.totalorder %s40, 6
      %p124 = por %p122, %p123
      %p125 = scmp.ne.s32.totalorder %s114, %s115
      %p126 = scmp.eq.s32.totalorder %s40, 0
      %p127 = por %p125, %p126
      %p128 = scmp.ne.s32.totalorder %s114, %s115
      %p129 = scmp.eq.s32.totalorder %s41, 6
      %p130 = por %p128, %p129
      %p132 = scmp.ne.s32.totalorder %s115, %s131
      %p133 = scmp.eq.s32.totalorder %s41, 0
      %p134 = por %p132, %p133
      %s136 = sadd.s32 %s135, 1
      %p139 = scmp.eq.s32.totalorder %s35, 6
      %p140 = scmp.ne.s32.totalorder %s135, %s137
      %p141 = scmp.eq.s32.totalorder %s35, 0
      %p142 = por %p140, %p141
      %p143 = scmp.ne.s32.totalorder %s135, %s137
      %p144 = scmp.eq.s32.totalorder %s40, 6
      %p145 = por %p143, %p144
      %p146 = scmp.ne.s32.totalorder %s137, %s138
      %p147 = scmp.eq.s32.totalorder %s40, 0
      %p148 = por %p146, %p147
      %p149 = scmp.ne.s32.totalorder %s137, %s138
      %p150 = scmp.eq.s32.totalorder %s41, 6
      %p151 = por %p149, %p150
      %p153 = scmp.ne.s32.totalorder %s138, %s152
      %p154 = scmp.eq.s32.totalorder %s41, 0
      %p155 = por %p153, %p154
      %s157 = sadd.s32 %s156, 1
      %p160 = scmp.eq.s32.totalorder %s35, 6
      %p161 = scmp.ne.s32.totalorder %s156, %s158
      %p162 = scmp.eq.s32.totalorder %s35, 0
      %p163 = por %p161, %p162
      %p164 = scmp.ne.s32.totalorder %s156, %s158
      %p165 = scmp.eq.s32.totalorder %s40, 6
      %p166 = por %p164, %p165
      %p167 = scmp.ne.s32.totalorder %s158, %s159
      %p168 = scmp.eq.s32.totalorder %s40, 0
      %p169 = por %p167, %p168
      %p170 = scmp.ne.s32.totalorder %s158, %s159
      %p171 = scmp.eq.s32.totalorder %s41, 6
      %p172 = por %p170, %p171
      %p174 = scmp.ne.s32.totalorder %s159, %s173
      %p175 = scmp.eq.s32.totalorder %s41, 0
      %p176 = por %p174, %p175
      %s178 = sadd.s32 %s177, 1
      %p181 = scmp.eq.s32.totalorder %s35, 6
      %p182 = scmp.ne.s32.totalorder %s177, %s179
      %p183 = scmp.eq.s32.totalorder %s35, 0
      %p184 = por %p182, %p183
      %p185 = scmp.ne.s32.totalorder %s177, %s179
      %p186 = scmp.eq.s32.totalorder %s40, 6
      %p187 = por %p185, %p186
      %p188 = scmp.ne.s32.totalorder %s179, %s180
      %p189 = scmp.eq.s32.totalorder %s40, 0
      %p190 = por %p188, %p189
      %p191 = scmp.ne.s32.totalorder %s179, %s180
      %p192 = scmp.eq.s32.totalorder %s41, 6
      %p193 = por %p191, %p192
      %p195 = scmp.ne.s32.totalorder %s180, %s194
      %p196 = scmp.eq.s32.totalorder %s41, 0
      %p197 = por %p195, %p196
      %s199 = sadd.s32 %s198, 1
      %p202 = scmp.eq.s32.totalorder %s35, 6
      %p203 = scmp.ne.s32.totalorder %s198, %s200
      %p204 = scmp.eq.s32.totalorder %s35, 0
      %p205 = por %p203, %p204
      %p206 = scmp.ne.s32.totalorder %s198, %s200
      %p207 = scmp.eq.s32.totalorder %s40, 6
      %p208 = por %p206, %p207
      %p209 = scmp.ne.s32.totalorder %s200, %s201
      %p210 = scmp.eq.s32.totalorder %s40, 0
      %p211 = por %p209, %p210
      %p212 = scmp.ne.s32.totalorder %s200, %s201
      %p213 = scmp.eq.s32.totalorder %s41, 6
      %p214 = por %p212, %p213
      %p216 = scmp.ne.s32.totalorder %s201, %s215
      %p217 = scmp.eq.s32.totalorder %s41, 0
      %p218 = por %p216, %p217
      %s220 = sadd.s32 %s219, 1
      %p223 = scmp.eq.s32.totalorder %s35, 6
      %p224 = scmp.ne.s32.totalorder %s219, %s221
      %p225 = scmp.eq.s32.totalorder %s35, 0
      %p226 = por %p224, %p225
      %p227 = scmp.ne.s32.totalorder %s219, %s221
      %p228 = scmp.eq.s32.totalorder %s40, 6
      %p229 = por %p227, %p228
      %p230 = scmp.ne.s32.totalorder %s221, %s222
      %p231 = scmp.eq.s32.totalorder %s40, 0
      %p232 = por %p230, %p231
      %p233 = scmp.ne.s32.totalorder %s221, %s222
      %p234 = scmp.eq.s32.totalorder %s41, 6
      %p235 = por %p233, %p234
      %p237 = scmp.ne.s32.totalorder %s222, %s236
      %p238 = scmp.eq.s32.totalorder %s41, 0
      %p239 = por %p237, %p238
      %s241 = sadd.s32 %s240, 1
      %p244 = scmp.eq.s32.totalorder %s35, 6
      %p245 = scmp.ne.s32.totalorder %s240, %s242
      %p246 = scmp.eq.s32.totalorder %s35, 0
      %p247 = por %p245, %p246
      %p248 = scmp.ne.s32.totalorder %s240, %s242
      %p249 = scmp.eq.s32.totalorder %s40, 6
      %p250 = por %p248, %p249
      %p251 = scmp.ne.s32.totalorder %s242, %s243
      %p252 = scmp.eq.s32.totalorder %s40, 0
      %p253 = por %p251, %p252
      %p254 = scmp.ne.s32.totalorder %s242, %s243
      %p255 = scmp.eq.s32.totalorder %s41, 6
      %p256 = por %p254, %p255
      %p258 = scmp.ne.s32.totalorder %s243, %s257
      %p259 = scmp.eq.s32.totalorder %s41, 0
      %p260 = por %p258, %p259
      %s262 = sadd.s32 %s261, 1
      %p265 = scmp.eq.s32.totalorder %s35, 6
      %p266 = scmp.ne.s32.totalorder %s261, %s263
      %p267 = scmp.eq.s32.totalorder %s35, 0
      %p268 = por %p266, %p267
      %p269 = scmp.ne.s32.totalorder %s261, %s263
      %p270 = scmp.eq.s32.totalorder %s40, 6
      %p271 = por %p269, %p270
      %p272 = scmp.ne.s32.totalorder %s263, %s264
      %p273 = scmp.eq.s32.totalorder %s40, 0
      %p274 = por %p272, %p273
      %p275 = scmp.ne.s32.totalorder %s263, %s264
      %p276 = scmp.eq.s32.totalorder %s41, 6
      %p277 = por %p275, %p276
      %p279 = scmp.ne.s32.totalorder %s264, %s278
      %p280 = scmp.eq.s32.totalorder %s41, 0
      %p281 = por %p279, %p280
      %s283 = sadd.s32 %s282, 1
      %p286 = scmp.eq.s32.totalorder %s35, 6
      %p287 = scmp.ne.s32.totalorder %s282, %s284
      %p288 = scmp.eq.s32.totalorder %s35, 0
      %p289 = por %p287, %p288
      %p290 = scmp.ne.s32.totalorder %s282, %s284
      %p291 = scmp.eq.s32.totalorder %s40, 6
      %p292 = por %p290, %p291
      %p293 = scmp.ne.s32.totalorder %s284, %s285
      %p294 = scmp.eq.s32.totalorder %s40, 0
      %p295 = por %p293, %p294
      %p296 = scmp.ne.s32.totalorder %s284, %s285
      %p297 = scmp.eq.s32.totalorder %s41, 6
      %p298 = por %p296, %p297
      %p300 = scmp.ne.s32.totalorder %s285, %s299
      %p301 = scmp.eq.s32.totalorder %s41, 0
      %p302 = por %p300, %p301
      %s304 = sadd.s32 %s303, 1
      %p307 = scmp.eq.s32.totalorder %s35, 6
      %p308 = scmp.ne.s32.totalorder %s303, %s305
      %p309 = scmp.eq.s32.totalorder %s35, 0
      %p310 = por %p308, %p309
      %p311 = scmp.ne.s32.totalorder %s303, %s305
      %p312 = scmp.eq.s32.totalorder %s40, 6
      %p313 = por %p311, %p312
      %p314 = scmp.ne.s32.totalorder %s305, %s306
      %p315 = scmp.eq.s32.totalorder %s40, 0
      %p316 = por %p314, %p315
      %p317 = scmp.ne.s32.totalorder %s305, %s306
      %p318 = scmp.eq.s32.totalorder %s41, 6
      %p319 = por %p317, %p318
      %p321 = scmp.ne.s32.totalorder %s306, %s320
      %p322 = scmp.eq.s32.totalorder %s41, 0
      %p323 = por %p321, %p322
      %s324 = ssub.s32 %s43, %s50
      %s325 = ssub.s32 %s42, %s54
      %s326 = sor.u32 %s324, %s325
      %p327 = scmp.eq.s32.totalorder %s326, 0
      %s329 = sadd.s32 %s328, 1
      %s330 = scalar_select %p327, %s328, %s329
      %p333 = pneg %p327
      %p334 = scmp.eq.s32.totalorder %s35, 6
      %p335 = por %p333, %p334
      %p336 = scmp.ne.s32.totalorder %s328, %s331
      %p337 = scmp.eq.s32.totalorder %s35, 0
      %p338 = por %p336, %p337
      %p339 = scmp.ne.s32.totalorder %s328, %s331
      %p340 = scmp.eq.s32.totalorder %s40, 6
      %p341 = por %p339, %p340
      %p342 = scmp.ne.s32.totalorder %s331, %s332
      %p343 = scmp.eq.s32.totalorder %s40, 0
      %p344 = por %p342, %p343
      %p345 = scmp.ne.s32.totalorder %s331, %s332
      %p346 = scmp.eq.s32.totalorder %s41, 6
      %p347 = por %p345, %p346
      %p349 = scmp.ne.s32.totalorder %s332, %s348
      %p350 = scmp.eq.s32.totalorder %s41, 0
      %p351 = por %p349, %p350
      %s352 = ssub.s32 %s43, %s50
      %s353 = ssub.s32 %s42, %s54
      %s354 = sor.u32 %s352, %s353
      %p355 = scmp.eq.s32.totalorder %s354, 0
      %s357 = sadd.s32 %s356, 1
      %s358 = scalar_select %p355, %s356, %s357
      %p361 = pneg %p355
      %p362 = scmp.eq.s32.totalorder %s35, 6
      %p363 = por %p361, %p362
      %p364 = scmp.ne.s32.totalorder %s356, %s359
      %p365 = scmp.eq.s32.totalorder %s35, 0
      %p366 = por %p364, %p365
      %p367 = scmp.ne.s32.totalorder %s356, %s359
      %p368 = scmp.eq.s32.totalorder %s40, 6
      %p369 = por %p367, %p368
      %p370 = scmp.ne.s32.totalorder %s359, %s360
      %p371 = scmp.eq.s32.totalorder %s40, 0
      %p372 = por %p370, %p371
      %p373 = scmp.ne.s32.totalorder %s359, %s360
      %p374 = scmp.eq.s32.totalorder %s41, 6
      %p375 = por %p373, %p374
      %p377 = scmp.ne.s32.totalorder %s360, %s376
      %p378 = scmp.eq.s32.totalorder %s41, 0
      %p379 = por %p377, %p378
      %p380 = scmp.le.s32.totalorder 1, %s35
      %p381 = scmp.lt.s32.totalorder %s35, 8
      %p382 = pnand %p380, %p381
      %p383 = pneg %p382
      // Predicated region
      $region9: #{tpu_custom_call.1} parent=5 // pred_check
        _
      $region10: #{tpu_custom_call.1} parent=5 // pred_check_branch
        %385 = sbr.rel (%p382) target = $region12
      $region11: #{tpu_custom_call.1} parent=5 // pred_region
        %s386 = ssub.s32 %s35, 1
        // Predicated region
        $region13: #{tpu_custom_call.1} parent=11 // pred_check
          %p387 = pneg %p73
        $region14: #{tpu_custom_call.1} parent=11 // pred_check_branch
          %389 = sbr.rel (%p387) target = $region16
        $region15: #{tpu_custom_call.1} parent=11 // pred_region
          %s390 = smul.u32 4, %s44
          %p391 = scmp.lt.s32.totalorder %s390, 3
          %s392 = scalar_select %p391, %s390, 3
          %s393 = smul.addr %s392, 16
          %s394 = smul.addr %s393, 4
          %s395 = scalar_lea.vmem %s1, %s394
          %s396 = smul.u32 4, %s44
        $region16: #{tpu_custom_call.1} parent=11 // pred_fallthru
          _
        // Predicated region
        $region17: #{tpu_custom_call.1} parent=11 // pred_check
          %p397 = pneg %p99
        $region18: #{tpu_custom_call.1} parent=11 // pred_check_branch
          %399 = sbr.rel (%p397) target = $region20
        $region19: #{tpu_custom_call.1} parent=11 // pred_region
          %s400 = smul.u32 4, %s44
          %p401 = scmp.lt.s32.totalorder %s400, 3
          %s402 = scalar_select %p401, %s400, 3
          %s403 = smul.addr %s402, 16
          %s404 = smul.addr %s403, 4
          %s405 = scalar_lea.vmem %s2, %s404
          %s406 = smul.u32 4, %s44
        $region20: #{tpu_custom_call.1} parent=11 // pred_fallthru
          _
        // Predicated region
        $region21: #{tpu_custom_call.1} parent=11 // pred_check
          %p407 = pneg %p148
        $region22: #{tpu_custom_call.1} parent=11 // pred_check_branch
          %409 = sbr.rel (%p407) target = $region24
        $region23: #{tpu_custom_call.1} parent=11 // pred_region
          _
        $region24: #{tpu_custom_call.1} parent=11 // pred_fallthru
          _
        // Predicated region
        $region25: #{tpu_custom_call.1} parent=11 // pred_check
          %p410 = pneg %p169
        $region26: #{tpu_custom_call.1} parent=11 // pred_check_branch
          %412 = sbr.rel (%p410) target = $region28
        $region27: #{tpu_custom_call.1} parent=11 // pred_region
          _
        $region28: #{tpu_custom_call.1} parent=11 // pred_fallthru
          _
        // Predicated region
        $region29: #{tpu_custom_call.1} parent=11 // pred_check
          %p413 = pneg %p190
        $region30: #{tpu_custom_call.1} parent=11 // pred_check_branch
          %415 = sbr.rel (%p413) target = $region32
        $region31: #{tpu_custom_call.1} parent=11 // pred_region
          _
        $region32: #{tpu_custom_call.1} parent=11 // pred_fallthru
          _
        // Predicated region
        $region33: #{tpu_custom_call.1} parent=11 // pred_check
          %p416 = pneg %p211
        $region34: #{tpu_custom_call.1} parent=11 // pred_check_branch
          %418 = sbr.rel (%p416) target = $region36
        $region35: #{tpu_custom_call.1} parent=11 // pred_region
          _
        $region36: #{tpu_custom_call.1} parent=11 // pred_fallthru
          _
        // Predicated region
        $region37: #{tpu_custom_call.1} parent=11 // pred_check
          %p419 = pneg %p232
        $region38: #{tpu_custom_call.1} parent=11 // pred_check_branch
          %421 = sbr.rel (%p419) target = $region40
        $region39: #{tpu_custom_call.1} parent=11 // pred_region
          _
        $region40: #{tpu_custom_call.1} parent=11 // pred_fallthru
          _
        // Predicated region
        $region41: #{tpu_custom_call.1} parent=11 // pred_check
          %p422 = pneg %p253
        $region42: #{tpu_custom_call.1} parent=11 // pred_check_branch
          %424 = sbr.rel (%p422) target = $region44
        $region43: #{tpu_custom_call.1} parent=11 // pred_region
          _
        $region44: #{tpu_custom_call.1} parent=11 // pred_fallthru
          _
        // Predicated region
        $region45: #{tpu_custom_call.1} parent=11 // pred_check
          %p425 = pneg %p274
        $region46: #{tpu_custom_call.1} parent=11 // pred_check_branch
          %427 = sbr.rel (%p425) target = $region48
        $region47: #{tpu_custom_call.1} parent=11 // pred_region
          _
        $region48: #{tpu_custom_call.1} parent=11 // pred_fallthru
          _
        // Predicated region
        $region49: #{tpu_custom_call.1} parent=11 // pred_check
          %p428 = pneg %p295
        $region50: #{tpu_custom_call.1} parent=11 // pred_check_branch
          %430 = sbr.rel (%p428) target = $region52
        $region51: #{tpu_custom_call.1} parent=11 // pred_region
          _
        $region52: #{tpu_custom_call.1} parent=11 // pred_fallthru
          _
        // Predicated region
        $region53: #{tpu_custom_call.1} parent=11 // pred_check
          %p431 = pneg %p316
        $region54: #{tpu_custom_call.1} parent=11 // pred_check_branch
          %433 = sbr.rel (%p431) target = $region56
        $region55: #{tpu_custom_call.1} parent=11 // pred_region
          _
        $region56: #{tpu_custom_call.1} parent=11 // pred_fallthru
          _
      $region12: #{tpu_custom_call.1} parent=5 // pred_fallthru
        _
      %p434 = scmp.lt.s32.totalorder %s35, 7
      // Predicated region
      $region57: #{tpu_custom_call.1} parent=5 // pred_check
        %p435 = pneg %p434
      $region58: #{tpu_custom_call.1} parent=5 // pred_check_branch
        %437 = sbr.rel (%p435) target = $region60
      $region59: #{tpu_custom_call.1} parent=5 // pred_region
        // Predicated region
        $region61: #{tpu_custom_call.1} parent=59 // pred_check
          %p438 = pneg %p121
        $region62: #{tpu_custom_call.1} parent=59 // pred_check_branch
          %440 = sbr.rel (%p438) target = $region64
        $region63: #{tpu_custom_call.1} parent=59 // pred_region
          %p441 = scmp.lt.s32.totalorder %s43, 6
          %s442 = scalar_select %p441, %s43, 6
          %p443 = scmp.lt.s32.totalorder %s42, 0
          %s444 = scalar_select %p443, %s42, 0
          %s445 = sadd.s32 %s444, %s442
          %s446 = smul.addr %s445, 2
          %s447 = scalar_lea.vmem %s3, %s446
        $region64: #{tpu_custom_call.1} parent=59 // pred_fallthru
          _
      $region60: #{tpu_custom_call.1} parent=5 // pred_fallthru
        _
      %p448 = scmp.le.s32.totalorder 1, %s35
      %p449 = scmp.lt.s32.totalorder %s35, 8
      %p450 = pnand %p448, %p449
      %p451 = pneg %p450
      // Predicated region
      $region65: #{tpu_custom_call.1} parent=5 // pred_check
        _
      $region66: #{tpu_custom_call.1} parent=5 // pred_check_branch
        %453 = sbr.rel (%p450) target = $region68
      $region67: #{tpu_custom_call.1} parent=5 // pred_region
        %s454 = ssub.s32 %s35, 1
        %s455 = smul.u32 4, %s44
        %p456 = scmp.lt.s32.totalorder %s455, 3
        %s457 = scalar_select %p456, %s455, 3
        %s458 = smul.addr %s457, 16
        %s459 = smul.addr %s458, 4
        %s460 = scalar_lea.vmem %s1, %s459
        %p461 = pneg %p73
        %p462 = pneg %p70
        %s463 = smul.u32 4, %s44
        %p464 = scmp.lt.s32.totalorder %s463, 3
        %s465 = scalar_select %p464, %s463, 3
        %s466 = smul.addr %s465, 16
        %s467 = smul.addr %s466, 4
        %s468 = scalar_lea.vmem %s2, %s467
        %p469 = pneg %p99
        %p470 = pneg %p96
        %p471 = scmp.lt.s32.totalorder %s45, 6
        %s472 = scalar_select %p471, %s45, 6
        %p473 = scmp.lt.s32.totalorder %s44, 0
        %s474 = scalar_select %p473, %s44, 0
        %s475 = sadd.s32 %s474, %s472
        %s476 = smul.addr %s475, 2
        %s477 = scalar_lea.vmem %s3, %s476
        %p478 = pneg %p127
        %p479 = pneg %p124
        %p480 = pneg %p148
        %p481 = pneg %p145
        %p482 = pneg %p169
        %p483 = pneg %p166
        %p484 = pneg %p190
        %p485 = pneg %p187
        %p486 = pneg %p211
        %p487 = pneg %p208
        %p488 = pneg %p232
        %p489 = pneg %p229
        %p490 = pneg %p253
        %p491 = pneg %p250
        %p492 = pneg %p274
        %p493 = pneg %p271
        %p494 = pneg %p295
        %p495 = pneg %p292
        %p496 = pneg %p316
        %p497 = pneg %p313
        %p498 = pneg %p344
        %p499 = pneg %p341
        %s500 = sand.u32 %s331, 1
        %s501 = scalar_lea.sflag [#allocation7], %s500
        %s502 = sand.u32 %s331, 1
        %s503 = smul.addr %s502, 4
        %s504 = scalar_lea.vmem [#allocation6], %s503
        %p505 = pneg %p372
        %p506 = pneg %p369
        %s507 = sand.u32 %s359, 1
        %s508 = scalar_lea.sflag [#allocation9], %s507
        %s509 = sand.u32 %s359, 1
        %s510 = smul.addr %s509, 4
        %s511 = scalar_lea.vmem [#allocation8], %s510
        %s512 = smul.u32 4, %s44
        %p513 = scmp.lt.s32.totalorder %s512, 3
        %s514 = scalar_select %p513, %s512, 3
        %s515 = smul.addr %s514, 16
        %s516 = smul.addr %s515, 4
        %s517 = scalar_lea.vmem %s1, %s516
        %s518 = smul.u32 4, %s44
        %s519 = smul.u32 4, %s44
        %p520 = scmp.lt.s32.totalorder %s519, 3
        %s521 = scalar_select %p520, %s519, 3
        %s522 = smul.addr %s521, 16
        %s523 = smul.addr %s522, 4
        %s524 = scalar_lea.vmem %s2, %s523
        %s525 = smul.u32 4, %s44
        %p526 = scmp.lt.s32.totalorder %s45, 6
        %s527 = scalar_select %p526, %s45, 6
        %p528 = scmp.lt.s32.totalorder %s44, 0
        %s529 = scalar_select %p528, %s44, 0
        %s530 = sadd.s32 %s529, %s527
        %s531 = smul.addr %s530, 2
        %s532 = scalar_lea.vmem %s3, %s531
        %p534 = scmp.eq.s32.totalorder %s45, 0
        // Predicated region
        $region69: #{tpu_custom_call.1} parent=67 // pred_check
          %p535 = pneg %p534
        $region70: #{tpu_custom_call.1} parent=67 // pred_check_branch
          %537 = sbr.rel (%p535) target = $region72
        $region71: #{tpu_custom_call.1} parent=67 // pred_region
          %v538 = vld [vmem:[%s517] sm:$0xf]
          %v539 = vld [vmem:[%s517 + $0x4] sm:$0xf]
          %v540 = vld [vmem:[%s517 + $0x8] sm:$0xf]
          %v541 = vld [vmem:[%s517 + $0xc] sm:$0xf]
          %v542 = vld [vmem:[%s517 + $0x10] sm:$0xf]
          %v543 = vld [vmem:[%s517 + $0x14] sm:$0xf]
          %v544 = vld [vmem:[%s517 + $0x18] sm:$0xf]
          %v545 = vld [vmem:[%s517 + $0x1c] sm:$0xf]
          %v546 = vld [vmem:[%s517 + $0x20] sm:$0xf]
          %v547 = vld [vmem:[%s517 + $0x24] sm:$0xf]
          %v548 = vld [vmem:[%s517 + $0x28] sm:$0xf]
          %v549 = vld [vmem:[%s517 + $0x2c] sm:$0xf]
          %v550 = vld [vmem:[%s517 + $0x30] sm:$0xf]
          %v551 = vld [vmem:[%s517 + $0x34] sm:$0xf]
          %v552 = vld [vmem:[%s517 + $0x38] sm:$0xf]
          %v553 = vld [vmem:[%s517 + $0x3c] sm:$0xf]
          %v554 = vld [vmem:[%s517 + $0x40] sm:$0xf]
          %v555 = vld [vmem:[%s517 + $0x44] sm:$0xf]
          %v556 = vld [vmem:[%s517 + $0x48] sm:$0xf]
          %v557 = vld [vmem:[%s517 + $0x4c] sm:$0xf]
          %v558 = vld [vmem:[%s517 + $0x50] sm:$0xf]
          %v559 = vld [vmem:[%s517 + $0x54] sm:$0xf]
          %v560 = vld [vmem:[%s517 + $0x58] sm:$0xf]
          %v561 = vld [vmem:[%s517 + $0x5c] sm:$0xf]
          %v562 = vld [vmem:[%s517 + $0x60] sm:$0xf]
          %v563 = vld [vmem:[%s517 + $0x64] sm:$0xf]
          %v564 = vld [vmem:[%s517 + $0x68] sm:$0xf]
          %v565 = vld [vmem:[%s517 + $0x6c] sm:$0xf]
          %v566 = vld [vmem:[%s517 + $0x70] sm:$0xf]
          %v567 = vld [vmem:[%s517 + $0x74] sm:$0xf]
          %v568 = vld [vmem:[%s517 + $0x78] sm:$0xf]
          %v569 = vld [vmem:[%s517 + $0x7c] sm:$0xf]
          %v570 = vld [vmem:[%s517 + $0x80] sm:$0xf]
          %v571 = vld [vmem:[%s517 + $0x84] sm:$0xf]
          %v572 = vld [vmem:[%s517 + $0x88] sm:$0xf]
          %v573 = vld [vmem:[%s517 + $0x8c] sm:$0xf]
          %v574 = vld [vmem:[%s517 + $0x90] sm:$0xf]
          %v575 = vld [vmem:[%s517 + $0x94] sm:$0xf]
          %v576 = vld [vmem:[%s517 + $0x98] sm:$0xf]
          %v577 = vld [vmem:[%s517 + $0x9c] sm:$0xf]
          %v578 = vld [vmem:[%s517 + $0xa0] sm:$0xf]
          %v579 = vld [vmem:[%s517 + $0xa4] sm:$0xf]
          %v580 = vld [vmem:[%s517 + $0xa8] sm:$0xf]
          %v581 = vld [vmem:[%s517 + $0xac] sm:$0xf]
          %v582 = vld [vmem:[%s517 + $0xb0] sm:$0xf]
          %v583 = vld [vmem:[%s517 + $0xb4] sm:$0xf]
          %v584 = vld [vmem:[%s517 + $0xb8] sm:$0xf]
          %v585 = vld [vmem:[%s517 + $0xbc] sm:$0xf]
          %v586 = vld [vmem:[%s517 + $0xc0] sm:$0xf]
          %v587 = vld [vmem:[%s517 + $0xc4] sm:$0xf]
          %v588 = vld [vmem:[%s517 + $0xc8] sm:$0xf]
          %v589 = vld [vmem:[%s517 + $0xcc] sm:$0xf]
          %v590 = vld [vmem:[%s517 + $0xd0] sm:$0xf]
          %v591 = vld [vmem:[%s517 + $0xd4] sm:$0xf]
          %v592 = vld [vmem:[%s517 + $0xd8] sm:$0xf]
          %v593 = vld [vmem:[%s517 + $0xdc] sm:$0xf]
          %v594 = vld [vmem:[%s517 + $0xe0] sm:$0xf]
          %v595 = vld [vmem:[%s517 + $0xe4] sm:$0xf]
          %v596 = vld [vmem:[%s517 + $0xe8] sm:$0xf]
          %v597 = vld [vmem:[%s517 + $0xec] sm:$0xf]
          %v598 = vld [vmem:[%s517 + $0xf0] sm:$0xf]
          %v599 = vld [vmem:[%s517 + $0xf4] sm:$0xf]
          %v600 = vld [vmem:[%s517 + $0xf8] sm:$0xf]
          %v601 = vld [vmem:[%s517 + $0xfc] sm:$0xf]
          %v602 = vunpack.c.l.bf16 %v538
          %v603 = vunpack.c.l.bf16 %v539
          %v604 = vunpack.c.l.bf16 %v540
          %v605 = vunpack.c.l.bf16 %v541
          %v606 = vunpack.c.l.bf16 %v542
          %v607 = vunpack.c.l.bf16 %v543
          %v608 = vunpack.c.l.bf16 %v544
          %v609 = vunpack.c.l.bf16 %v545
          %v610 = vunpack.c.l.bf16 %v546
          %v611 = vunpack.c.l.bf16 %v547
          %v612 = vunpack.c.l.bf16 %v548
          %v613 = vunpack.c.l.bf16 %v549
          %v614 = vunpack.c.l.bf16 %v550
          %v615 = vunpack.c.l.bf16 %v551
          %v616 = vunpack.c.l.bf16 %v552
          %v617 = vunpack.c.l.bf16 %v553
          %v618 = vunpack.c.l.bf16 %v554
          %v619 = vunpack.c.l.bf16 %v555
          %v620 = vunpack.c.l.bf16 %v556
          %v621 = vunpack.c.l.bf16 %v557
          %v622 = vunpack.c.l.bf16 %v558
          %v623 = vunpack.c.l.bf16 %v559
          %v624 = vunpack.c.l.bf16 %v560
          %v625 = vunpack.c.l.bf16 %v561
          %v626 = vunpack.c.l.bf16 %v562
          %v627 = vunpack.c.l.bf16 %v563
          %v628 = vunpack.c.l.bf16 %v564
          %v629 = vunpack.c.l.bf16 %v565
          %v630 = vunpack.c.l.bf16 %v566
          %v631 = vunpack.c.l.bf16 %v567
          %v632 = vunpack.c.l.bf16 %v568
          %v633 = vunpack.c.l.bf16 %v569
          %v634 = vunpack.c.l.bf16 %v570
          %v635 = vunpack.c.l.bf16 %v571
          %v636 = vunpack.c.l.bf16 %v572
          %v637 = vunpack.c.l.bf16 %v573
          %v638 = vunpack.c.l.bf16 %v574
          %v639 = vunpack.c.l.bf16 %v575
          %v640 = vunpack.c.l.bf16 %v576
          %v641 = vunpack.c.l.bf16 %v577
          %v642 = vunpack.c.l.bf16 %v578
          %v643 = vunpack.c.l.bf16 %v579
          %v644 = vunpack.c.l.bf16 %v580
          %v645 = vunpack.c.l.bf16 %v581
          %v646 = vunpack.c.l.bf16 %v582
          %v647 = vunpack.c.l.bf16 %v583
          %v648 = vunpack.c.l.bf16 %v584
          %v649 = vunpack.c.l.bf16 %v585
          %v650 = vunpack.c.l.bf16 %v586
          %v651 = vunpack.c.l.bf16 %v587
          %v652 = vunpack.c.l.bf16 %v588
          %v653 = vunpack.c.l.bf16 %v589
          %v654 = vunpack.c.l.bf16 %v590
          %v655 = vunpack.c.l.bf16 %v591
          %v656 = vunpack.c.l.bf16 %v592
          %v657 = vunpack.c.l.bf16 %v593
          %v658 = vunpack.c.l.bf16 %v594
          %v659 = vunpack.c.l.bf16 %v595
          %v660 = vunpack.c.l.bf16 %v596
          %v661 = vunpack.c.l.bf16 %v597
          %v662 = vunpack.c.l.bf16 %v598
          %v663 = vunpack.c.l.bf16 %v599
          %v664 = vunpack.c.l.bf16 %v600
          %v665 = vunpack.c.l.bf16 %v601
          %vm666 = vcmask 261120
          %v667 = vsel %vm666, %v602, 0.0
          %v668 = vsel %vm666, %v603, 0.0
          %v669 = vadd.f32 %v667, %v668
          %v670 = vsel %vm666, %v604, 0.0
          %v671 = vadd.f32 %v669, %v670
          %v672 = vsel %vm666, %v605, 0.0
          %v673 = vadd.f32 %v671, %v672
          %v674 = vsel %vm666, %v606, 0.0
          %v675 = vadd.f32 %v673, %v674
          %v676 = vsel %vm666, %v607, 0.0
          %v677 = vadd.f32 %v675, %v676
          %v678 = vsel %vm666, %v608, 0.0
          %v679 = vadd.f32 %v677, %v678
          %v680 = vsel %vm666, %v609, 0.0
          %v681 = vadd.f32 %v679, %v680
          %v682 = vsel %vm666, %v610, 0.0
          %v683 = vadd.f32 %v681, %v682
          %v684 = vsel %vm666, %v611, 0.0
          %v685 = vadd.f32 %v683, %v684
          %v686 = vsel %vm666, %v612, 0.0
          %v687 = vadd.f32 %v685, %v686
          %v688 = vsel %vm666, %v613, 0.0
          %v689 = vadd.f32 %v687, %v688
          %v690 = vsel %vm666, %v614, 0.0
          %v691 = vadd.f32 %v689, %v690
          %v692 = vsel %vm666, %v615, 0.0
          %v693 = vadd.f32 %v691, %v692
          %v694 = vsel %vm666, %v616, 0.0
          %v695 = vadd.f32 %v693, %v694
          %v696 = vsel %vm666, %v617, 0.0
          %v697 = vadd.f32 %v695, %v696
          %v698 = vrot.slane %v697, 4
          %v699 = vadd.f32 %v697, %v698
          %v700 = vrot.slane %v699, 2
          %v701 = vadd.f32 %v699, %v700
          %v702 = vrot.slane %v701, 1
          %v703 = vadd.f32 %v701, %v702
          %v704 = vsel %vm666, %v618, 0.0
          %v705 = vsel %vm666, %v619, 0.0
          %v706 = vadd.f32 %v704, %v705
          %v707 = vsel %vm666, %v620, 0.0
          %v708 = vadd.f32 %v706, %v707
          %v709 = vsel %vm666, %v621, 0.0
          %v710 = vadd.f32 %v708, %v709
          %v711 = vsel %vm666, %v622, 0.0
          %v712 = vadd.f32 %v710, %v711
          %v713 = vsel %vm666, %v623, 0.0
          %v714 = vadd.f32 %v712, %v713
          %v715 = vsel %vm666, %v624, 0.0
          %v716 = vadd.f32 %v714, %v715
          %v717 = vsel %vm666, %v625, 0.0
          %v718 = vadd.f32 %v716, %v717
          %v719 = vsel %vm666, %v626, 0.0
          %v720 = vadd.f32 %v718, %v719
          %v721 = vsel %vm666, %v627, 0.0
          %v722 = vadd.f32 %v720, %v721
          %v723 = vsel %vm666, %v628, 0.0
          %v724 = vadd.f32 %v722, %v723
          %v725 = vsel %vm666, %v629, 0.0
          %v726 = vadd.f32 %v724, %v725
          %v727 = vsel %vm666, %v630, 0.0
          %v728 = vadd.f32 %v726, %v727
          %v729 = vsel %vm666, %v631, 0.0
          %v730 = vadd.f32 %v728, %v729
          %v731 = vsel %vm666, %v632, 0.0
          %v732 = vadd.f32 %v730, %v731
          %v733 = vsel %vm666, %v633, 0.0
          %v734 = vadd.f32 %v732, %v733
          %v735 = vrot.slane %v734, 4
          %v736 = vadd.f32 %v734, %v735
          %v737 = vrot.slane %v736, 2
          %v738 = vadd.f32 %v736, %v737
          %v739 = vrot.slane %v738, 1
          %v740 = vadd.f32 %v738, %v739
          %v741 = vsel %vm666, %v634, 0.0
          %v742 = vsel %vm666, %v635, 0.0
          %v743 = vadd.f32 %v741, %v742
          %v744 = vsel %vm666, %v636, 0.0
          %v745 = vadd.f32 %v743, %v744
          %v746 = vsel %vm666, %v637, 0.0
          %v747 = vadd.f32 %v745, %v746
          %v748 = vsel %vm666, %v638, 0.0
          %v749 = vadd.f32 %v747, %v748
          %v750 = vsel %vm666, %v639, 0.0
          %v751 = vadd.f32 %v749, %v750
          %v752 = vsel %vm666, %v640, 0.0
          %v753 = vadd.f32 %v751, %v752
          %v754 = vsel %vm666, %v641, 0.0
          %v755 = vadd.f32 %v753, %v754
          %v756 = vsel %vm666, %v642, 0.0
          %v757 = vadd.f32 %v755, %v756
          %v758 = vsel %vm666, %v643, 0.0
          %v759 = vadd.f32 %v757, %v758
          %v760 = vsel %vm666, %v644, 0.0
          %v761 = vadd.f32 %v759, %v760
          %v762 = vsel %vm666, %v645, 0.0
          %v763 = vadd.f32 %v761, %v762
          %v764 = vsel %vm666, %v646, 0.0
          %v765 = vadd.f32 %v763, %v764
          %v766 = vsel %vm666, %v647, 0.0
          %v767 = vadd.f32 %v765, %v766
          %v768 = vsel %vm666, %v648, 0.0
          %v769 = vadd.f32 %v767, %v768
          %v770 = vsel %vm666, %v649, 0.0
          %v771 = vadd.f32 %v769, %v770
          %v772 = vrot.slane %v771, 4
          %v773 = vadd.f32 %v771, %v772
          %v774 = vrot.slane %v773, 2
          %v775 = vadd.f32 %v773, %v774
          %v776 = vrot.slane %v775, 1
          %v777 = vadd.f32 %v775, %v776
          %v778 = vsel %vm666, %v650, 0.0
          %v779 = vsel %vm666, %v651, 0.0
          %v780 = vadd.f32 %v778, %v779
          %v781 = vsel %vm666, %v652, 0.0
          %v782 = vadd.f32 %v780, %v781
          %v783 = vsel %vm666, %v653, 0.0
          %v784 = vadd.f32 %v782, %v783
          %v785 = vsel %vm666, %v654, 0.0
          %v786 = vadd.f32 %v784, %v785
          %v787 = vsel %vm666, %v655, 0.0
          %v788 = vadd.f32 %v786, %v787
          %v789 = vsel %vm666, %v656, 0.0
          %v790 = vadd.f32 %v788, %v789
          %v791 = vsel %vm666, %v657, 0.0
          %v792 = vadd.f32 %v790, %v791
          %v793 = vsel %vm666, %v658, 0.0
          %v794 = vadd.f32 %v792, %v793
          %v795 = vsel %vm666, %v659, 0.0
          %v796 = vadd.f32 %v794, %v795
          %v797 = vsel %vm666, %v660, 0.0
          %v798 = vadd.f32 %v796, %v797
          %v799 = vsel %vm666, %v661, 0.0
          %v800 = vadd.f32 %v798, %v799
          %v801 = vsel %vm666, %v662, 0.0
          %v802 = vadd.f32 %v800, %v801
          %v803 = vsel %vm666, %v663, 0.0
          %v804 = vadd.f32 %v802, %v803
          %v805 = vsel %vm666, %v664, 0.0
          %v806 = vadd.f32 %v804, %v805
          %v807 = vsel %vm666, %v665, 0.0
          %v808 = vadd.f32 %v806, %v807
          %v809 = vrot.slane %v808, 4
          %v810 = vadd.f32 %v808, %v809
          %v811 = vrot.slane %v810, 2
          %v812 = vadd.f32 %v810, %v811
          %v813 = vrot.slane %v812, 1
          %v814 = vadd.f32 %v812, %v813
          %v815 = vmul.f32 %v703, 0.0625
          %v816 = vmul.f32 %v740, 0.0625
          %v817 = vmul.f32 %v777, 0.0625
          %v818 = vmul.f32 %v814, 0.0625
          %v819 = vpack.c.bf16 %v815, %v815
          %v820 = vpack.c.bf16 %v816, %v816
          %v821 = vpack.c.bf16 %v817, %v817
          %v822 = vpack.c.bf16 %v818, %v818
          %v823 = vld [vmem:[%s11] sm:$0xf]
          %v824 = vld [vmem:[%s11 + $0x4] sm:$0xf]
          %v825 = vld [vmem:[%s11 + $0x8] sm:$0xf]
          %v826 = vld [vmem:[%s11 + $0xc] sm:$0xf]
          %v827 = vld [vmem:[%s12] sm:$0x1]
          %v829 = vperm.slane %v827, 0
          %v835 = vunpack.c.l.b16 %v819
          %v836 = vunpack.c.l.b16 %v820
          %v837 = vunpack.c.l.b16 %v821
          %v838 = vunpack.c.l.b16 %v822
          %vm839 = vcmask 1041409
          %v840 = vsel %vm839, %v836, %v835
          %vm841 = vcmask 1042434
          %v842 = vsel %vm841, %v837, %v840
          %vm843 = vcmask 1043459
          %v844 = vsel %vm843, %v838, %v842
          %v845 = vpack.c.b16 %v844, %v844
          %v850 = vunpack.c.l.b16 %v823
          %v851 = vunpack.c.l.b16 %v824
          %v852 = vunpack.c.l.b16 %v825
          %v853 = vunpack.c.l.b16 %v826
          %v854 = vpack.c.b16 %v851, %v850
          %v855 = vpack.c.b16 %v853, %v852
          %v859 = vsel %vm666, %v845, 0
          %861 = vmatpush.bf16.msra.mxu0 0
          %862 = vmatpush.bf16.msra.mxu0 0
          %863 = vmatpush.bf16.msra.mxu0 0
          %864 = vmatpush.bf16.msra.mxu0 0
          %865 = vmatpush.bf16.msra.mxu0 0
          %866 = vmatpush.bf16.msra.mxu0 0
          %867 = vmatpush.bf16.msra.mxu0 %v855
          %868 = vmatpush.bf16.msra.mxu0 %v854
          %869 = vmatmul.bf16.gmra.mxu0 %v859
          %v870 = vpop.f32.mrf.mxu0
          %v871 = vadd.f32 %v829, %v870
          %v872 = vpop.f32.mrf.mxu0
          %873 = vdwg.mxu0
          %vm874 = vcmask 257024
          %875 = vst.msk [vmem:[#allocation2] sm:$0xf] %vm874, %v871
          %877 = vrot.lane.b32.xlu0 %v871, 96
          %v878 = vpop.permute.xlu0 %877
          %880 = vst.msk [vmem:[#allocation3] sm:$0xf] %vm874, %v878
        $region72: #{tpu_custom_call.1} parent=67 // pred_fallthru
          _
        %v881 = vld [vmem:[#allocation2] sm:$0xf]
        %v882 = vld [vmem:[#allocation3] sm:$0xf]
        %v883 = vpack.c.bf16 %v881, %v881
        %v884 = vld [vmem:[%s5] sm:$0xff]
        %v885 = vld [vmem:[%s5 + $0x8] sm:$0xff]
        %v886 = vld [vmem:[%s5 + $0x10] sm:$0xff]
        %v887 = vld [vmem:[%s5 + $0x18] sm:$0xff]
        %v888 = vld [vmem:[%s6] sm:$0x3]
        %v890 = vperm.slane %v888, 0
        %v891 = vperm.slane %v888, 1
        %v898 = vunpack.c.l.b16 %v884
        %v899 = vunpack.c.h.b16 %v884
        %v900 = vunpack.c.l.b16 %v885
        %v901 = vunpack.c.h.b16 %v885
        %v902 = vunpack.c.l.b16 %v886
        %v903 = vunpack.c.h.b16 %v886
        %v904 = vunpack.c.l.b16 %v887
        %v905 = vunpack.c.h.b16 %v887
        %v906 = vpack.c.b16 %v900, %v898
        %v907 = vpack.c.b16 %v901, %v899
        %v908 = vpack.c.b16 %v904, %v902
        %v909 = vpack.c.b16 %v905, %v903
        %vm914 = vcmask 261120
        %v916 = vsel %vm914, %v883, 0
        %918 = vmatpush.bf16.msra.mxu0 0
        %919 = vmatpush.bf16.msra.mxu0 0
        %920 = vmatpush.bf16.msra.mxu0 0
        %921 = vmatpush.bf16.msra.mxu0 0
        %922 = vmatpush.bf16.msra.mxu0 0
        %923 = vmatpush.bf16.msra.mxu0 0
        %924 = vmatpush.bf16.msra.mxu0 %v908
        %925 = vmatpush.bf16.msra.mxu0 %v906
        %926 = vmatmul.bf16.gmra.mxu0 %v916
        %v927 = vpop.f32.mrf.mxu0
        %v928 = vadd.f32 %v890, %v927
        %v929 = vpop.f32.mrf.mxu0
        %930 = vdwg.mxu0
        %931 = vmatpush.bf16.msra.mxu0 0
        %932 = vmatpush.bf16.msra.mxu0 0
        %933 = vmatpush.bf16.msra.mxu0 0
        %934 = vmatpush.bf16.msra.mxu0 0
        %935 = vmatpush.bf16.msra.mxu0 0
        %936 = vmatpush.bf16.msra.mxu0 0
        %937 = vmatpush.bf16.msra.mxu0 %v909
        %938 = vmatpush.bf16.msra.mxu0 %v907
        %939 = vmatmul.bf16.gmra.mxu0 %v916
        %v940 = vpop.f32.mrf.mxu0
        %v941 = vadd.f32 %v891, %v940
        %v942 = vpop.f32.mrf.mxu0
        %943 = vdwg.mxu0
        %v944 = vld [vmem:[%s524] sm:$0xf]
        %v945 = vld [vmem:[%s524 + $0x4] sm:$0xf]
        %v946 = vld [vmem:[%s524 + $0x8] sm:$0xf]
        %v947 = vld [vmem:[%s524 + $0xc] sm:$0xf]
        %v948 = vld [vmem:[%s524 + $0x10] sm:$0xf]
        %v949 = vld [vmem:[%s524 + $0x14] sm:$0xf]
        %v950 = vld [vmem:[%s524 + $0x18] sm:$0xf]
        %v951 = vld [vmem:[%s524 + $0x1c] sm:$0xf]
        %v952 = vld [vmem:[%s524 + $0x20] sm:$0xf]
        %v953 = vld [vmem:[%s524 + $0x24] sm:$0xf]
        %v954 = vld [vmem:[%s524 + $0x28] sm:$0xf]
        %v955 = vld [vmem:[%s524 + $0x2c] sm:$0xf]
        %v956 = vld [vmem:[%s524 + $0x30] sm:$0xf]
        %v957 = vld [vmem:[%s524 + $0x34] sm:$0xf]
        %v958 = vld [vmem:[%s524 + $0x38] sm:$0xf]
        %v959 = vld [vmem:[%s524 + $0x3c] sm:$0xf]
        %v960 = vld [vmem:[%s524 + $0x40] sm:$0xf]
        %v961 = vld [vmem:[%s524 + $0x44] sm:$0xf]
        %v962 = vld [vmem:[%s524 + $0x48] sm:$0xf]
        %v963 = vld [vmem:[%s524 + $0x4c] sm:$0xf]
        %v964 = vld [vmem:[%s524 + $0x50] sm:$0xf]
        %v965 = vld [vmem:[%s524 + $0x54] sm:$0xf]
        %v966 = vld [vmem:[%s524 + $0x58] sm:$0xf]
        %v967 = vld [vmem:[%s524 + $0x5c] sm:$0xf]
        %v968 = vld [vmem:[%s524 + $0x60] sm:$0xf]
        %v969 = vld [vmem:[%s524 + $0x64] sm:$0xf]
        %v970 = vld [vmem:[%s524 + $0x68] sm:$0xf]
        %v971 = vld [vmem:[%s524 + $0x6c] sm:$0xf]
        %v972 = vld [vmem:[%s524 + $0x70] sm:$0xf]
        %v973 = vld [vmem:[%s524 + $0x74] sm:$0xf]
        %v974 = vld [vmem:[%s524 + $0x78] sm:$0xf]
        %v975 = vld [vmem:[%s524 + $0x7c] sm:$0xf]
        %v976 = vld [vmem:[%s524 + $0x80] sm:$0xf]
        %v977 = vld [vmem:[%s524 + $0x84] sm:$0xf]
        %v978 = vld [vmem:[%s524 + $0x88] sm:$0xf]
        %v979 = vld [vmem:[%s524 + $0x8c] sm:$0xf]
        %v980 = vld [vmem:[%s524 + $0x90] sm:$0xf]
        %v981 = vld [vmem:[%s524 + $0x94] sm:$0xf]
        %v982 = vld [vmem:[%s524 + $0x98] sm:$0xf]
        %v983 = vld [vmem:[%s524 + $0x9c] sm:$0xf]
        %v984 = vld [vmem:[%s524 + $0xa0] sm:$0xf]
        %v985 = vld [vmem:[%s524 + $0xa4] sm:$0xf]
        %v986 = vld [vmem:[%s524 + $0xa8] sm:$0xf]
        %v987 = vld [vmem:[%s524 + $0xac] sm:$0xf]
        %v988 = vld [vmem:[%s524 + $0xb0] sm:$0xf]
        %v989 = vld [vmem:[%s524 + $0xb4] sm:$0xf]
        %v990 = vld [vmem:[%s524 + $0xb8] sm:$0xf]
        %v991 = vld [vmem:[%s524 + $0xbc] sm:$0xf]
        %v992 = vld [vmem:[%s524 + $0xc0] sm:$0xf]
        %v993 = vld [vmem:[%s524 + $0xc4] sm:$0xf]
        %v994 = vld [vmem:[%s524 + $0xc8] sm:$0xf]
        %v995 = vld [vmem:[%s524 + $0xcc] sm:$0xf]
        %v996 = vld [vmem:[%s524 + $0xd0] sm:$0xf]
        %v997 = vld [vmem:[%s524 + $0xd4] sm:$0xf]
        %v998 = vld [vmem:[%s524 + $0xd8] sm:$0xf]
        %v999 = vld [vmem:[%s524 + $0xdc] sm:$0xf]
        %v1000 = vld [vmem:[%s524 + $0xe0] sm:$0xf]
        %v1001 = vld [vmem:[%s524 + $0xe4] sm:$0xf]
        %v1002 = vld [vmem:[%s524 + $0xe8] sm:$0xf]
        %v1003 = vld [vmem:[%s524 + $0xec] sm:$0xf]
        %v1004 = vld [vmem:[%s524 + $0xf0] sm:$0xf]
        %v1005 = vld [vmem:[%s524 + $0xf4] sm:$0xf]
        %v1006 = vld [vmem:[%s524 + $0xf8] sm:$0xf]
        %v1007 = vld [vmem:[%s524 + $0xfc] sm:$0xf]
        %v1008 = vunpack.c.l.bf16 %v944
        %v1009 = vunpack.c.l.bf16 %v945
        %v1010 = vunpack.c.l.bf16 %v946
        %v1011 = vunpack.c.l.bf16 %v947
        %v1012 = vunpack.c.l.bf16 %v948
        %v1013 = vunpack.c.l.bf16 %v949
        %v1014 = vunpack.c.l.bf16 %v950
        %v1015 = vunpack.c.l.bf16 %v951
        %v1016 = vunpack.c.l.bf16 %v952
        %v1017 = vunpack.c.l.bf16 %v953
        %v1018 = vunpack.c.l.bf16 %v954
        %v1019 = vunpack.c.l.bf16 %v955
        %v1020 = vunpack.c.l.bf16 %v956
        %v1021 = vunpack.c.l.bf16 %v957
        %v1022 = vunpack.c.l.bf16 %v958
        %v1023 = vunpack.c.l.bf16 %v959
        %v1024 = vunpack.c.l.bf16 %v960
        %v1025 = vunpack.c.l.bf16 %v961
        %v1026 = vunpack.c.l.bf16 %v962
        %v1027 = vunpack.c.l.bf16 %v963
        %v1028 = vunpack.c.l.bf16 %v964
        %v1029 = vunpack.c.l.bf16 %v965
        %v1030 = vunpack.c.l.bf16 %v966
        %v1031 = vunpack.c.l.bf16 %v967
        %v1032 = vunpack.c.l.bf16 %v968
        %v1033 = vunpack.c.l.bf16 %v969
        %v1034 = vunpack.c.l.bf16 %v970
        %v1035 = vunpack.c.l.bf16 %v971
        %v1036 = vunpack.c.l.bf16 %v972
        %v1037 = vunpack.c.l.bf16 %v973
        %v1038 = vunpack.c.l.bf16 %v974
        %v1039 = vunpack.c.l.bf16 %v975
        %v1040 = vunpack.c.l.bf16 %v976
        %v1041 = vunpack.c.l.bf16 %v977
        %v1042 = vunpack.c.l.bf16 %v978
        %v1043 = vunpack.c.l.bf16 %v979
        %v1044 = vunpack.c.l.bf16 %v980
        %v1045 = vunpack.c.l.bf16 %v981
        %v1046 = vunpack.c.l.bf16 %v982
        %v1047 = vunpack.c.l.bf16 %v983
        %v1048 = vunpack.c.l.bf16 %v984
        %v1049 = vunpack.c.l.bf16 %v985
        %v1050 = vunpack.c.l.bf16 %v986
        %v1051 = vunpack.c.l.bf16 %v987
        %v1052 = vunpack.c.l.bf16 %v988
        %v1053 = vunpack.c.l.bf16 %v989
        %v1054 = vunpack.c.l.bf16 %v990
        %v1055 = vunpack.c.l.bf16 %v991
        %v1056 = vunpack.c.l.bf16 %v992
        %v1057 = vunpack.c.l.bf16 %v993
        %v1058 = vunpack.c.l.bf16 %v994
        %v1059 = vunpack.c.l.bf16 %v995
        %v1060 = vunpack.c.l.bf16 %v996
        %v1061 = vunpack.c.l.bf16 %v997
        %v1062 = vunpack.c.l.bf16 %v998
        %v1063 = vunpack.c.l.bf16 %v999
        %v1064 = vunpack.c.l.bf16 %v1000
        %v1065 = vunpack.c.l.bf16 %v1001
        %v1066 = vunpack.c.l.bf16 %v1002
        %v1067 = vunpack.c.l.bf16 %v1003
        %v1068 = vunpack.c.l.bf16 %v1004
        %v1069 = vunpack.c.l.bf16 %v1005
        %v1070 = vunpack.c.l.bf16 %v1006
        %v1071 = vunpack.c.l.bf16 %v1007
        %v1073 = vrot.slane %v928, 1
        %v1074 = vrot.slane %v928, 2
        %v1075 = vrot.slane %v928, 3
        %v1076 = vperm.slane %v928, 0
        %v1077 = vperm.slane %v1073, 0
        %v1078 = vperm.slane %v1074, 0
        %v1079 = vperm.slane %v1075, 0
        %v1084 = vadd.f32 %v1008, %v1076
        %v1085 = vadd.f32 %v1009, %v1076
        %v1086 = vadd.f32 %v1010, %v1076
        %v1087 = vadd.f32 %v1011, %v1076
        %v1088 = vadd.f32 %v1012, %v1076
        %v1089 = vadd.f32 %v1013, %v1076
        %v1090 = vadd.f32 %v1014, %v1076
        %v1091 = vadd.f32 %v1015, %v1076
        %v1092 = vadd.f32 %v1016, %v1076
        %v1093 = vadd.f32 %v1017, %v1076
        %v1094 = vadd.f32 %v1018, %v1076
        %v1095 = vadd.f32 %v1019, %v1076
        %v1096 = vadd.f32 %v1020, %v1076
        %v1097 = vadd.f32 %v1021, %v1076
        %v1098 = vadd.f32 %v1022, %v1076
        %v1099 = vadd.f32 %v1023, %v1076
        %v1100 = vadd.f32 %v1024, %v1077
        %v1101 = vadd.f32 %v1025, %v1077
        %v1102 = vadd.f32 %v1026, %v1077
        %v1103 = vadd.f32 %v1027, %v1077
        %v1104 = vadd.f32 %v1028, %v1077
        %v1105 = vadd.f32 %v1029, %v1077
        %v1106 = vadd.f32 %v1030, %v1077
        %v1107 = vadd.f32 %v1031, %v1077
        %v1108 = vadd.f32 %v1032, %v1077
        %v1109 = vadd.f32 %v1033, %v1077
        %v1110 = vadd.f32 %v1034, %v1077
        %v1111 = vadd.f32 %v1035, %v1077
        %v1112 = vadd.f32 %v1036, %v1077
        %v1113 = vadd.f32 %v1037, %v1077
        %v1114 = vadd.f32 %v1038, %v1077
        %v1115 = vadd.f32 %v1039, %v1077
        %v1116 = vadd.f32 %v1040, %v1078
        %v1117 = vadd.f32 %v1041, %v1078
        %v1118 = vadd.f32 %v1042, %v1078
        %v1119 = vadd.f32 %v1043, %v1078
        %v1120 = vadd.f32 %v1044, %v1078
        %v1121 = vadd.f32 %v1045, %v1078
        %v1122 = vadd.f32 %v1046, %v1078
        %v1123 = vadd.f32 %v1047, %v1078
        %v1124 = vadd.f32 %v1048, %v1078
        %v1125 = vadd.f32 %v1049, %v1078
        %v1126 = vadd.f32 %v1050, %v1078
        %v1127 = vadd.f32 %v1051, %v1078
        %v1128 = vadd.f32 %v1052, %v1078
        %v1129 = vadd.f32 %v1053, %v1078
        %v1130 = vadd.f32 %v1054, %v1078
        %v1131 = vadd.f32 %v1055, %v1078
        %v1132 = vadd.f32 %v1056, %v1079
        %v1133 = vadd.f32 %v1057, %v1079
        %v1134 = vadd.f32 %v1058, %v1079
        %v1135 = vadd.f32 %v1059, %v1079
        %v1136 = vadd.f32 %v1060, %v1079
        %v1137 = vadd.f32 %v1061, %v1079
        %v1138 = vadd.f32 %v1062, %v1079
        %v1139 = vadd.f32 %v1063, %v1079
        %v1140 = vadd.f32 %v1064, %v1079
        %v1141 = vadd.f32 %v1065, %v1079
        %v1142 = vadd.f32 %v1066, %v1079
        %v1143 = vadd.f32 %v1067, %v1079
        %v1144 = vadd.f32 %v1068, %v1079
        %v1145 = vadd.f32 %v1069, %v1079
        %v1146 = vadd.f32 %v1070, %v1079
        %v1147 = vadd.f32 %v1071, %v1079
        %v1148 = vmax.f32 %v1084, 0.0
        %v1149 = vmax.f32 %v1085, 0.0
        %v1150 = vmax.f32 %v1086, 0.0
        %v1151 = vmax.f32 %v1087, 0.0
        %v1152 = vmax.f32 %v1088, 0.0
        %v1153 = vmax.f32 %v1089, 0.0
        %v1154 = vmax.f32 %v1090, 0.0
        %v1155 = vmax.f32 %v1091, 0.0
        %v1156 = vmax.f32 %v1092, 0.0
        %v1157 = vmax.f32 %v1093, 0.0
        %v1158 = vmax.f32 %v1094, 0.0
        %v1159 = vmax.f32 %v1095, 0.0
        %v1160 = vmax.f32 %v1096, 0.0
        %v1161 = vmax.f32 %v1097, 0.0
        %v1162 = vmax.f32 %v1098, 0.0
        %v1163 = vmax.f32 %v1099, 0.0
        %v1164 = vmax.f32 %v1100, 0.0
        %v1165 = vmax.f32 %v1101, 0.0
        %v1166 = vmax.f32 %v1102, 0.0
        %v1167 = vmax.f32 %v1103, 0.0
        %v1168 = vmax.f32 %v1104, 0.0
        %v1169 = vmax.f32 %v1105, 0.0
        %v1170 = vmax.f32 %v1106, 0.0
        %v1171 = vmax.f32 %v1107, 0.0
        %v1172 = vmax.f32 %v1108, 0.0
        %v1173 = vmax.f32 %v1109, 0.0
        %v1174 = vmax.f32 %v1110, 0.0
        %v1175 = vmax.f32 %v1111, 0.0
        %v1176 = vmax.f32 %v1112, 0.0
        %v1177 = vmax.f32 %v1113, 0.0
        %v1178 = vmax.f32 %v1114, 0.0
        %v1179 = vmax.f32 %v1115, 0.0
        %v1180 = vmax.f32 %v1116, 0.0
        %v1181 = vmax.f32 %v1117, 0.0
        %v1182 = vmax.f32 %v1118, 0.0
        %v1183 = vmax.f32 %v1119, 0.0
        %v1184 = vmax.f32 %v1120, 0.0
        %v1185 = vmax.f32 %v1121, 0.0
        %v1186 = vmax.f32 %v1122, 0.0
        %v1187 = vmax.f32 %v1123, 0.0
        %v1188 = vmax.f32 %v1124, 0.0
        %v1189 = vmax.f32 %v1125, 0.0
        %v1190 = vmax.f32 %v1126, 0.0
        %v1191 = vmax.f32 %v1127, 0.0
        %v1192 = vmax.f32 %v1128, 0.0
        %v1193 = vmax.f32 %v1129, 0.0
        %v1194 = vmax.f32 %v1130, 0.0
        %v1195 = vmax.f32 %v1131, 0.0
        %v1196 = vmax.f32 %v1132, 0.0
        %v1197 = vmax.f32 %v1133, 0.0
        %v1198 = vmax.f32 %v1134, 0.0
        %v1199 = vmax.f32 %v1135, 0.0
        %v1200 = vmax.f32 %v1136, 0.0
        %v1201 = vmax.f32 %v1137, 0.0
        %v1202 = vmax.f32 %v1138, 0.0
        %v1203 = vmax.f32 %v1139, 0.0
        %v1204 = vmax.f32 %v1140, 0.0
        %v1205 = vmax.f32 %v1141, 0.0
        %v1206 = vmax.f32 %v1142, 0.0
        %v1207 = vmax.f32 %v1143, 0.0
        %v1208 = vmax.f32 %v1144, 0.0
        %v1209 = vmax.f32 %v1145, 0.0
        %v1210 = vmax.f32 %v1146, 0.0
        %v1211 = vmax.f32 %v1147, 0.0
        %v1212 = vld [vmem:[%s4] sm:$0x1]
        %v1214 = vperm.slane %v1212, 0
        %v1216 = vmul.f32 %v1148, %v1214
        %v1217 = vmul.f32 %v1149, %v1214
        %v1218 = vmul.f32 %v1150, %v1214
        %v1219 = vmul.f32 %v1151, %v1214
        %v1220 = vmul.f32 %v1152, %v1214
        %v1221 = vmul.f32 %v1153, %v1214
        %v1222 = vmul.f32 %v1154, %v1214
        %v1223 = vmul.f32 %v1155, %v1214
        %v1224 = vmul.f32 %v1156, %v1214
        %v1225 = vmul.f32 %v1157, %v1214
        %v1226 = vmul.f32 %v1158, %v1214
        %v1227 = vmul.f32 %v1159, %v1214
        %v1228 = vmul.f32 %v1160, %v1214
        %v1229 = vmul.f32 %v1161, %v1214
        %v1230 = vmul.f32 %v1162, %v1214
        %v1231 = vmul.f32 %v1163, %v1214
        %v1232 = vmul.f32 %v1164, %v1214
        %v1233 = vmul.f32 %v1165, %v1214
        %v1234 = vmul.f32 %v1166, %v1214
        %v1235 = vmul.f32 %v1167, %v1214
        %v1236 = vmul.f32 %v1168, %v1214
        %v1237 = vmul.f32 %v1169, %v1214
        %v1238 = vmul.f32 %v1170, %v1214
        %v1239 = vmul.f32 %v1171, %v1214
        %v1240 = vmul.f32 %v1172, %v1214
        %v1241 = vmul.f32 %v1173, %v1214
        %v1242 = vmul.f32 %v1174, %v1214
        %v1243 = vmul.f32 %v1175, %v1214
        %v1244 = vmul.f32 %v1176, %v1214
        %v1245 = vmul.f32 %v1177, %v1214
        %v1246 = vmul.f32 %v1178, %v1214
        %v1247 = vmul.f32 %v1179, %v1214
        %v1248 = vmul.f32 %v1180, %v1214
        %v1249 = vmul.f32 %v1181, %v1214
        %v1250 = vmul.f32 %v1182, %v1214
        %v1251 = vmul.f32 %v1183, %v1214
        %v1252 = vmul.f32 %v1184, %v1214
        %v1253 = vmul.f32 %v1185, %v1214
        %v1254 = vmul.f32 %v1186, %v1214
        %v1255 = vmul.f32 %v1187, %v1214
        %v1256 = vmul.f32 %v1188, %v1214
        %v1257 = vmul.f32 %v1189, %v1214
        %v1258 = vmul.f32 %v1190, %v1214
        %v1259 = vmul.f32 %v1191, %v1214
        %v1260 = vmul.f32 %v1192, %v1214
        %v1261 = vmul.f32 %v1193, %v1214
        %v1262 = vmul.f32 %v1194, %v1214
        %v1263 = vmul.f32 %v1195, %v1214
        %v1264 = vmul.f32 %v1196, %v1214
        %v1265 = vmul.f32 %v1197, %v1214
        %v1266 = vmul.f32 %v1198, %v1214
        %v1267 = vmul.f32 %v1199, %v1214
        %v1268 = vmul.f32 %v1200, %v1214
        %v1269 = vmul.f32 %v1201, %v1214
        %v1270 = vmul.f32 %v1202, %v1214
        %v1271 = vmul.f32 %v1203, %v1214
        %v1272 = vmul.f32 %v1204, %v1214
        %v1273 = vmul.f32 %v1205, %v1214
        %v1274 = vmul.f32 %v1206, %v1214
        %v1275 = vmul.f32 %v1207, %v1214
        %v1276 = vmul.f32 %v1208, %v1214
        %v1277 = vmul.f32 %v1209, %v1214
        %v1278 = vmul.f32 %v1210, %v1214
        %v1279 = vmul.f32 %v1211, %v1214
        %v1280 = vsel %vm914, %v1216, 0.0
        %1281 = vadd.xlane.f32.xlu0 %v1280
        %v1282 = vpop.xlane.xlu0 %1281
        %v1283 = vsel %vm914, %v1217, 0.0
        %1284 = vadd.xlane.f32.xlu0 %v1283
        %v1285 = vpop.xlane.xlu0 %1284
        %v1286 = vsel %vm914, %v1218, 0.0
        %1287 = vadd.xlane.f32.xlu0 %v1286
        %v1288 = vpop.xlane.xlu0 %1287
        %v1289 = vsel %vm914, %v1219, 0.0
        %1290 = vadd.xlane.f32.xlu0 %v1289
        %v1291 = vpop.xlane.xlu0 %1290
        %v1292 = vsel %vm914, %v1220, 0.0
        %1293 = vadd.xlane.f32.xlu0 %v1292
        %v1294 = vpop.xlane.xlu0 %1293
        %v1295 = vsel %vm914, %v1221, 0.0
        %1296 = vadd.xlane.f32.xlu0 %v1295
        %v1297 = vpop.xlane.xlu0 %1296
        %v1298 = vsel %vm914, %v1222, 0.0
        %1299 = vadd.xlane.f32.xlu0 %v1298
        %v1300 = vpop.xlane.xlu0 %1299
        %v1301 = vsel %vm914, %v1223, 0.0
        %1302 = vadd.xlane.f32.xlu0 %v1301
        %v1303 = vpop.xlane.xlu0 %1302
        %v1304 = vsel %vm914, %v1224, 0.0
        %1305 = vadd.xlane.f32.xlu0 %v1304
        %v1306 = vpop.xlane.xlu0 %1305
        %v1307 = vsel %vm914, %v1225, 0.0
        %1308 = vadd.xlane.f32.xlu0 %v1307
        %v1309 = vpop.xlane.xlu0 %1308
        %v1310 = vsel %vm914, %v1226, 0.0
        %1311 = vadd.xlane.f32.xlu0 %v1310
        %v1312 = vpop.xlane.xlu0 %1311
        %v1313 = vsel %vm914, %v1227, 0.0
        %1314 = vadd.xlane.f32.xlu0 %v1313
        %v1315 = vpop.xlane.xlu0 %1314
        %v1316 = vsel %vm914, %v1228, 0.0
        %1317 = vadd.xlane.f32.xlu0 %v1316
        %v1318 = vpop.xlane.xlu0 %1317
        %v1319 = vsel %vm914, %v1229, 0.0
        %1320 = vadd.xlane.f32.xlu0 %v1319
        %v1321 = vpop.xlane.xlu0 %1320
        %v1322 = vsel %vm914, %v1230, 0.0
        %1323 = vadd.xlane.f32.xlu0 %v1322
        %v1324 = vpop.xlane.xlu0 %1323
        %v1325 = vsel %vm914, %v1231, 0.0
        %1326 = vadd.xlane.f32.xlu0 %v1325
        %v1327 = vpop.xlane.xlu0 %1326
        %v1328 = vsel %vm914, %v1232, 0.0
        %1329 = vadd.xlane.f32.xlu0 %v1328
        %v1330 = vpop.xlane.xlu0 %1329
        %v1331 = vsel %vm914, %v1233, 0.0
        %1332 = vadd.xlane.f32.xlu0 %v1331
        %v1333 = vpop.xlane.xlu0 %1332
        %v1334 = vsel %vm914, %v1234, 0.0
        %1335 = vadd.xlane.f32.xlu0 %v1334
        %v1336 = vpop.xlane.xlu0 %1335
        %v1337 = vsel %vm914, %v1235, 0.0
        %1338 = vadd.xlane.f32.xlu0 %v1337
        %v1339 = vpop.xlane.xlu0 %1338
        %v1340 = vsel %vm914, %v1236, 0.0
        %1341 = vadd.xlane.f32.xlu0 %v1340
        %v1342 = vpop.xlane.xlu0 %1341
        %v1343 = vsel %vm914, %v1237, 0.0
        %1344 = vadd.xlane.f32.xlu0 %v1343
        %v1345 = vpop.xlane.xlu0 %1344
        %v1346 = vsel %vm914, %v1238, 0.0
        %1347 = vadd.xlane.f32.xlu0 %v1346
        %v1348 = vpop.xlane.xlu0 %1347
        %v1349 = vsel %vm914, %v1239, 0.0
        %1350 = vadd.xlane.f32.xlu0 %v1349
        %v1351 = vpop.xlane.xlu0 %1350
        %v1352 = vsel %vm914, %v1240, 0.0
        %1353 = vadd.xlane.f32.xlu0 %v1352
        %v1354 = vpop.xlane.xlu0 %1353
        %v1355 = vsel %vm914, %v1241, 0.0
        %1356 = vadd.xlane.f32.xlu0 %v1355
        %v1357 = vpop.xlane.xlu0 %1356
        %v1358 = vsel %vm914, %v1242, 0.0
        %1359 = vadd.xlane.f32.xlu0 %v1358
        %v1360 = vpop.xlane.xlu0 %1359
        %v1361 = vsel %vm914, %v1243, 0.0
        %1362 = vadd.xlane.f32.xlu0 %v1361
        %v1363 = vpop.xlane.xlu0 %1362
        %v1364 = vsel %vm914, %v1244, 0.0
        %1365 = vadd.xlane.f32.xlu0 %v1364
        %v1366 = vpop.xlane.xlu0 %1365
        %v1367 = vsel %vm914, %v1245, 0.0
        %1368 = vadd.xlane.f32.xlu0 %v1367
        %v1369 = vpop.xlane.xlu0 %1368
        %v1370 = vsel %vm914, %v1246, 0.0
        %1371 = vadd.xlane.f32.xlu0 %v1370
        %v1372 = vpop.xlane.xlu0 %1371
        %v1373 = vsel %vm914, %v1247, 0.0
        %1374 = vadd.xlane.f32.xlu0 %v1373
        %v1375 = vpop.xlane.xlu0 %1374
        %v1376 = vsel %vm914, %v1248, 0.0
        %1377 = vadd.xlane.f32.xlu0 %v1376
        %v1378 = vpop.xlane.xlu0 %1377
        %v1379 = vsel %vm914, %v1249, 0.0
        %1380 = vadd.xlane.f32.xlu0 %v1379
        %v1381 = vpop.xlane.xlu0 %1380
        %v1382 = vsel %vm914, %v1250, 0.0
        %1383 = vadd.xlane.f32.xlu0 %v1382
        %v1384 = vpop.xlane.xlu0 %1383
        %v1385 = vsel %vm914, %v1251, 0.0
        %1386 = vadd.xlane.f32.xlu0 %v1385
        %v1387 = vpop.xlane.xlu0 %1386
        %v1388 = vsel %vm914, %v1252, 0.0
        %1389 = vadd.xlane.f32.xlu0 %v1388
        %v1390 = vpop.xlane.xlu0 %1389
        %v1391 = vsel %vm914, %v1253, 0.0
        %1392 = vadd.xlane.f32.xlu0 %v1391
        %v1393 = vpop.xlane.xlu0 %1392
        %v1394 = vsel %vm914, %v1254, 0.0
        %1395 = vadd.xlane.f32.xlu0 %v1394
        %v1396 = vpop.xlane.xlu0 %1395
        %v1397 = vsel %vm914, %v1255, 0.0
        %1398 = vadd.xlane.f32.xlu0 %v1397
        %v1399 = vpop.xlane.xlu0 %1398
        %v1400 = vsel %vm914, %v1256, 0.0
        %1401 = vadd.xlane.f32.xlu0 %v1400
        %v1402 = vpop.xlane.xlu0 %1401
        %v1403 = vsel %vm914, %v1257, 0.0
        %1404 = vadd.xlane.f32.xlu0 %v1403
        %v1405 = vpop.xlane.xlu0 %1404
        %v1406 = vsel %vm914, %v1258, 0.0
        %1407 = vadd.xlane.f32.xlu0 %v1406
        %v1408 = vpop.xlane.xlu0 %1407
        %v1409 = vsel %vm914, %v1259, 0.0
        %1410 = vadd.xlane.f32.xlu0 %v1409
        %v1411 = vpop.xlane.xlu0 %1410
        %v1412 = vsel %vm914, %v1260, 0.0
        %1413 = vadd.xlane.f32.xlu0 %v1412
        %v1414 = vpop.xlane.xlu0 %1413
        %v1415 = vsel %vm914, %v1261, 0.0
        %1416 = vadd.xlane.f32.xlu0 %v1415
        %v1417 = vpop.xlane.xlu0 %1416
        %v1418 = vsel %vm914, %v1262, 0.0
        %1419 = vadd.xlane.f32.xlu0 %v1418
        %v1420 = vpop.xlane.xlu0 %1419
        %v1421 = vsel %vm914, %v1263, 0.0
        %1422 = vadd.xlane.f32.xlu0 %v1421
        %v1423 = vpop.xlane.xlu0 %1422
        %v1424 = vsel %vm914, %v1264, 0.0
        %1425 = vadd.xlane.f32.xlu0 %v1424
        %v1426 = vpop.xlane.xlu0 %1425
        %v1427 = vsel %vm914, %v1265, 0.0
        %1428 = vadd.xlane.f32.xlu0 %v1427
        %v1429 = vpop.xlane.xlu0 %1428
        %v1430 = vsel %vm914, %v1266, 0.0
        %1431 = vadd.xlane.f32.xlu0 %v1430
        %v1432 = vpop.xlane.xlu0 %1431
        %v1433 = vsel %vm914, %v1267, 0.0
        %1434 = vadd.xlane.f32.xlu0 %v1433
        %v1435 = vpop.xlane.xlu0 %1434
        %v1436 = vsel %vm914, %v1268, 0.0
        %1437 = vadd.xlane.f32.xlu0 %v1436
        %v1438 = vpop.xlane.xlu0 %1437
        %v1439 = vsel %vm914, %v1269, 0.0
        %1440 = vadd.xlane.f32.xlu0 %v1439
        %v1441 = vpop.xlane.xlu0 %1440
        %v1442 = vsel %vm914, %v1270, 0.0
        %1443 = vadd.xlane.f32.xlu0 %v1442
        %v1444 = vpop.xlane.xlu0 %1443
        %v1445 = vsel %vm914, %v1271, 0.0
        %1446 = vadd.xlane.f32.xlu0 %v1445
        %v1447 = vpop.xlane.xlu0 %1446
        %v1448 = vsel %vm914, %v1272, 0.0
        %1449 = vadd.xlane.f32.xlu0 %v1448
        %v1450 = vpop.xlane.xlu0 %1449
        %v1451 = vsel %vm914, %v1273, 0.0
        %1452 = vadd.xlane.f32.xlu0 %v1451
        %v1453 = vpop.xlane.xlu0 %1452
        %v1454 = vsel %vm914, %v1274, 0.0
        %1455 = vadd.xlane.f32.xlu0 %v1454
        %v1456 = vpop.xlane.xlu0 %1455
        %v1457 = vsel %vm914, %v1275, 0.0
        %1458 = vadd.xlane.f32.xlu0 %v1457
        %v1459 = vpop.xlane.xlu0 %1458
        %v1460 = vsel %vm914, %v1276, 0.0
        %1461 = vadd.xlane.f32.xlu0 %v1460
        %v1462 = vpop.xlane.xlu0 %1461
        %v1463 = vsel %vm914, %v1277, 0.0
        %1464 = vadd.xlane.f32.xlu0 %v1463
        %v1465 = vpop.xlane.xlu0 %1464
        %v1466 = vsel %vm914, %v1278, 0.0
        %1467 = vadd.xlane.f32.xlu0 %v1466
        %v1468 = vpop.xlane.xlu0 %1467
        %v1469 = vsel %vm914, %v1279, 0.0
        %1470 = vadd.xlane.f32.xlu0 %v1469
        %v1471 = vpop.xlane.xlu0 %1470
        %v1472 = vlaneseq
        %v1473 = vand.u32 %v1472, 127
        %vm1474 = vcmp.lt.s32.totalorder %v1473, 16
        %v1539 = vperm.slane %v1282, %v1473
        %v1540 = vadd.s32 %v1473, 4294967288
        %v1541 = vperm.slane %v1285, %v1540
        %vm1542 = vcmask 130112
        %v1543 = vsel %vm1542, %v1541, %v1539
        %v1544 = vadd.s32 %v1473, 4294967280
        %v1545 = vperm.slane %v1288, %v1544
        %vm1546 = vcmask 195712
        %v1547 = vsel %vm1546, %v1545, %v1543
        %v1548 = vadd.s32 %v1473, 4294967272
        %v1549 = vperm.slane %v1291, %v1548
        %vm1550 = vcmask 261312
        %v1551 = vsel %vm1550, %v1549, %v1547
        %v1552 = vadd.s32 %v1473, 4294967264
        %v1553 = vperm.slane %v1294, %v1552
        %vm1554 = vcmask 326912
        %v1555 = vsel %vm1554, %v1553, %v1551
        %v1556 = vadd.s32 %v1473, 4294967256
        %v1557 = vperm.slane %v1297, %v1556
        %vm1558 = vcmask 392512
        %v1559 = vsel %vm1558, %v1557, %v1555
        %v1560 = vadd.s32 %v1473, 4294967248
        %v1561 = vperm.slane %v1300, %v1560
        %vm1562 = vcmask 458112
        %v1563 = vsel %vm1562, %v1561, %v1559
        %v1564 = vadd.s32 %v1473, 4294967240
        %v1565 = vperm.slane %v1303, %v1564
        %vm1566 = vcmask 523712
        %v1567 = vsel %vm1566, %v1565, %v1563
        %v1568 = vadd.s32 %v1473, 4294967232
        %v1569 = vperm.slane %v1306, %v1568
        %vm1570 = vcmask 589312
        %v1571 = vsel %vm1570, %v1569, %v1567
        %v1572 = vadd.s32 %v1473, 4294967224
        %v1573 = vperm.slane %v1309, %v1572
        %vm1574 = vcmask 654912
        %v1575 = vsel %vm1574, %v1573, %v1571
        %v1576 = vadd.s32 %v1473, 4294967216
        %v1577 = vperm.slane %v1312, %v1576
        %vm1578 = vcmask 720512
        %v1579 = vsel %vm1578, %v1577, %v1575
        %v1580 = vadd.s32 %v1473, 4294967208
        %v1581 = vperm.slane %v1315, %v1580
        %vm1582 = vcmask 786112
        %v1583 = vsel %vm1582, %v1581, %v1579
        %v1584 = vadd.s32 %v1473, 4294967200
        %v1585 = vperm.slane %v1318, %v1584
        %vm1586 = vcmask 851712
        %v1587 = vsel %vm1586, %v1585, %v1583
        %v1588 = vadd.s32 %v1473, 4294967192
        %v1589 = vperm.slane %v1321, %v1588
        %vm1590 = vcmask 917312
        %v1591 = vsel %vm1590, %v1589, %v1587
        %v1592 = vadd.s32 %v1473, 4294967184
        %v1593 = vperm.slane %v1324, %v1592
        %vm1594 = vcmask 982912
        %v1595 = vsel %vm1594, %v1593, %v1591
        %v1596 = vadd.s32 %v1473, 4294967176
        %v1597 = vperm.slane %v1327, %v1596
        %vm1598 = vcmask 1048512
        %v1599 = vsel %vm1598, %v1597, %v1595
        %v1600 = vperm.slane %v1330, %v1473
        %v1601 = vperm.slane %v1333, %v1540
        %v1602 = vsel %vm1542, %v1601, %v1600
        %v1603 = vperm.slane %v1336, %v1544
        %v1604 = vsel %vm1546, %v1603, %v1602
        %v1605 = vperm.slane %v1339, %v1548
        %v1606 = vsel %vm1550, %v1605, %v1604
        %v1607 = vperm.slane %v1342, %v1552
        %v1608 = vsel %vm1554, %v1607, %v1606
        %v1609 = vperm.slane %v1345, %v1556
        %v1610 = vsel %vm1558, %v1609, %v1608
        %v1611 = vperm.slane %v1348, %v1560
        %v1612 = vsel %vm1562, %v1611, %v1610
        %v1613 = vperm.slane %v1351, %v1564
        %v1614 = vsel %vm1566, %v1613, %v1612
        %v1615 = vperm.slane %v1354, %v1568
        %v1616 = vsel %vm1570, %v1615, %v1614
        %v1617 = vperm.slane %v1357, %v1572
        %v1618 = vsel %vm1574, %v1617, %v1616
        %v1619 = vperm.slane %v1360, %v1576
        %v1620 = vsel %vm1578, %v1619, %v1618
        %v1621 = vperm.slane %v1363, %v1580
        %v1622 = vsel %vm1582, %v1621, %v1620
        %v1623 = vperm.slane %v1366, %v1584
        %v1624 = vsel %vm1586, %v1623, %v1622
        %v1625 = vperm.slane %v1369, %v1588
        %v1626 = vsel %vm1590, %v1625, %v1624
        %v1627 = vperm.slane %v1372, %v1592
        %v1628 = vsel %vm1594, %v1627, %v1626
        %v1629 = vperm.slane %v1375, %v1596
        %v1630 = vsel %vm1598, %v1629, %v1628
        %v1631 = vperm.slane %v1378, %v1473
        %v1632 = vperm.slane %v1381, %v1540
        %v1633 = vsel %vm1542, %v1632, %v1631
        %v1634 = vperm.slane %v1384, %v1544
        %v1635 = vsel %vm1546, %v1634, %v1633
        %v1636 = vperm.slane %v1387, %v1548
        %v1637 = vsel %vm1550, %v1636, %v1635
        %v1638 = vperm.slane %v1390, %v1552
        %v1639 = vsel %vm1554, %v1638, %v1637
        %v1640 = vperm.slane %v1393, %v1556
        %v1641 = vsel %vm1558, %v1640, %v1639
        %v1642 = vperm.slane %v1396, %v1560
        %v1643 = vsel %vm1562, %v1642, %v1641
        %v1644 = vperm.slane %v1399, %v1564
        %v1645 = vsel %vm1566, %v1644, %v1643
        %v1646 = vperm.slane %v1402, %v1568
        %v1647 = vsel %vm1570, %v1646, %v1645
        %v1648 = vperm.slane %v1405, %v1572
        %v1649 = vsel %vm1574, %v1648, %v1647
        %v1650 = vperm.slane %v1408, %v1576
        %v1651 = vsel %vm1578, %v1650, %v1649
        %v1652 = vperm.slane %v1411, %v1580
        %v1653 = vsel %vm1582, %v1652, %v1651
        %v1654 = vperm.slane %v1414, %v1584
        %v1655 = vsel %vm1586, %v1654, %v1653
        %v1656 = vperm.slane %v1417, %v1588
        %v1657 = vsel %vm1590, %v1656, %v1655
        %v1658 = vperm.slane %v1420, %v1592
        %v1659 = vsel %vm1594, %v1658, %v1657
        %v1660 = vperm.slane %v1423, %v1596
        %v1661 = vsel %vm1598, %v1660, %v1659
        %v1662 = vperm.slane %v1426, %v1473
        %v1663 = vperm.slane %v1429, %v1540
        %v1664 = vsel %vm1542, %v1663, %v1662
        %v1665 = vperm.slane %v1432, %v1544
        %v1666 = vsel %vm1546, %v1665, %v1664
        %v1667 = vperm.slane %v1435, %v1548
        %v1668 = vsel %vm1550, %v1667, %v1666
        %v1669 = vperm.slane %v1438, %v1552
        %v1670 = vsel %vm1554, %v1669, %v1668
        %v1671 = vperm.slane %v1441, %v1556
        %v1672 = vsel %vm1558, %v1671, %v1670
        %v1673 = vperm.slane %v1444, %v1560
        %v1674 = vsel %vm1562, %v1673, %v1672
        %v1675 = vperm.slane %v1447, %v1564
        %v1676 = vsel %vm1566, %v1675, %v1674
        %v1677 = vperm.slane %v1450, %v1568
        %v1678 = vsel %vm1570, %v1677, %v1676
        %v1679 = vperm.slane %v1453, %v1572
        %v1680 = vsel %vm1574, %v1679, %v1678
        %v1681 = vperm.slane %v1456, %v1576
        %v1682 = vsel %vm1578, %v1681, %v1680
        %v1683 = vperm.slane %v1459, %v1580
        %v1684 = vsel %vm1582, %v1683, %v1682
        %v1685 = vperm.slane %v1462, %v1584
        %v1686 = vsel %vm1586, %v1685, %v1684
        %v1687 = vperm.slane %v1465, %v1588
        %v1688 = vsel %vm1590, %v1687, %v1686
        %v1689 = vperm.slane %v1468, %v1592
        %v1690 = vsel %vm1594, %v1689, %v1688
        %v1691 = vperm.slane %v1471, %v1596
        %v1692 = vsel %vm1598, %v1691, %v1690
        %vm1693 = vcmask 1041409
        %v1694 = vsel %vm1693, %v1630, %v1599
        %vm1695 = vcmask 1042434
        %v1696 = vsel %vm1695, %v1661, %v1694
        %vm1697 = vcmask 1043459
        %v1698 = vsel %vm1697, %v1692, %v1696
        %v1700 = vsel %vm1474, %v1698, -1e+30
        %vm1701 = vcmask 1043456
        %v1702 = vsel %vm1701, %v1700, -inf
        %1703 = vmax.xlane.f32.xlu0 %v1702
        %v1704 = vpop.xlane.xlu0 %1703
        %v1705 = vsub.f32 %v1700, %v1704
        %v1706 = vmul.f32 %v1705, 1.442695
        %v1707 = vpow.pop %v1706
        %v1708 = vsel %vm1701, %v1707, 0.0
        %1709 = vadd.xlane.f32.xlu0 %v1708
        %v1710 = vpop.xlane.xlu0 %1709
        %v1711 = vrcp.pop %v1710
        %v1712 = vmul.f32 %v1707, %v1711
        %v1713 = vld [vmem:[%s517] sm:$0xf]
        %v1714 = vld [vmem:[%s517 + $0x4] sm:$0xf]
        %v1715 = vld [vmem:[%s517 + $0x8] sm:$0xf]
        %v1716 = vld [vmem:[%s517 + $0xc] sm:$0xf]
        %v1717 = vld [vmem:[%s517 + $0x10] sm:$0xf]
        %v1718 = vld [vmem:[%s517 + $0x14] sm:$0xf]
        %v1719 = vld [vmem:[%s517 + $0x18] sm:$0xf]
        %v1720 = vld [vmem:[%s517 + $0x1c] sm:$0xf]
        %v1721 = vld [vmem:[%s517 + $0x20] sm:$0xf]
        %v1722 = vld [vmem:[%s517 + $0x24] sm:$0xf]
        %v1723 = vld [vmem:[%s517 + $0x28] sm:$0xf]
        %v1724 = vld [vmem:[%s517 + $0x2c] sm:$0xf]
        %v1725 = vld [vmem:[%s517 + $0x30] sm:$0xf]
        %v1726 = vld [vmem:[%s517 + $0x34] sm:$0xf]
        %v1727 = vld [vmem:[%s517 + $0x38] sm:$0xf]
        %v1728 = vld [vmem:[%s517 + $0x3c] sm:$0xf]
        %v1729 = vld [vmem:[%s517 + $0x40] sm:$0xf]
        %v1730 = vld [vmem:[%s517 + $0x44] sm:$0xf]
        %v1731 = vld [vmem:[%s517 + $0x48] sm:$0xf]
        %v1732 = vld [vmem:[%s517 + $0x4c] sm:$0xf]
        %v1733 = vld [vmem:[%s517 + $0x50] sm:$0xf]
        %v1734 = vld [vmem:[%s517 + $0x54] sm:$0xf]
        %v1735 = vld [vmem:[%s517 + $0x58] sm:$0xf]
        %v1736 = vld [vmem:[%s517 + $0x5c] sm:$0xf]
        %v1737 = vld [vmem:[%s517 + $0x60] sm:$0xf]
        %v1738 = vld [vmem:[%s517 + $0x64] sm:$0xf]
        %v1739 = vld [vmem:[%s517 + $0x68] sm:$0xf]
        %v1740 = vld [vmem:[%s517 + $0x6c] sm:$0xf]
        %v1741 = vld [vmem:[%s517 + $0x70] sm:$0xf]
        %v1742 = vld [vmem:[%s517 + $0x74] sm:$0xf]
        %v1743 = vld [vmem:[%s517 + $0x78] sm:$0xf]
        %v1744 = vld [vmem:[%s517 + $0x7c] sm:$0xf]
        %v1745 = vld [vmem:[%s517 + $0x80] sm:$0xf]
        %v1746 = vld [vmem:[%s517 + $0x84] sm:$0xf]
        %v1747 = vld [vmem:[%s517 + $0x88] sm:$0xf]
        %v1748 = vld [vmem:[%s517 + $0x8c] sm:$0xf]
        %v1749 = vld [vmem:[%s517 + $0x90] sm:$0xf]
        %v1750 = vld [vmem:[%s517 + $0x94] sm:$0xf]
        %v1751 = vld [vmem:[%s517 + $0x98] sm:$0xf]
        %v1752 = vld [vmem:[%s517 + $0x9c] sm:$0xf]
        %v1753 = vld [vmem:[%s517 + $0xa0] sm:$0xf]
        %v1754 = vld [vmem:[%s517 + $0xa4] sm:$0xf]
        %v1755 = vld [vmem:[%s517 + $0xa8] sm:$0xf]
        %v1756 = vld [vmem:[%s517 + $0xac] sm:$0xf]
        %v1757 = vld [vmem:[%s517 + $0xb0] sm:$0xf]
        %v1758 = vld [vmem:[%s517 + $0xb4] sm:$0xf]
        %v1759 = vld [vmem:[%s517 + $0xb8] sm:$0xf]
        %v1760 = vld [vmem:[%s517 + $0xbc] sm:$0xf]
        %v1761 = vld [vmem:[%s517 + $0xc0] sm:$0xf]
        %v1762 = vld [vmem:[%s517 + $0xc4] sm:$0xf]
        %v1763 = vld [vmem:[%s517 + $0xc8] sm:$0xf]
        %v1764 = vld [vmem:[%s517 + $0xcc] sm:$0xf]
        %v1765 = vld [vmem:[%s517 + $0xd0] sm:$0xf]
        %v1766 = vld [vmem:[%s517 + $0xd4] sm:$0xf]
        %v1767 = vld [vmem:[%s517 + $0xd8] sm:$0xf]
        %v1768 = vld [vmem:[%s517 + $0xdc] sm:$0xf]
        %v1769 = vld [vmem:[%s517 + $0xe0] sm:$0xf]
        %v1770 = vld [vmem:[%s517 + $0xe4] sm:$0xf]
        %v1771 = vld [vmem:[%s517 + $0xe8] sm:$0xf]
        %v1772 = vld [vmem:[%s517 + $0xec] sm:$0xf]
        %v1773 = vld [vmem:[%s517 + $0xf0] sm:$0xf]
        %v1774 = vld [vmem:[%s517 + $0xf4] sm:$0xf]
        %v1775 = vld [vmem:[%s517 + $0xf8] sm:$0xf]
        %v1776 = vld [vmem:[%s517 + $0xfc] sm:$0xf]
        %v1777 = vperm.slane %v1712, 0
        %v1778 = vlaneseq
        %v1779 = vshrl.u32 %v1778, 7
        %1781 = vset.pattern.permute.xlu0 %v1779
        %1782 = vperm.xlu0 %1781, %v1777
        %v1783 = vpop.permute.xlu0 %1782
        %v1784 = vlaneseq
        %v1785 = vshrl.u32 %v1784, 7
        %v1786 = vadd.s32 %v1785, 8
        %1787 = vset.pattern.permute.xlu0 %v1786
        %1788 = vperm.xlu0 %1787, %v1777
        %v1789 = vpop.permute.xlu0 %1788
        %v1790 = vlaneseq
        %v1791 = vshrl.u32 %v1790, 7
        %v1792 = vadd.s32 %v1791, 16
        %1793 = vset.pattern.permute.xlu0 %v1792
        %1794 = vperm.xlu0 %1793, %v1777
        %v1795 = vpop.permute.xlu0 %1794
        %v1796 = vlaneseq
        %v1797 = vshrl.u32 %v1796, 7
        %v1798 = vadd.s32 %v1797, 24
        %1799 = vset.pattern.permute.xlu0 %v1798
        %1800 = vperm.xlu0 %1799, %v1777
        %v1801 = vpop.permute.xlu0 %1800
        %v1802 = vlaneseq
        %v1803 = vshrl.u32 %v1802, 7
        %v1804 = vadd.s32 %v1803, 32
        %1805 = vset.pattern.permute.xlu0 %v1804
        %1806 = vperm.xlu0 %1805, %v1777
        %v1807 = vpop.permute.xlu0 %1806
        %v1808 = vlaneseq
        %v1809 = vshrl.u32 %v1808, 7
        %v1810 = vadd.s32 %v1809, 40
        %1811 = vset.pattern.permute.xlu0 %v1810
        %1812 = vperm.xlu0 %1811, %v1777
        %v1813 = vpop.permute.xlu0 %1812
        %v1814 = vlaneseq
        %v1815 = vshrl.u32 %v1814, 7
        %v1816 = vadd.s32 %v1815, 48
        %1817 = vset.pattern.permute.xlu0 %v1816
        %1818 = vperm.xlu0 %1817, %v1777
        %v1819 = vpop.permute.xlu0 %1818
        %v1820 = vlaneseq
        %v1821 = vshrl.u32 %v1820, 7
        %v1822 = vadd.s32 %v1821, 56
        %1823 = vset.pattern.permute.xlu0 %v1822
        %1824 = vperm.xlu0 %1823, %v1777
        %v1825 = vpop.permute.xlu0 %1824
        %v1826 = vlaneseq
        %v1827 = vshrl.u32 %v1826, 7
        %v1828 = vadd.s32 %v1827, 64
        %1829 = vset.pattern.permute.xlu0 %v1828
        %1830 = vperm.xlu0 %1829, %v1777
        %v1831 = vpop.permute.xlu0 %1830
        %v1832 = vlaneseq
        %v1833 = vshrl.u32 %v1832, 7
        %v1834 = vadd.s32 %v1833, 72
        %1835 = vset.pattern.permute.xlu0 %v1834
        %1836 = vperm.xlu0 %1835, %v1777
        %v1837 = vpop.permute.xlu0 %1836
        %v1838 = vlaneseq
        %v1839 = vshrl.u32 %v1838, 7
        %v1840 = vadd.s32 %v1839, 80
        %1841 = vset.pattern.permute.xlu0 %v1840
        %1842 = vperm.xlu0 %1841, %v1777
        %v1843 = vpop.permute.xlu0 %1842
        %v1844 = vlaneseq
        %v1845 = vshrl.u32 %v1844, 7
        %v1846 = vadd.s32 %v1845, 88
        %1847 = vset.pattern.permute.xlu0 %v1846
        %1848 = vperm.xlu0 %1847, %v1777
        %v1849 = vpop.permute.xlu0 %1848
        %v1850 = vlaneseq
        %v1851 = vshrl.u32 %v1850, 7
        %v1852 = vadd.s32 %v1851, 96
        %1853 = vset.pattern.permute.xlu0 %v1852
        %1854 = vperm.xlu0 %1853, %v1777
        %v1855 = vpop.permute.xlu0 %1854
        %v1856 = vlaneseq
        %v1857 = vshrl.u32 %v1856, 7
        %v1858 = vadd.s32 %v1857, 104
        %1859 = vset.pattern.permute.xlu0 %v1858
        %1860 = vperm.xlu0 %1859, %v1777
        %v1861 = vpop.permute.xlu0 %1860
        %v1862 = vlaneseq
        %v1863 = vshrl.u32 %v1862, 7
        %v1864 = vadd.s32 %v1863, 112
        %1865 = vset.pattern.permute.xlu0 %v1864
        %1866 = vperm.xlu0 %1865, %v1777
        %v1867 = vpop.permute.xlu0 %1866
        %v1868 = vlaneseq
        %v1869 = vshrl.u32 %v1868, 7
        %v1870 = vadd.s32 %v1869, 120
        %1871 = vset.pattern.permute.xlu0 %v1870
        %1872 = vperm.xlu0 %1871, %v1777
        %v1873 = vpop.permute.xlu0 %1872
        %v1874 = vperm.slane %v1712, 1
        %v1875 = vlaneseq
        %v1876 = vshrl.u32 %v1875, 7
        %1878 = vset.pattern.permute.xlu0 %v1876
        %1879 = vperm.xlu0 %1878, %v1874
        %v1880 = vpop.permute.xlu0 %1879
        %v1881 = vlaneseq
        %v1882 = vshrl.u32 %v1881, 7
        %v1883 = vadd.s32 %v1882, 8
        %1884 = vset.pattern.permute.xlu0 %v1883
        %1885 = vperm.xlu0 %1884, %v1874
        %v1886 = vpop.permute.xlu0 %1885
        %v1887 = vlaneseq
        %v1888 = vshrl.u32 %v1887, 7
        %v1889 = vadd.s32 %v1888, 16
        %1890 = vset.pattern.permute.xlu0 %v1889
        %1891 = vperm.xlu0 %1890, %v1874
        %v1892 = vpop.permute.xlu0 %1891
        %v1893 = vlaneseq
        %v1894 = vshrl.u32 %v1893, 7
        %v1895 = vadd.s32 %v1894, 24
        %1896 = vset.pattern.permute.xlu0 %v1895
        %1897 = vperm.xlu0 %1896, %v1874
        %v1898 = vpop.permute.xlu0 %1897
        %v1899 = vlaneseq
        %v1900 = vshrl.u32 %v1899, 7
        %v1901 = vadd.s32 %v1900, 32
        %1902 = vset.pattern.permute.xlu0 %v1901
        %1903 = vperm.xlu0 %1902, %v1874
        %v1904 = vpop.permute.xlu0 %1903
        %v1905 = vlaneseq
        %v1906 = vshrl.u32 %v1905, 7
        %v1907 = vadd.s32 %v1906, 40
        %1908 = vset.pattern.permute.xlu0 %v1907
        %1909 = vperm.xlu0 %1908, %v1874
        %v1910 = vpop.permute.xlu0 %1909
        %v1911 = vlaneseq
        %v1912 = vshrl.u32 %v1911, 7
        %v1913 = vadd.s32 %v1912, 48
        %1914 = vset.pattern.permute.xlu0 %v1913
        %1915 = vperm.xlu0 %1914, %v1874
        %v1916 = vpop.permute.xlu0 %1915
        %v1917 = vlaneseq
        %v1918 = vshrl.u32 %v1917, 7
        %v1919 = vadd.s32 %v1918, 56
        %1920 = vset.pattern.permute.xlu0 %v1919
        %1921 = vperm.xlu0 %1920, %v1874
        %v1922 = vpop.permute.xlu0 %1921
        %v1923 = vlaneseq
        %v1924 = vshrl.u32 %v1923, 7
        %v1925 = vadd.s32 %v1924, 64
        %1926 = vset.pattern.permute.xlu0 %v1925
        %1927 = vperm.xlu0 %1926, %v1874
        %v1928 = vpop.permute.xlu0 %1927
        %v1929 = vlaneseq
        %v1930 = vshrl.u32 %v1929, 7
        %v1931 = vadd.s32 %v1930, 72
        %1932 = vset.pattern.permute.xlu0 %v1931
        %1933 = vperm.xlu0 %1932, %v1874
        %v1934 = vpop.permute.xlu0 %1933
        %v1935 = vlaneseq
        %v1936 = vshrl.u32 %v1935, 7
        %v1937 = vadd.s32 %v1936, 80
        %1938 = vset.pattern.permute.xlu0 %v1937
        %1939 = vperm.xlu0 %1938, %v1874
        %v1940 = vpop.permute.xlu0 %1939
        %v1941 = vlaneseq
        %v1942 = vshrl.u32 %v1941, 7
        %v1943 = vadd.s32 %v1942, 88
        %1944 = vset.pattern.permute.xlu0 %v1943
        %1945 = vperm.xlu0 %1944, %v1874
        %v1946 = vpop.permute.xlu0 %1945
        %v1947 = vlaneseq
        %v1948 = vshrl.u32 %v1947, 7
        %v1949 = vadd.s32 %v1948, 96
        %1950 = vset.pattern.permute.xlu0 %v1949
        %1951 = vperm.xlu0 %1950, %v1874
        %v1952 = vpop.permute.xlu0 %1951
        %v1953 = vlaneseq
        %v1954 = vshrl.u32 %v1953, 7
        %v1955 = vadd.s32 %v1954, 104
        %1956 = vset.pattern.permute.xlu0 %v1955
        %1957 = vperm.xlu0 %1956, %v1874
        %v1958 = vpop.permute.xlu0 %1957
        %v1959 = vlaneseq
        %v1960 = vshrl.u32 %v1959, 7
        %v1961 = vadd.s32 %v1960, 112
        %1962 = vset.pattern.permute.xlu0 %v1961
        %1963 = vperm.xlu0 %1962, %v1874
        %v1964 = vpop.permute.xlu0 %1963
        %v1965 = vlaneseq
        %v1966 = vshrl.u32 %v1965, 7
        %v1967 = vadd.s32 %v1966, 120
        %1968 = vset.pattern.permute.xlu0 %v1967
        %1969 = vperm.xlu0 %1968, %v1874
        %v1970 = vpop.permute.xlu0 %1969
        %v1971 = vperm.slane %v1712, 2
        %v1972 = vlaneseq
        %v1973 = vshrl.u32 %v1972, 7
        %1975 = vset.pattern.permute.xlu0 %v1973
        %1976 = vperm.xlu0 %1975, %v1971
        %v1977 = vpop.permute.xlu0 %1976
        %v1978 = vlaneseq
        %v1979 = vshrl.u32 %v1978, 7
        %v1980 = vadd.s32 %v1979, 8
        %1981 = vset.pattern.permute.xlu0 %v1980
        %1982 = vperm.xlu0 %1981, %v1971
        %v1983 = vpop.permute.xlu0 %1982
        %v1984 = vlaneseq
        %v1985 = vshrl.u32 %v1984, 7
        %v1986 = vadd.s32 %v1985, 16
        %1987 = vset.pattern.permute.xlu0 %v1986
        %1988 = vperm.xlu0 %1987, %v1971
        %v1989 = vpop.permute.xlu0 %1988
        %v1990 = vlaneseq
        %v1991 = vshrl.u32 %v1990, 7
        %v1992 = vadd.s32 %v1991, 24
        %1993 = vset.pattern.permute.xlu0 %v1992
        %1994 = vperm.xlu0 %1993, %v1971
        %v1995 = vpop.permute.xlu0 %1994
        %v1996 = vlaneseq
        %v1997 = vshrl.u32 %v1996, 7
        %v1998 = vadd.s32 %v1997, 32
        %1999 = vset.pattern.permute.xlu0 %v1998
        %2000 = vperm.xlu0 %1999, %v1971
        %v2001 = vpop.permute.xlu0 %2000
        %v2002 = vlaneseq
        %v2003 = vshrl.u32 %v2002, 7
        %v2004 = vadd.s32 %v2003, 40
        %2005 = vset.pattern.permute.xlu0 %v2004
        %2006 = vperm.xlu0 %2005, %v1971
        %v2007 = vpop.permute.xlu0 %2006
        %v2008 = vlaneseq
        %v2009 = vshrl.u32 %v2008, 7
        %v2010 = vadd.s32 %v2009, 48
        %2011 = vset.pattern.permute.xlu0 %v2010
        %2012 = vperm.xlu0 %2011, %v1971
        %v2013 = vpop.permute.xlu0 %2012
        %v2014 = vlaneseq
        %v2015 = vshrl.u32 %v2014, 7
        %v2016 = vadd.s32 %v2015, 56
        %2017 = vset.pattern.permute.xlu0 %v2016
        %2018 = vperm.xlu0 %2017, %v1971
        %v2019 = vpop.permute.xlu0 %2018
        %v2020 = vlaneseq
        %v2021 = vshrl.u32 %v2020, 7
        %v2022 = vadd.s32 %v2021, 64
        %2023 = vset.pattern.permute.xlu0 %v2022
        %2024 = vperm.xlu0 %2023, %v1971
        %v2025 = vpop.permute.xlu0 %2024
        %v2026 = vlaneseq
        %v2027 = vshrl.u32 %v2026, 7
        %v2028 = vadd.s32 %v2027, 72
        %2029 = vset.pattern.permute.xlu0 %v2028
        %2030 = vperm.xlu0 %2029, %v1971
        %v2031 = vpop.permute.xlu0 %2030
        %v2032 = vlaneseq
        %v2033 = vshrl.u32 %v2032, 7
        %v2034 = vadd.s32 %v2033, 80
        %2035 = vset.pattern.permute.xlu0 %v2034
        %2036 = vperm.xlu0 %2035, %v1971
        %v2037 = vpop.permute.xlu0 %2036
        %v2038 = vlaneseq
        %v2039 = vshrl.u32 %v2038, 7
        %v2040 = vadd.s32 %v2039, 88
        %2041 = vset.pattern.permute.xlu0 %v2040
        %2042 = vperm.xlu0 %2041, %v1971
        %v2043 = vpop.permute.xlu0 %2042
        %v2044 = vlaneseq
        %v2045 = vshrl.u32 %v2044, 7
        %v2046 = vadd.s32 %v2045, 96
        %2047 = vset.pattern.permute.xlu0 %v2046
        %2048 = vperm.xlu0 %2047, %v1971
        %v2049 = vpop.permute.xlu0 %2048
        %v2050 = vlaneseq
        %v2051 = vshrl.u32 %v2050, 7
        %v2052 = vadd.s32 %v2051, 104
        %2053 = vset.pattern.permute.xlu0 %v2052
        %2054 = vperm.xlu0 %2053, %v1971
        %v2055 = vpop.permute.xlu0 %2054
        %v2056 = vlaneseq
        %v2057 = vshrl.u32 %v2056, 7
        %v2058 = vadd.s32 %v2057, 112
        %2059 = vset.pattern.permute.xlu0 %v2058
        %2060 = vperm.xlu0 %2059, %v1971
        %v2061 = vpop.permute.xlu0 %2060
        %v2062 = vlaneseq
        %v2063 = vshrl.u32 %v2062, 7
        %v2064 = vadd.s32 %v2063, 120
        %2065 = vset.pattern.permute.xlu0 %v2064
        %2066 = vperm.xlu0 %2065, %v1971
        %v2067 = vpop.permute.xlu0 %2066
        %v2068 = vperm.slane %v1712, 3
        %v2069 = vlaneseq
        %v2070 = vshrl.u32 %v2069, 7
        %2072 = vset.pattern.permute.xlu0 %v2070
        %2073 = vperm.xlu0 %2072, %v2068
        %v2074 = vpop.permute.xlu0 %2073
        %v2075 = vlaneseq
        %v2076 = vshrl.u32 %v2075, 7
        %v2077 = vadd.s32 %v2076, 8
        %2078 = vset.pattern.permute.xlu0 %v2077
        %2079 = vperm.xlu0 %2078, %v2068
        %v2080 = vpop.permute.xlu0 %2079
        %v2081 = vlaneseq
        %v2082 = vshrl.u32 %v2081, 7
        %v2083 = vadd.s32 %v2082, 16
        %2084 = vset.pattern.permute.xlu0 %v2083
        %2085 = vperm.xlu0 %2084, %v2068
        %v2086 = vpop.permute.xlu0 %2085
        %v2087 = vlaneseq
        %v2088 = vshrl.u32 %v2087, 7
        %v2089 = vadd.s32 %v2088, 24
        %2090 = vset.pattern.permute.xlu0 %v2089
        %2091 = vperm.xlu0 %2090, %v2068
        %v2092 = vpop.permute.xlu0 %2091
        %v2093 = vlaneseq
        %v2094 = vshrl.u32 %v2093, 7
        %v2095 = vadd.s32 %v2094, 32
        %2096 = vset.pattern.permute.xlu0 %v2095
        %2097 = vperm.xlu0 %2096, %v2068
        %v2098 = vpop.permute.xlu0 %2097
        %v2099 = vlaneseq
        %v2100 = vshrl.u32 %v2099, 7
        %v2101 = vadd.s32 %v2100, 40
        %2102 = vset.pattern.permute.xlu0 %v2101
        %2103 = vperm.xlu0 %2102, %v2068
        %v2104 = vpop.permute.xlu0 %2103
        %v2105 = vlaneseq
        %v2106 = vshrl.u32 %v2105, 7
        %v2107 = vadd.s32 %v2106, 48
        %2108 = vset.pattern.permute.xlu0 %v2107
        %2109 = vperm.xlu0 %2108, %v2068
        %v2110 = vpop.permute.xlu0 %2109
        %v2111 = vlaneseq
        %v2112 = vshrl.u32 %v2111, 7
        %v2113 = vadd.s32 %v2112, 56
        %2114 = vset.pattern.permute.xlu0 %v2113
        %2115 = vperm.xlu0 %2114, %v2068
        %v2116 = vpop.permute.xlu0 %2115
        %v2117 = vlaneseq
        %v2118 = vshrl.u32 %v2117, 7
        %v2119 = vadd.s32 %v2118, 64
        %2120 = vset.pattern.permute.xlu0 %v2119
        %2121 = vperm.xlu0 %2120, %v2068
        %v2122 = vpop.permute.xlu0 %2121
        %v2123 = vlaneseq
        %v2124 = vshrl.u32 %v2123, 7
        %v2125 = vadd.s32 %v2124, 72
        %2126 = vset.pattern.permute.xlu0 %v2125
        %2127 = vperm.xlu0 %2126, %v2068
        %v2128 = vpop.permute.xlu0 %2127
        %v2129 = vlaneseq
        %v2130 = vshrl.u32 %v2129, 7
        %v2131 = vadd.s32 %v2130, 80
        %2132 = vset.pattern.permute.xlu0 %v2131
        %2133 = vperm.xlu0 %2132, %v2068
        %v2134 = vpop.permute.xlu0 %2133
        %v2135 = vlaneseq
        %v2136 = vshrl.u32 %v2135, 7
        %v2137 = vadd.s32 %v2136, 88
        %2138 = vset.pattern.permute.xlu0 %v2137
        %2139 = vperm.xlu0 %2138, %v2068
        %v2140 = vpop.permute.xlu0 %2139
        %v2141 = vlaneseq
        %v2142 = vshrl.u32 %v2141, 7
        %v2143 = vadd.s32 %v2142, 96
        %2144 = vset.pattern.permute.xlu0 %v2143
        %2145 = vperm.xlu0 %2144, %v2068
        %v2146 = vpop.permute.xlu0 %2145
        %v2147 = vlaneseq
        %v2148 = vshrl.u32 %v2147, 7
        %v2149 = vadd.s32 %v2148, 104
        %2150 = vset.pattern.permute.xlu0 %v2149
        %2151 = vperm.xlu0 %2150, %v2068
        %v2152 = vpop.permute.xlu0 %2151
        %v2153 = vlaneseq
        %v2154 = vshrl.u32 %v2153, 7
        %v2155 = vadd.s32 %v2154, 112
        %2156 = vset.pattern.permute.xlu0 %v2155
        %2157 = vperm.xlu0 %2156, %v2068
        %v2158 = vpop.permute.xlu0 %2157
        %v2159 = vlaneseq
        %v2160 = vshrl.u32 %v2159, 7
        %v2161 = vadd.s32 %v2160, 120
        %2162 = vset.pattern.permute.xlu0 %v2161
        %2163 = vperm.xlu0 %2162, %v2068
        %v2164 = vpop.permute.xlu0 %2163
        %v2165 = vunpack.c.l.bf16 %v1713
        %v2166 = vunpack.c.l.bf16 %v1714
        %v2167 = vunpack.c.l.bf16 %v1715
        %v2168 = vunpack.c.l.bf16 %v1716
        %v2169 = vunpack.c.l.bf16 %v1717
        %v2170 = vunpack.c.l.bf16 %v1718
        %v2171 = vunpack.c.l.bf16 %v1719
        %v2172 = vunpack.c.l.bf16 %v1720
        %v2173 = vunpack.c.l.bf16 %v1721
        %v2174 = vunpack.c.l.bf16 %v1722
        %v2175 = vunpack.c.l.bf16 %v1723
        %v2176 = vunpack.c.l.bf16 %v1724
        %v2177 = vunpack.c.l.bf16 %v1725
        %v2178 = vunpack.c.l.bf16 %v1726
        %v2179 = vunpack.c.l.bf16 %v1727
        %v2180 = vunpack.c.l.bf16 %v1728
        %v2181 = vunpack.c.l.bf16 %v1729
        %v2182 = vunpack.c.l.bf16 %v1730
        %v2183 = vunpack.c.l.bf16 %v1731
        %v2184 = vunpack.c.l.bf16 %v1732
        %v2185 = vunpack.c.l.bf16 %v1733
        %v2186 = vunpack.c.l.bf16 %v1734
        %v2187 = vunpack.c.l.bf16 %v1735
        %v2188 = vunpack.c.l.bf16 %v1736
        %v2189 = vunpack.c.l.bf16 %v1737
        %v2190 = vunpack.c.l.bf16 %v1738
        %v2191 = vunpack.c.l.bf16 %v1739
        %v2192 = vunpack.c.l.bf16 %v1740
        %v2193 = vunpack.c.l.bf16 %v1741
        %v2194 = vunpack.c.l.bf16 %v1742
        %v2195 = vunpack.c.l.bf16 %v1743
        %v2196 = vunpack.c.l.bf16 %v1744
        %v2197 = vunpack.c.l.bf16 %v1745
        %v2198 = vunpack.c.l.bf16 %v1746
        %v2199 = vunpack.c.l.bf16 %v1747
        %v2200 = vunpack.c.l.bf16 %v1748
        %v2201 = vunpack.c.l.bf16 %v1749
        %v2202 = vunpack.c.l.bf16 %v1750
        %v2203 = vunpack.c.l.bf16 %v1751
        %v2204 = vunpack.c.l.bf16 %v1752
        %v2205 = vunpack.c.l.bf16 %v1753
        %v2206 = vunpack.c.l.bf16 %v1754
        %v2207 = vunpack.c.l.bf16 %v1755
        %v2208 = vunpack.c.l.bf16 %v1756
        %v2209 = vunpack.c.l.bf16 %v1757
        %v2210 = vunpack.c.l.bf16 %v1758
        %v2211 = vunpack.c.l.bf16 %v1759
        %v2212 = vunpack.c.l.bf16 %v1760
        %v2213 = vunpack.c.l.bf16 %v1761
        %v2214 = vunpack.c.l.bf16 %v1762
        %v2215 = vunpack.c.l.bf16 %v1763
        %v2216 = vunpack.c.l.bf16 %v1764
        %v2217 = vunpack.c.l.bf16 %v1765
        %v2218 = vunpack.c.l.bf16 %v1766
        %v2219 = vunpack.c.l.bf16 %v1767
        %v2220 = vunpack.c.l.bf16 %v1768
        %v2221 = vunpack.c.l.bf16 %v1769
        %v2222 = vunpack.c.l.bf16 %v1770
        %v2223 = vunpack.c.l.bf16 %v1771
        %v2224 = vunpack.c.l.bf16 %v1772
        %v2225 = vunpack.c.l.bf16 %v1773
        %v2226 = vunpack.c.l.bf16 %v1774
        %v2227 = vunpack.c.l.bf16 %v1775
        %v2228 = vunpack.c.l.bf16 %v1776
        %v2229 = vmul.f32 %v2165, %v1783
        %v2230 = vmul.f32 %v2166, %v1789
        %v2231 = vmul.f32 %v2167, %v1795
        %v2232 = vmul.f32 %v2168, %v1801
        %v2233 = vmul.f32 %v2169, %v1807
        %v2234 = vmul.f32 %v2170, %v1813
        %v2235 = vmul.f32 %v2171, %v1819
        %v2236 = vmul.f32 %v2172, %v1825
        %v2237 = vmul.f32 %v2173, %v1831
        %v2238 = vmul.f32 %v2174, %v1837
        %v2239 = vmul.f32 %v2175, %v1843
        %v2240 = vmul.f32 %v2176, %v1849
        %v2241 = vmul.f32 %v2177, %v1855
        %v2242 = vmul.f32 %v2178, %v1861
        %v2243 = vmul.f32 %v2179, %v1867
        %v2244 = vmul.f32 %v2180, %v1873
        %v2245 = vmul.f32 %v2181, %v1880
        %v2246 = vmul.f32 %v2182, %v1886
        %v2247 = vmul.f32 %v2183, %v1892
        %v2248 = vmul.f32 %v2184, %v1898
        %v2249 = vmul.f32 %v2185, %v1904
        %v2250 = vmul.f32 %v2186, %v1910
        %v2251 = vmul.f32 %v2187, %v1916
        %v2252 = vmul.f32 %v2188, %v1922
        %v2253 = vmul.f32 %v2189, %v1928
        %v2254 = vmul.f32 %v2190, %v1934
        %v2255 = vmul.f32 %v2191, %v1940
        %v2256 = vmul.f32 %v2192, %v1946
        %v2257 = vmul.f32 %v2193, %v1952
        %v2258 = vmul.f32 %v2194, %v1958
        %v2259 = vmul.f32 %v2195, %v1964
        %v2260 = vmul.f32 %v2196, %v1970
        %v2261 = vmul.f32 %v2197, %v1977
        %v2262 = vmul.f32 %v2198, %v1983
        %v2263 = vmul.f32 %v2199, %v1989
        %v2264 = vmul.f32 %v2200, %v1995
        %v2265 = vmul.f32 %v2201, %v2001
        %v2266 = vmul.f32 %v2202, %v2007
        %v2267 = vmul.f32 %v2203, %v2013
        %v2268 = vmul.f32 %v2204, %v2019
        %v2269 = vmul.f32 %v2205, %v2025
        %v2270 = vmul.f32 %v2206, %v2031
        %v2271 = vmul.f32 %v2207, %v2037
        %v2272 = vmul.f32 %v2208, %v2043
        %v2273 = vmul.f32 %v2209, %v2049
        %v2274 = vmul.f32 %v2210, %v2055
        %v2275 = vmul.f32 %v2211, %v2061
        %v2276 = vmul.f32 %v2212, %v2067
        %v2277 = vmul.f32 %v2213, %v2074
        %v2278 = vmul.f32 %v2214, %v2080
        %v2279 = vmul.f32 %v2215, %v2086
        %v2280 = vmul.f32 %v2216, %v2092
        %v2281 = vmul.f32 %v2217, %v2098
        %v2282 = vmul.f32 %v2218, %v2104
        %v2283 = vmul.f32 %v2219, %v2110
        %v2284 = vmul.f32 %v2220, %v2116
        %v2285 = vmul.f32 %v2221, %v2122
        %v2286 = vmul.f32 %v2222, %v2128
        %v2287 = vmul.f32 %v2223, %v2134
        %v2288 = vmul.f32 %v2224, %v2140
        %v2289 = vmul.f32 %v2225, %v2146
        %v2290 = vmul.f32 %v2226, %v2152
        %v2291 = vmul.f32 %v2227, %v2158
        %v2292 = vmul.f32 %v2228, %v2164
        %v2293 = vsel %vm914, %v2229, 0.0
        %v2294 = vsel %vm914, %v2230, 0.0
        %v2295 = vadd.f32 %v2293, %v2294
        %v2296 = vsel %vm914, %v2231, 0.0
        %v2297 = vadd.f32 %v2295, %v2296
        %v2298 = vsel %vm914, %v2232, 0.0
        %v2299 = vadd.f32 %v2297, %v2298
        %v2300 = vsel %vm914, %v2233, 0.0
        %v2301 = vadd.f32 %v2299, %v2300
        %v2302 = vsel %vm914, %v2234, 0.0
        %v2303 = vadd.f32 %v2301, %v2302
        %v2304 = vsel %vm914, %v2235, 0.0
        %v2305 = vadd.f32 %v2303, %v2304
        %v2306 = vsel %vm914, %v2236, 0.0
        %v2307 = vadd.f32 %v2305, %v2306
        %v2308 = vsel %vm914, %v2237, 0.0
        %v2309 = vadd.f32 %v2307, %v2308
        %v2310 = vsel %vm914, %v2238, 0.0
        %v2311 = vadd.f32 %v2309, %v2310
        %v2312 = vsel %vm914, %v2239, 0.0
        %v2313 = vadd.f32 %v2311, %v2312
        %v2314 = vsel %vm914, %v2240, 0.0
        %v2315 = vadd.f32 %v2313, %v2314
        %v2316 = vsel %vm914, %v2241, 0.0
        %v2317 = vadd.f32 %v2315, %v2316
        %v2318 = vsel %vm914, %v2242, 0.0
        %v2319 = vadd.f32 %v2317, %v2318
        %v2320 = vsel %vm914, %v2243, 0.0
        %v2321 = vadd.f32 %v2319, %v2320
        %v2322 = vsel %vm914, %v2244, 0.0
        %v2323 = vadd.f32 %v2321, %v2322
        %v2324 = vrot.slane %v2323, 4
        %v2325 = vadd.f32 %v2323, %v2324
        %v2326 = vrot.slane %v2325, 2
        %v2327 = vadd.f32 %v2325, %v2326
        %v2328 = vrot.slane %v2327, 1
        %v2329 = vadd.f32 %v2327, %v2328
        %v2330 = vsel %vm914, %v2245, 0.0
        %v2331 = vsel %vm914, %v2246, 0.0
        %v2332 = vadd.f32 %v2330, %v2331
        %v2333 = vsel %vm914, %v2247, 0.0
        %v2334 = vadd.f32 %v2332, %v2333
        %v2335 = vsel %vm914, %v2248, 0.0
        %v2336 = vadd.f32 %v2334, %v2335
        %v2337 = vsel %vm914, %v2249, 0.0
        %v2338 = vadd.f32 %v2336, %v2337
        %v2339 = vsel %vm914, %v2250, 0.0
        %v2340 = vadd.f32 %v2338, %v2339
        %v2341 = vsel %vm914, %v2251, 0.0
        %v2342 = vadd.f32 %v2340, %v2341
        %v2343 = vsel %vm914, %v2252, 0.0
        %v2344 = vadd.f32 %v2342, %v2343
        %v2345 = vsel %vm914, %v2253, 0.0
        %v2346 = vadd.f32 %v2344, %v2345
        %v2347 = vsel %vm914, %v2254, 0.0
        %v2348 = vadd.f32 %v2346, %v2347
        %v2349 = vsel %vm914, %v2255, 0.0
        %v2350 = vadd.f32 %v2348, %v2349
        %v2351 = vsel %vm914, %v2256, 0.0
        %v2352 = vadd.f32 %v2350, %v2351
        %v2353 = vsel %vm914, %v2257, 0.0
        %v2354 = vadd.f32 %v2352, %v2353
        %v2355 = vsel %vm914, %v2258, 0.0
        %v2356 = vadd.f32 %v2354, %v2355
        %v2357 = vsel %vm914, %v2259, 0.0
        %v2358 = vadd.f32 %v2356, %v2357
        %v2359 = vsel %vm914, %v2260, 0.0
        %v2360 = vadd.f32 %v2358, %v2359
        %v2361 = vrot.slane %v2360, 4
        %v2362 = vadd.f32 %v2360, %v2361
        %v2363 = vrot.slane %v2362, 2
        %v2364 = vadd.f32 %v2362, %v2363
        %v2365 = vrot.slane %v2364, 1
        %v2366 = vadd.f32 %v2364, %v2365
        %v2367 = vsel %vm914, %v2261, 0.0
        %v2368 = vsel %vm914, %v2262, 0.0
        %v2369 = vadd.f32 %v2367, %v2368
        %v2370 = vsel %vm914, %v2263, 0.0
        %v2371 = vadd.f32 %v2369, %v2370
        %v2372 = vsel %vm914, %v2264, 0.0
        %v2373 = vadd.f32 %v2371, %v2372
        %v2374 = vsel %vm914, %v2265, 0.0
        %v2375 = vadd.f32 %v2373, %v2374
        %v2376 = vsel %vm914, %v2266, 0.0
        %v2377 = vadd.f32 %v2375, %v2376
        %v2378 = vsel %vm914, %v2267, 0.0
        %v2379 = vadd.f32 %v2377, %v2378
        %v2380 = vsel %vm914, %v2268, 0.0
        %v2381 = vadd.f32 %v2379, %v2380
        %v2382 = vsel %vm914, %v2269, 0.0
        %v2383 = vadd.f32 %v2381, %v2382
        %v2384 = vsel %vm914, %v2270, 0.0
        %v2385 = vadd.f32 %v2383, %v2384
        %v2386 = vsel %vm914, %v2271, 0.0
        %v2387 = vadd.f32 %v2385, %v2386
        %v2388 = vsel %vm914, %v2272, 0.0
        %v2389 = vadd.f32 %v2387, %v2388
        %v2390 = vsel %vm914, %v2273, 0.0
        %v2391 = vadd.f32 %v2389, %v2390
        %v2392 = vsel %vm914, %v2274, 0.0
        %v2393 = vadd.f32 %v2391, %v2392
        %v2394 = vsel %vm914, %v2275, 0.0
        %v2395 = vadd.f32 %v2393, %v2394
        %v2396 = vsel %vm914, %v2276, 0.0
        %v2397 = vadd.f32 %v2395, %v2396
        %v2398 = vrot.slane %v2397, 4
        %v2399 = vadd.f32 %v2397, %v2398
        %v2400 = vrot.slane %v2399, 2
        %v2401 = vadd.f32 %v2399, %v2400
        %v2402 = vrot.slane %v2401, 1
        %v2403 = vadd.f32 %v2401, %v2402
        %v2404 = vsel %vm914, %v2277, 0.0
        %v2405 = vsel %vm914, %v2278, 0.0
        %v2406 = vadd.f32 %v2404, %v2405
        %v2407 = vsel %vm914, %v2279, 0.0
        %v2408 = vadd.f32 %v2406, %v2407
        %v2409 = vsel %vm914, %v2280, 0.0
        %v2410 = vadd.f32 %v2408, %v2409
        %v2411 = vsel %vm914, %v2281, 0.0
        %v2412 = vadd.f32 %v2410, %v2411
        %v2413 = vsel %vm914, %v2282, 0.0
        %v2414 = vadd.f32 %v2412, %v2413
        %v2415 = vsel %vm914, %v2283, 0.0
        %v2416 = vadd.f32 %v2414, %v2415
        %v2417 = vsel %vm914, %v2284, 0.0
        %v2418 = vadd.f32 %v2416, %v2417
        %v2419 = vsel %vm914, %v2285, 0.0
        %v2420 = vadd.f32 %v2418, %v2419
        %v2421 = vsel %vm914, %v2286, 0.0
        %v2422 = vadd.f32 %v2420, %v2421
        %v2423 = vsel %vm914, %v2287, 0.0
        %v2424 = vadd.f32 %v2422, %v2423
        %v2425 = vsel %vm914, %v2288, 0.0
        %v2426 = vadd.f32 %v2424, %v2425
        %v2427 = vsel %vm914, %v2289, 0.0
        %v2428 = vadd.f32 %v2426, %v2427
        %v2429 = vsel %vm914, %v2290, 0.0
        %v2430 = vadd.f32 %v2428, %v2429
        %v2431 = vsel %vm914, %v2291, 0.0
        %v2432 = vadd.f32 %v2430, %v2431
        %v2433 = vsel %vm914, %v2292, 0.0
        %v2434 = vadd.f32 %v2432, %v2433
        %v2435 = vrot.slane %v2434, 4
        %v2436 = vadd.f32 %v2434, %v2435
        %v2437 = vrot.slane %v2436, 2
        %v2438 = vadd.f32 %v2436, %v2437
        %v2439 = vrot.slane %v2438, 1
        %v2440 = vadd.f32 %v2438, %v2439
        %v2441 = vmul.f32 %v928, 0.5
        %v2442 = vtanh.pop %v2441
        %v2443 = vadd.f32 %v2442, 1.0
        %v2444 = vmul.f32 %v2443, 0.5
        %v2449 = vsel %vm1693, %v2366, %v2329
        %v2450 = vsel %vm1695, %v2403, %v2449
        %v2451 = vsel %vm1697, %v2440, %v2450
        %2452 = vrot.lane.b32.xlu0 %v2451, 32
        %v2453 = vpop.permute.xlu0 %2452
        %v2455 = vmul.f32 %v2444, %v2453
        %v2456 = vld [vmem:[%s532] sm:$0x3]
        %v2457 = vld [vmem:[%s7] sm:$0xf]
        %v2458 = vld [vmem:[%s7 + $0x4] sm:$0xf]
        %v2461 = vunpack.c.l.b16 %v2457
        %v2462 = vunpack.c.l.b16 %v2458
        %v2463 = vpack.c.b16 %v2462, %v2461
        %vm2465 = vcmask 130048
        %v2467 = vsel %vm2465, %v2456, 0
        %2469 = vmatpush.bf16.msra.mxu0 0
        %2470 = vmatpush.bf16.msra.mxu0 0
        %2471 = vmatpush.bf16.msra.mxu0 0
        %2472 = vmatpush.bf16.msra.mxu0 0
        %2473 = vmatpush.bf16.msra.mxu0 0
        %2474 = vmatpush.bf16.msra.mxu0 0
        %2475 = vmatpush.bf16.msra.mxu0 0
        %2476 = vmatpush.bf16.msra.mxu0 %v2463
        %2477 = vmatmul.bf16.gmra.mxu0 %v2467
        %v2478 = vpop.f32.mrf.mxu0
        %v2479 = vadd.f32 0.0, %v2478
        %v2480 = vpop.f32.mrf.mxu0
        %2481 = vdwg.mxu0
        %2483 = vrot.lane.b32.xlu0 %v2479, 64
        %v2484 = vpop.permute.xlu0 %2483
        %v2486 = vadd.f32 %v928, %v2484
        %v2487 = vadd.f32 %v941, %v2484
        %v2488 = vpack.c.bf16 %v2455, %v2455
        %v2489 = vld [vmem:[%s8] sm:$0xf]
        %v2490 = vld [vmem:[%s8 + $0x4] sm:$0xf]
        %v2491 = vld [vmem:[%s8 + $0x8] sm:$0xf]
        %v2492 = vld [vmem:[%s8 + $0xc] sm:$0xf]
        %2494 = vrot.lane.b32.xlu0 %v2488, 96
        %v2495 = vpop.permute.xlu0 %2494
        %v2500 = vunpack.c.l.b16 %v2489
        %v2501 = vunpack.c.l.b16 %v2490
        %v2502 = vunpack.c.l.b16 %v2491
        %v2503 = vunpack.c.l.b16 %v2492
        %v2504 = vpack.c.b16 %v2501, %v2500
        %v2505 = vpack.c.b16 %v2503, %v2502
        %v2509 = vsel %vm914, %v2495, 0
        %2511 = vmatpush.bf16.msra.mxu0 0
        %2512 = vmatpush.bf16.msra.mxu0 0
        %2513 = vmatpush.bf16.msra.mxu0 0
        %2514 = vmatpush.bf16.msra.mxu0 0
        %2515 = vmatpush.bf16.msra.mxu0 0
        %2516 = vmatpush.bf16.msra.mxu0 0
        %2517 = vmatpush.bf16.msra.mxu0 %v2505
        %2518 = vmatpush.bf16.msra.mxu0 %v2504
        %2519 = vmatmul.bf16.gmra.mxu0 %v2509
        %v2520 = vpop.f32.mrf.mxu0
        %v2521 = vadd.f32 0.0, %v2520
        %v2522 = vpop.f32.mrf.mxu0
        %2523 = vdwg.mxu0
        %2525 = vrot.lane.b32.xlu0 %v2521, 64
        %v2526 = vpop.permute.xlu0 %2525
        %v2528 = vadd.f32 %v2486, %v2526
        %v2529 = vadd.f32 %v2487, %v2526
        %v2530 = vmul.f32 %v2528, 0.5
        %v2531 = vtanh.pop %v2530
        %v2532 = vadd.f32 %v2531, 1.0
        %v2533 = vmul.f32 %v2532, 0.5
        %v2534 = vtanh.pop %v2529
        %v2535 = vmul.f32 %v2529, 0.5
        %v2536 = vtanh.pop %v2535
        %v2537 = vadd.f32 %v2536, 1.0
        %v2538 = vmul.f32 %v2537, 0.5
        %2540 = vrot.lane.b32.xlu0 %v882, 96
        %v2541 = vpop.permute.xlu0 %2540
        %v2543 = vmul.f32 %v2533, %v2541
        %2545 = vrot.lane.b32.xlu0 %v2534, 64
        %v2546 = vpop.permute.xlu0 %2545
        %v2548 = vmul.f32 %v2533, %v2546
        %2550 = vrot.lane.b32.xlu0 %v2548, 32
        %v2551 = vpop.permute.xlu0 %2550
        %v2553 = vadd.f32 %v2543, %v2551
        %v2554 = vtanh.pop %v2553
        %2556 = vrot.lane.b32.xlu0 %v2554, 64
        %v2557 = vpop.permute.xlu0 %2556
        %v2559 = vmul.f32 %v2538, %v2557
        %v2560 = vpack.c.bf16 %v2559, %v2559
        %v2561 = vld [vmem:[%s9] sm:$0xf]
        %v2562 = vld [vmem:[%s9 + $0x4] sm:$0xf]
        %v2563 = vld [vmem:[%s9 + $0x8] sm:$0xf]
        %v2564 = vld [vmem:[%s9 + $0xc] sm:$0xf]
        %v2565 = vld [vmem:[%s10] sm:$0x1]
        %v2567 = vperm.slane %v2565, 0
        %2570 = vrot.lane.b32.xlu0 %v2560, 96
        %v2571 = vpop.permute.xlu0 %2570
        %v2576 = vunpack.c.l.b16 %v2561
        %v2577 = vunpack.c.l.b16 %v2562
        %v2578 = vunpack.c.l.b16 %v2563
        %v2579 = vunpack.c.l.b16 %v2564
        %v2580 = vpack.c.b16 %v2577, %v2576
        %v2581 = vpack.c.b16 %v2579, %v2578
        %v2585 = vsel %vm914, %v2571, 0
        %2587 = vmatpush.bf16.msra.mxu0 0
        %2588 = vmatpush.bf16.msra.mxu0 0
        %2589 = vmatpush.bf16.msra.mxu0 0
        %2590 = vmatpush.bf16.msra.mxu0 0
        %2591 = vmatpush.bf16.msra.mxu0 0
        %2592 = vmatpush.bf16.msra.mxu0 0
        %2593 = vmatpush.bf16.msra.mxu0 %v2581
        %2594 = vmatpush.bf16.msra.mxu0 %v2580
        %2595 = vmatmul.bf16.gmra.mxu0 %v2585
        %v2596 = vpop.f32.mrf.mxu0
        %v2597 = vadd.f32 %v2567, %v2596
        %v2598 = vpop.f32.mrf.mxu0
        %2599 = vdwg.mxu0
        %s2600 = sld [smem:[#allocation5 + %s45]]
        %v2601 = vlaneseq
        %v2602 = vshrl.u32 %v2601, 7
        %s2603 = smul.u32 %s44, 4
        %v2604 = vstv %s2603
        %v2605 = vadd.s32 %v2602, %v2604
        %v2606 = vstv %s2600
        %vm2607 = vcmp.lt.s32.totalorder %v2605, %v2606
        %v2608 = vsel %vm2607, 1, 0
        %vm2609 = vcmp.eq.s32.totalorder %v2608, 1
        %2611 = vrot.lane.b32.xlu0 %v881, 32
        %v2612 = vpop.permute.xlu0 %2611
        %v2614 = vsel %vm2609, %v2559, %v2612
        %2616 = vrot.lane.b32.xlu0 %v2614, 96
        %v2617 = vpop.permute.xlu0 %2616
        %vm2619 = vcmask 257024
        %2620 = vst.msk [vmem:[#allocation2] sm:$0xf] %vm2619, %v2617
        %v2621 = vsel %vm2609, %v2553, %v2541
        %2623 = vrot.lane.b32.xlu0 %v2621, 32
        %v2624 = vpop.permute.xlu0 %2623
        %2626 = vst.msk [vmem:[#allocation3] sm:$0xf] %vm2619, %v2624
        %v2627 = vsel %vm2609, %v2597, 0.0
        %2628 = vst.msk [vmem:[%s504] sm:$0xf] %vm2619, %v2627
        %v2629 = vsel %vm2609, %v1712, 0.0
        %2630 = vst [vmem:[%s511] sm:$0xf] %v2629
        %s2631 = sand.u32 %s331, 1
        %s2632 = scalar_lea.sflag [#allocation7], %s2631
        %s2633 = sand.u32 %s331, 1
        %s2634 = smul.addr %s2633, 4
        %s2635 = scalar_lea.vmem [#allocation6], %s2634
        %s2636 = sand.u32 %s359, 1
        %s2637 = scalar_lea.sflag [#allocation9], %s2636
        %s2638 = sand.u32 %s359, 1
        %s2639 = smul.addr %s2638, 4
        %s2640 = scalar_lea.vmem [#allocation8], %s2639
        // Predicated region
        $region73: #{tpu_custom_call.1} parent=67 // pred_check
          %p2641 = pneg %p341
        $region74: #{tpu_custom_call.1} parent=67 // pred_check_branch
          %2643 = sbr.rel (%p2641) target = $region76
        $region75: #{tpu_custom_call.1} parent=67 // pred_region
          %2645 = vsyncadd %s2632, 0
          %s2646 = sadd.s32 %s44, %s45
          %s2647 = smul.addr %s2646, 4
          %s2648 = scalar_lea.hbm %s13, %s2647
          %s2650 = sshll.u32 %s2635, 4
          %s2651 = int_to_ptr.vmem [resolvable:$true] %s2650
          %s2652 = sshll.u32 %s2648, 4
          %s2653 = int_to_ptr.hbm [resolvable:$true] %s2652
          %2655 = dma.vmem_to_hbm [thread:$0]  %s2651, 64, %s2653, %s2632
        $region76: #{tpu_custom_call.1} parent=67 // pred_fallthru
          _
        // Predicated region
        $region77: #{tpu_custom_call.1} parent=67 // pred_check
          %p2656 = pneg %p369
        $region78: #{tpu_custom_call.1} parent=67 // pred_check_branch
          %2658 = sbr.rel (%p2656) target = $region80
        $region79: #{tpu_custom_call.1} parent=67 // pred_region
          %2660 = vsyncadd %s2637, 0
          %s2661 = sadd.s32 %s44, %s45
          %s2662 = smul.addr %s2661, 4
          %s2663 = scalar_lea.hbm %s14, %s2662
          %s2665 = sshll.u32 %s2640, 4
          %s2666 = int_to_ptr.vmem [resolvable:$true] %s2665
          %s2667 = sshll.u32 %s2663, 4
          %s2668 = int_to_ptr.hbm [resolvable:$true] %s2667
          %2670 = dma.vmem_to_hbm [thread:$0]  %s2666, 64, %s2668, %s2637
        $region80: #{tpu_custom_call.1} parent=67 // pred_fallthru
          _
      $region68: #{tpu_custom_call.1} parent=5 // pred_fallthru
        _
      %p2671 = scmp.le.s32.totalorder 2, %s35
      // Predicated region
      $region81: #{tpu_custom_call.1} parent=5 // pred_check
        %p2672 = pneg %p2671
      $region82: #{tpu_custom_call.1} parent=5 // pred_check_branch
        %2674 = sbr.rel (%p2672) target = $region84
      $region83: #{tpu_custom_call.1} parent=5 // pred_region
        %s2675 = ssub.s32 %s35, 2
        // Predicated region
        $region85: #{tpu_custom_call.1} parent=83 // pred_check
          %p2676 = pneg %p347
        $region86: #{tpu_custom_call.1} parent=83 // pred_check_branch
          %2678 = sbr.rel (%p2676) target = $region88
        $region87: #{tpu_custom_call.1} parent=83 // pred_region
          %s2679 = sand.u32 %s332, 1
          %s2680 = scalar_lea.sflag [#allocation7], %s2679
          %s2681 = sand.u32 %s332, 1
          %s2682 = smul.addr %s2681, 4
          %s2683 = scalar_lea.vmem [#allocation6], %s2682
          %2685 = dma.done %s2680, 64
        $region88: #{tpu_custom_call.1} parent=83 // pred_fallthru
          _
        // Predicated region
        $region89: #{tpu_custom_call.1} parent=83 // pred_check
          %p2686 = pneg %p375
        $region90: #{tpu_custom_call.1} parent=83 // pred_check_branch
          %2688 = sbr.rel (%p2686) target = $region92
        $region91: #{tpu_custom_call.1} parent=83 // pred_region
          %s2689 = sand.u32 %s360, 1
          %s2690 = scalar_lea.sflag [#allocation9], %s2689
          %s2691 = sand.u32 %s360, 1
          %s2692 = smul.addr %s2691, 4
          %s2693 = scalar_lea.vmem [#allocation8], %s2692
          %2695 = dma.done %s2690, 64
        $region92: #{tpu_custom_call.1} parent=83 // pred_fallthru
          _
      $region84: #{tpu_custom_call.1} parent=5 // pred_fallthru
        _
    $region6: #{tpu_custom_call.1} parent=1 // loop_footer
      %s39 = sadd.s32 1, %s35
    $region7: #{tpu_custom_call.1} parent=1 // loop_footer_branch
      %34 = sbr.rel target = $region3
    $region8: #{tpu_custom_call.1} parent=1 // loop_exit
      _
    %2696 = vsyncpa [#allocation7], 1
    %s2697 = scalar_lea.sflag [#allocation7], 1
    %2698 = vsyncpa %s2697, 1
    %2699 = vsyncpa [#allocation9], 1
    %s2700 = scalar_lea.sflag [#allocation9], 1
    %2701 = vsyncpa %s2700, 1

</llo_original>
